<compile_context>
chip_gen: v7x
topology: tpu7x:2x2x1
jax: 0.10.0
libtpu: 0.0.40
codegen_flags: <defaults>
</compile_context>

<pallas_src>
import jax
import jax.numpy as jnp
from jax.experimental import pallas as pl
from jax.experimental.pallas import tpu as pltpu

BN_EPS = 1e-5
NEG_SLOPE = 0.2       # PyG GATConv LeakyReLU negative_slope
NEG_INF = -1e30       # additive mask for non-edges


# ---------------------------------------------------------------------------
# Shared math helpers (used both inside the Pallas kernel and by the pure-JAX
# reference, so the correctness check isolates Pallas lowering differences).
# ---------------------------------------------------------------------------
def _gat_layer(x_bf, mask_add, w_bf, a_src_rows, a_dst_cols, recip):
    """Dense multi-head GATConv (concat=True, LeakyReLU(0.2), softmax over
    incoming edges), without the output bias.  bf16 operands, f32 accum."""
    heads = a_src_rows.shape[0]
    head_dim = w_bf.shape[1] // heads
    n = x_bf.shape[0]

    xt = jnp.dot(x_bf, w_bf, preferred_element_type=jnp.float32)      # [N, H*D]
    xt_bf = xt.astype(jnp.bfloat16)

    # Fused attention coefficients for all heads:
    #   alpha_dst[:, h] = xt_h @ att_dst_h   (sublane-oriented column)
    #   alpha_src[h, :] = att_src_h . xt_h   (lane-oriented row)
    alpha_dst = jnp.dot(xt_bf, a_dst_cols,
                        preferred_element_type=jnp.float32)           # [N, H]
    alpha_src = jax.lax.dot_general(a_src_rows, xt_bf,
                                    (((1,), (1,)), ((), ())),
                                    preferred_element_type=jnp.float32)  # [H, N]

    ones_col = jnp.ones((n, 1), jnp.bfloat16)
    outs = []
    for h in range(heads):                                  # static unroll (H=2)
        # s[i, j] = alpha_dst[i] + alpha_src[j]  (message j -> i)
        s = alpha_dst[:, h:h + 1] + alpha_src[h:h + 1, :]   # [N, N]
        s = jnp.maximum(s, NEG_SLOPE * s)                   # LeakyReLU(0.2)
        s = s + mask_add                                    # -1e30 on non-edges
        s = s - jnp.max(s, axis=1, keepdims=True)
        p = jnp.exp(s).astype(jnp.bfloat16)                 # un-normalised probs
        # One MXU matmul produces both the aggregation and the softmax row-sum
        # (appended ones column); normalisation is deferred to the [N, D]
        # output and done with a cheap reciprocal instead of an [N, N] divide.
        rhs = jnp.concatenate(
            [xt_bf[:, h * head_dim:(h + 1) * head_dim], ones_col], axis=1)
        agg = jnp.dot(p, rhs, preferred_element_type=jnp.float32)     # [N, D+1]
        denom = agg[:, head_dim:head_dim + 1]                         # [N, 1]
        outs.append(agg[:, :head_dim] * recip(denom))
    return jnp.concatenate(outs, axis=-1)                   # [N, H*D]


def _gatjk_forward_math(adj, x_bf, w1_bf, asr1, adc1, gamma, beta,
                        w2_bf, asr2, adc2, b2, wp_bf, bp, recip):
    # int8 adjacency -> f32 additive mask, computed once and reused 4x.
    mask_add = (adj.astype(jnp.float32) - 1.0) * jnp.float32(-NEG_INF)

    # --- GATConv layer 1 (its bias cancels exactly under the following BN) ---
    h1 = _gat_layer(x_bf, mask_add, w1_bf, asr1, adc1, recip)

    # --- BatchNorm1d (training-style batch stats), one-pass, gamma folded ---
    mean = jnp.mean(h1, axis=0, keepdims=True)
    var = jnp.maximum(jnp.mean(h1 * h1, axis=0, keepdims=True) - mean * mean, 0.0)
    scale = gamma * jax.lax.rsqrt(var + BN_EPS)
    h1 = (h1 - mean) * scale + beta

    # --- ELU ---
    h1 = jnp.where(h1 > 0, h1, jnp.exp(h1) - 1.0)

    # --- dropout(p=0.5): identity in eval mode ---
    # TODO(synk): training-mode dropout would need pltpu.prng_seed/prng_random_bits.

    # --- GATConv layer 2 (keeps its bias; no BN afterwards) ---
    h2 = _gat_layer(h1.astype(jnp.bfloat16), mask_add, w2_bf, asr2, adc2, recip) + b2

    # --- JumpingKnowledge('max') over [h1, h2] ---
    hjk = jnp.maximum(h1, h2)

    # --- final_project (output lanes padded to 128; wrapper slices) ---
    return jnp.dot(hjk.astype(jnp.bfloat16), wp_bf,
                   preferred_element_type=jnp.float32) + bp


# ---------------------------------------------------------------------------
# Pallas kernel + wrapper
# ---------------------------------------------------------------------------
def _kernel_recip(v):
    # EUP approx reciprocal (idle slot) + one Newton step -> ~f32-exact,
    # while never touching an [N, N] tile.
    r = pl.reciprocal(v, approx=True)
    return r * (2.0 - v * r)


def gatjk_kernel(*refs):
    *in_refs, out_ref = refs
    out_ref[...] = _gatjk_forward_math(*(r[...] for r in in_refs),
                                       recip=_kernel_recip)


def _pack_alpha_params(att_src, att_dst):
    """Pack per-head attention vectors into block-structured matrices so the
    per-head coefficient computations become two matmuls per layer."""
    heads, head_dim = att_src.shape
    hd = heads * head_dim
    a_src_rows = jnp.zeros((heads, hd), jnp.float32)
    a_dst_cols = jnp.zeros((hd, heads), jnp.float32)
    for h in range(heads):
        a_src_rows = a_src_rows.at[h, h * head_dim:(h + 1) * head_dim].set(att_src[h])
        a_dst_cols = a_dst_cols.at[h * head_dim:(h + 1) * head_dim, h].set(att_dst[h])
    return a_src_rows.astype(jnp.bfloat16), a_dst_cols.astype(jnp.bfloat16)


def _prepare_args(adj, x, w1, att_src1, att_dst1, gamma, beta,
                  w2, att_src2, att_dst2, b2, w_proj, b_proj):
    """Pre-cast / pre-pack everything in the wrapper (bf16 matmul operands,
    int8 mask, lane-dense padded projection)."""
    c_out = w_proj.shape[1]
    c_out_pad = ((c_out + 127) // 128) * 128
    wp = jnp.zeros((w_proj.shape[0], c_out_pad), jnp.float32).at[:, :c_out].set(w_proj)
    bp = jnp.zeros((1, c_out_pad), jnp.float32).at[:, :c_out].set(b_proj)
    asr1, adc1 = _pack_alpha_params(att_src1, att_dst1)
    asr2, adc2 = _pack_alpha_params(att_src2, att_dst2)
    args = (adj.astype(jnp.int8),
            x.astype(jnp.bfloat16),
            w1.astype(jnp.bfloat16), asr1, adc1,
            gamma.astype(jnp.float32), beta.astype(jnp.float32),
            w2.astype(jnp.bfloat16), asr2, adc2,
            b2.astype(jnp.float32),
            wp.astype(jnp.bfloat16), bp.astype(jnp.float32))
    return args, c_out, c_out_pad


def gatjk_forward(adj, x, w1, att_src1, att_dst1, gamma, beta,
                  w2, att_src2, att_dst2, b2, w_proj, b_proj):
    n = x.shape[0]
    args, c_out, c_out_pad = _prepare_args(
        adj, x, w1, att_src1, att_dst1, gamma, beta,
        w2, att_src2, att_dst2, b2, w_proj, b_proj)

    def full(a):
        return pl.BlockSpec(a.shape, lambda i, nd=a.ndim: (0,) * nd)

    out = pl.pallas_call(
        gatjk_kernel,
        out_shape=jax.ShapeDtypeStruct((n, c_out_pad), jnp.float32),
        grid=(1,),
        in_specs=[full(a) for a in args],
        out_specs=pl.BlockSpec((n, c_out_pad), lambda i: (0, 0)),
        compiler_params=pltpu.CompilerParams(
            dimension_semantics=("arbitrary",)),
    )(*args)
    return out[:, :c_out]


def build_adjacency(edge_index, num_nodes):
    """int8 adjacency: 1 where an edge src->dst or a self-loop exists, else 0.
    (Dense formulation deduplicates multi-edges; PyG GATConv removes and
    re-adds self-loops, which the diagonal set reproduces.)"""
    src, dst = edge_index[0], edge_index[1]
    adj = jnp.zeros((num_nodes, num_nodes), jnp.float32)
    adj = adj.at[dst, src].set(1.0)                        # row = target, col = source
    idx = jnp.arange(num_nodes)
    adj = adj.at[idx, idx].set(1.0)                        # self loops
    return (adj > 0).astype(jnp.int8)


if __name__ == "__main__":
    key = jax.random.PRNGKey(0)

    # Small graph consistent with the module's forward (lane-friendly sizes):
    num_nodes = 128
    in_channels = 64
    hidden_channels = 64
    heads = 2
    out_channels = 8
    num_edges = 512
    hd = hidden_channels * heads                           # 128 (concat dim)

    keys = jax.random.split(key, 11)
    x = jax.random.normal(keys[0], (num_nodes, in_channels), jnp.float32)
    edge_index = jax.random.randint(keys[1], (2, num_edges), 0, num_nodes)
    adj = build_adjacency(edge_index, num_nodes)

    def glorot(k, shape):
        s = jnp.sqrt(6.0 / (shape[0] + shape[-1]))
        return jax.random.uniform(k, shape, jnp.float32, -s, s)

    # GATConv 1: Linear(in, heads*hidden, bias=False) + att_src/att_dst.
    # (Its output bias is omitted: a per-feature constant cancels under BN.)
    w1 = glorot(keys[2], (in_channels, hd))
    att_src1 = glorot(keys[3], (heads, hidden_channels))
    att_dst1 = glorot(keys[4], (heads, hidden_channels))

    # BatchNorm1d(heads*hidden): fresh init.
    gamma = jnp.ones((1, hd), jnp.float32)
    beta = jnp.zeros((1, hd), jnp.float32)

    # GATConv 2: Linear(heads*hidden, heads*hidden) + att + bias.
    w2 = glorot(keys[5], (hd, hd))
    att_src2 = glorot(keys[6], (heads, hidden_channels))
    att_dst2 = glorot(keys[7], (heads, hidden_channels))
    b2 = jax.random.normal(keys[8], (1, hd), jnp.float32) * 0.01

    # final_project: Linear(heads*hidden, out_channels).
    w_proj = glorot(keys[9], (hd, out_channels))
    b_proj = jax.random.normal(keys[10], (1, out_channels), jnp.float32) * 0.01

    out = gatjk_forward(adj, x, w1, att_src1, att_dst1, gamma, beta,
                        w2, att_src2, att_dst2, b2, w_proj, b_proj)
    out = jax.block_until_ready(out)

    # Pure-JAX reference: identical packed/cast args and shared math (no
    # Pallas), exact reciprocal in place of the in-kernel approx+Newton.
    ref_args, c_out, _ = _prepare_args(
        adj, x, w1, att_src1, att_dst1, gamma, beta,
        w2, att_src2, att_dst2, b2, w_proj, b_proj)
    ref = _gatjk_forward_math(*ref_args, recip=lambda v: 1.0 / v)[:, :c_out]

    assert out.shape == (num_nodes, out_channels)
    assert jnp.allclose(out, ref, atol=5e-3, rtol=5e-3), \
        float(jnp.max(jnp.abs(out - ref)))

    print("KERNEL_OK")
</pallas_src>

<mosaic_0001>
module attributes {stable_mosaic.version = 11 : i64} {
  func.func @gatjk_kernel(%arg0: i32, %arg1: memref<128x128xi8, #tpu.memory_space<vmem>>, %arg2: memref<128x64xbf16, #tpu.memory_space<vmem>>, %arg3: memref<64x128xbf16, #tpu.memory_space<vmem>>, %arg4: memref<2x128xbf16, #tpu.memory_space<vmem>>, %arg5: memref<128x2xbf16, #tpu.memory_space<vmem>>, %arg6: memref<1x128xf32, #tpu.memory_space<vmem>>, %arg7: memref<1x128xf32, #tpu.memory_space<vmem>>, %arg8: memref<128x128xbf16, #tpu.memory_space<vmem>>, %arg9: memref<2x128xbf16, #tpu.memory_space<vmem>>, %arg10: memref<128x2xbf16, #tpu.memory_space<vmem>>, %arg11: memref<1x128xf32, #tpu.memory_space<vmem>>, %arg12: memref<128x128xbf16, #tpu.memory_space<vmem>>, %arg13: memref<1x128xf32, #tpu.memory_space<vmem>>, %arg14: memref<128x128xf32, #tpu.memory_space<vmem>>) attributes {dimension_semantics = [#tpu.dimension_semantics<arbitrary>], iteration_bounds = array<i64: 1>, scalar_prefetch = 0 : i64, scratch_operands = 0 : i64, tpu.core_type = #tpu.core_type<tc>, window_params = [{pipeline_mode = #tpu.pipeline_mode<synchronous>, transform_indices = @transform_0, window_bounds = array<i64: 128, 128>}, {pipeline_mode = #tpu.pipeline_mode<synchronous>, transform_indices = @transform_1, window_bounds = array<i64: 128, 64>}, {pipeline_mode = #tpu.pipeline_mode<synchronous>, transform_indices = @transform_2, window_bounds = array<i64: 64, 128>}, {pipeline_mode = #tpu.pipeline_mode<synchronous>, transform_indices = @transform_3, window_bounds = array<i64: 2, 128>}, {pipeline_mode = #tpu.pipeline_mode<synchronous>, transform_indices = @transform_4, window_bounds = array<i64: 128, 2>}, {pipeline_mode = #tpu.pipeline_mode<synchronous>, transform_indices = @transform_5, window_bounds = array<i64: 1, 128>}, {pipeline_mode = #tpu.pipeline_mode<synchronous>, transform_indices = @transform_6, window_bounds = array<i64: 1, 128>}, {pipeline_mode = #tpu.pipeline_mode<synchronous>, transform_indices = @transform_7, window_bounds = array<i64: 128, 128>}, {pipeline_mode = #tpu.pipeline_mode<synchronous>, transform_indices = @transform_8, window_bounds = array<i64: 2, 128>}, {pipeline_mode = #tpu.pipeline_mode<synchronous>, transform_indices = @transform_9, window_bounds = array<i64: 128, 2>}, {pipeline_mode = #tpu.pipeline_mode<synchronous>, transform_indices = @transform_10, window_bounds = array<i64: 1, 128>}, {pipeline_mode = #tpu.pipeline_mode<synchronous>, transform_indices = @transform_11, window_bounds = array<i64: 128, 128>}, {pipeline_mode = #tpu.pipeline_mode<synchronous>, transform_indices = @transform_12, window_bounds = array<i64: 1, 128>}, {pipeline_mode = #tpu.pipeline_mode<synchronous>, transform_indices = @transform_13, window_bounds = array<i64: 128, 128>}]} {
    %c0 = arith.constant 0 : index
    %c0_0 = arith.constant 0 : index
    %0 = vector.load %arg1[%c0, %c0_0] : memref<128x128xi8, #tpu.memory_space<vmem>>, vector<128x128xi8>
    %c0_1 = arith.constant 0 : index
    %c0_2 = arith.constant 0 : index
    %1 = vector.load %arg2[%c0_1, %c0_2] : memref<128x64xbf16, #tpu.memory_space<vmem>>, vector<128x64xbf16>
    %c0_3 = arith.constant 0 : index
    %c0_4 = arith.constant 0 : index
    %2 = vector.load %arg3[%c0_3, %c0_4] : memref<64x128xbf16, #tpu.memory_space<vmem>>, vector<64x128xbf16>
    %c0_5 = arith.constant 0 : index
    %c0_6 = arith.constant 0 : index
    %3 = vector.load %arg4[%c0_5, %c0_6] : memref<2x128xbf16, #tpu.memory_space<vmem>>, vector<2x128xbf16>
    %c0_7 = arith.constant 0 : index
    %c0_8 = arith.constant 0 : index
    %4 = vector.load %arg5[%c0_7, %c0_8] : memref<128x2xbf16, #tpu.memory_space<vmem>>, vector<128x2xbf16>
    %c0_9 = arith.constant 0 : index
    %c0_10 = arith.constant 0 : index
    %5 = vector.load %arg6[%c0_9, %c0_10] : memref<1x128xf32, #tpu.memory_space<vmem>>, vector<1x128xf32>
    %c0_11 = arith.constant 0 : index
    %c0_12 = arith.constant 0 : index
    %6 = vector.load %arg7[%c0_11, %c0_12] : memref<1x128xf32, #tpu.memory_space<vmem>>, vector<1x128xf32>
    %c0_13 = arith.constant 0 : index
    %c0_14 = arith.constant 0 : index
    %7 = vector.load %arg8[%c0_13, %c0_14] : memref<128x128xbf16, #tpu.memory_space<vmem>>, vector<128x128xbf16>
    %c0_15 = arith.constant 0 : index
    %c0_16 = arith.constant 0 : index
    %8 = vector.load %arg9[%c0_15, %c0_16] : memref<2x128xbf16, #tpu.memory_space<vmem>>, vector<2x128xbf16>
    %c0_17 = arith.constant 0 : index
    %c0_18 = arith.constant 0 : index
    %9 = vector.load %arg10[%c0_17, %c0_18] : memref<128x2xbf16, #tpu.memory_space<vmem>>, vector<128x2xbf16>
    %c0_19 = arith.constant 0 : index
    %c0_20 = arith.constant 0 : index
    %10 = vector.load %arg11[%c0_19, %c0_20] : memref<1x128xf32, #tpu.memory_space<vmem>>, vector<1x128xf32>
    %c0_21 = arith.constant 0 : index
    %c0_22 = arith.constant 0 : index
    %11 = vector.load %arg12[%c0_21, %c0_22] : memref<128x128xbf16, #tpu.memory_space<vmem>>, vector<128x128xbf16>
    %c0_23 = arith.constant 0 : index
    %c0_24 = arith.constant 0 : index
    %12 = vector.load %arg13[%c0_23, %c0_24] : memref<1x128xf32, #tpu.memory_space<vmem>>, vector<1x128xf32>
    %13 = arith.sitofp %0 : vector<128x128xi8> to vector<128x128xf32>
    %cst = arith.constant 1.000000e+00 : f32
    %14 = vector.broadcast %cst : f32 to vector<128x128xf32>
    %15 = arith.subf %13, %14 : vector<128x128xf32>
    %cst_25 = arith.constant 1.000000e+30 : f32
    %16 = vector.broadcast %cst_25 : f32 to vector<128x128xf32>
    %17 = arith.mulf %15, %16 : vector<128x128xf32>
    %cst_26 = arith.constant dense<0.000000e+00> : vector<128x128xf32>
    %18 = tpu.matmul %1, %2, %cst_26 {dimension_numbers = #tpu.dot_dimension_numbers<[1], [0], [0], [1], [0, 0, 1, 1], [], []>} : vector<128x64xbf16>, vector<64x128xbf16>, vector<128x128xf32> -> vector<128x128xf32>
    %19 = arith.truncf %18 : vector<128x128xf32> to vector<128x128xbf16>
    %cst_27 = arith.constant dense<0.000000e+00> : vector<128x2xf32>
    %20 = tpu.matmul %19, %4, %cst_27 {dimension_numbers = #tpu.dot_dimension_numbers<[1], [0], [0], [1], [0, 0, 1, 1], [], []>} : vector<128x128xbf16>, vector<128x2xbf16>, vector<128x2xf32> -> vector<128x2xf32>
    %cst_28 = arith.constant dense<0.000000e+00> : vector<2x128xf32>
    %21 = tpu.matmul %3, %19, %cst_28 {dimension_numbers = #tpu.dot_dimension_numbers<[1], [1], [0], [0], [0, 0, 1, 0], [], []>} : vector<2x128xbf16>, vector<128x128xbf16>, vector<2x128xf32> -> vector<2x128xf32>
    %cst_29 = arith.constant 1.000000e+00 : bf16
    %22 = vector.broadcast %cst_29 : bf16 to vector<128x1xbf16>
    %23 = vector.extract_strided_slice %20 {offsets = [0, 0], sizes = [128, 1], strides = [1, 1]} : vector<128x2xf32> to vector<128x1xf32>
    %24 = vector.extract_strided_slice %21 {offsets = [0, 0], sizes = [1, 128], strides = [1, 1]} : vector<2x128xf32> to vector<1x128xf32>
    %25 = vector.broadcast %23 : vector<128x1xf32> to vector<128x128xf32>
    %26 = vector.broadcast %24 : vector<1x128xf32> to vector<128x128xf32>
    %27 = arith.addf %25, %26 : vector<128x128xf32>
    %cst_30 = arith.constant 2.000000e-01 : f32
    %28 = vector.broadcast %cst_30 : f32 to vector<128x128xf32>
    %29 = arith.mulf %28, %27 : vector<128x128xf32>
    %30 = arith.maximumf %27, %29 : vector<128x128xf32>
    %31 = arith.addf %30, %17 : vector<128x128xf32>
    %cst_31 = arith.constant dense<0xFF800000> : vector<128xf32>
    %32 = vector.multi_reduction <maximumf>, %31, %cst_31 [1] : vector<128x128xf32> to vector<128xf32>
    %33 = vector.shape_cast %32 : vector<128xf32> to vector<128x1xf32>
    %34 = vector.broadcast %33 : vector<128x1xf32> to vector<128x128xf32>
    %35 = arith.subf %31, %34 : vector<128x128xf32>
    %36 = math.exp %35 : vector<128x128xf32>
    %37 = arith.truncf %36 : vector<128x128xf32> to vector<128x128xbf16>
    %38 = vector.extract_strided_slice %19 {offsets = [0, 0], sizes = [128, 64], strides = [1, 1]} : vector<128x128xbf16> to vector<128x64xbf16>
    %39 = tpu.concatenate %38, %22 in 1 : vector<128x64xbf16>, vector<128x1xbf16> -> vector<128x65xbf16>
    %cst_32 = arith.constant dense<0.000000e+00> : vector<128x65xf32>
    %40 = tpu.matmul %37, %39, %cst_32 {dimension_numbers = #tpu.dot_dimension_numbers<[1], [0], [0], [1], [0, 0, 1, 1], [], []>} : vector<128x128xbf16>, vector<128x65xbf16>, vector<128x65xf32> -> vector<128x65xf32>
    %41 = vector.extract_strided_slice %40 {offsets = [0, 64], sizes = [128, 1], strides = [1, 1]} : vector<128x65xf32> to vector<128x1xf32>
    %42 = vector.extract_strided_slice %40 {offsets = [0, 0], sizes = [128, 64], strides = [1, 1]} : vector<128x65xf32> to vector<128x64xf32>
    %43 = tpu.reciprocal %41 {approx = true} : vector<128x1xf32> -> vector<128x1xf32>
    %44 = arith.mulf %41, %43 : vector<128x1xf32>
    %cst_33 = arith.constant 2.000000e+00 : f32
    %45 = vector.broadcast %cst_33 : f32 to vector<128x1xf32>
    %46 = arith.subf %45, %44 : vector<128x1xf32>
    %47 = arith.mulf %43, %46 : vector<128x1xf32>
    %48 = vector.broadcast %47 : vector<128x1xf32> to vector<128x64xf32>
    %49 = arith.mulf %42, %48 : vector<128x64xf32>
    %50 = vector.extract_strided_slice %20 {offsets = [0, 1], sizes = [128, 1], strides = [1, 1]} : vector<128x2xf32> to vector<128x1xf32>
    %51 = vector.extract_strided_slice %21 {offsets = [1, 0], sizes = [1, 128], strides = [1, 1]} : vector<2x128xf32> to vector<1x128xf32>
    %52 = vector.broadcast %50 : vector<128x1xf32> to vector<128x128xf32>
    %53 = vector.broadcast %51 : vector<1x128xf32> to vector<128x128xf32>
    %54 = arith.addf %52, %53 : vector<128x128xf32>
    %cst_34 = arith.constant 2.000000e-01 : f32
    %55 = vector.broadcast %cst_34 : f32 to vector<128x128xf32>
    %56 = arith.mulf %55, %54 : vector<128x128xf32>
    %57 = arith.maximumf %54, %56 : vector<128x128xf32>
    %58 = arith.addf %57, %17 : vector<128x128xf32>
    %cst_35 = arith.constant dense<0xFF800000> : vector<128xf32>
    %59 = vector.multi_reduction <maximumf>, %58, %cst_35 [1] : vector<128x128xf32> to vector<128xf32>
    %60 = vector.shape_cast %59 : vector<128xf32> to vector<128x1xf32>
    %61 = vector.broadcast %60 : vector<128x1xf32> to vector<128x128xf32>
    %62 = arith.subf %58, %61 : vector<128x128xf32>
    %63 = math.exp %62 : vector<128x128xf32>
    %64 = arith.truncf %63 : vector<128x128xf32> to vector<128x128xbf16>
    %65 = vector.extract_strided_slice %19 {offsets = [0, 64], sizes = [128, 64], strides = [1, 1]} : vector<128x128xbf16> to vector<128x64xbf16>
    %66 = tpu.concatenate %65, %22 in 1 : vector<128x64xbf16>, vector<128x1xbf16> -> vector<128x65xbf16>
    %cst_36 = arith.constant dense<0.000000e+00> : vector<128x65xf32>
    %67 = tpu.matmul %64, %66, %cst_36 {dimension_numbers = #tpu.dot_dimension_numbers<[1], [0], [0], [1], [0, 0, 1, 1], [], []>} : vector<128x128xbf16>, vector<128x65xbf16>, vector<128x65xf32> -> vector<128x65xf32>
    %68 = vector.extract_strided_slice %67 {offsets = [0, 64], sizes = [128, 1], strides = [1, 1]} : vector<128x65xf32> to vector<128x1xf32>
    %69 = vector.extract_strided_slice %67 {offsets = [0, 0], sizes = [128, 64], strides = [1, 1]} : vector<128x65xf32> to vector<128x64xf32>
    %70 = tpu.reciprocal %68 {approx = true} : vector<128x1xf32> -> vector<128x1xf32>
    %71 = arith.mulf %68, %70 : vector<128x1xf32>
    %cst_37 = arith.constant 2.000000e+00 : f32
    %72 = vector.broadcast %cst_37 : f32 to vector<128x1xf32>
    %73 = arith.subf %72, %71 : vector<128x1xf32>
    %74 = arith.mulf %70, %73 : vector<128x1xf32>
    %75 = vector.broadcast %74 : vector<128x1xf32> to vector<128x64xf32>
    %76 = arith.mulf %69, %75 : vector<128x64xf32>
    %77 = tpu.concatenate %49, %76 in 1 : vector<128x64xf32>, vector<128x64xf32> -> vector<128x128xf32>
    %cst_38 = arith.constant dense<0.000000e+00> : vector<128xf32>
    %78 = vector.multi_reduction <add>, %77, %cst_38 [0] : vector<128x128xf32> to vector<128xf32>
    %79 = vector.shape_cast %78 : vector<128xf32> to vector<1x128xf32>
    %cst_39 = arith.constant 1.280000e+02 : f32
    %80 = vector.broadcast %cst_39 : f32 to vector<1x128xf32>
    %81 = arith.divf %79, %80 : vector<1x128xf32>
    %82 = arith.mulf %77, %77 : vector<128x128xf32>
    %cst_40 = arith.constant dense<0.000000e+00> : vector<128xf32>
    %83 = vector.multi_reduction <add>, %82, %cst_40 [0] : vector<128x128xf32> to vector<128xf32>
    %84 = vector.shape_cast %83 : vector<128xf32> to vector<1x128xf32>
    %cst_41 = arith.constant 1.280000e+02 : f32
    %85 = vector.broadcast %cst_41 : f32 to vector<1x128xf32>
    %86 = arith.divf %84, %85 : vector<1x128xf32>
    %87 = arith.mulf %81, %81 : vector<1x128xf32>
    %88 = arith.subf %86, %87 : vector<1x128xf32>
    %cst_42 = arith.constant 0.000000e+00 : f32
    %89 = vector.broadcast %cst_42 : f32 to vector<1x128xf32>
    %90 = arith.maximumf %88, %89 : vector<1x128xf32>
    %cst_43 = arith.constant 9.99999974E-6 : f32
    %91 = vector.broadcast %cst_43 : f32 to vector<1x128xf32>
    %92 = arith.addf %90, %91 : vector<1x128xf32>
    %93 = math.rsqrt %92 : vector<1x128xf32>
    %94 = arith.mulf %5, %93 : vector<1x128xf32>
    %95 = vector.broadcast %81 : vector<1x128xf32> to vector<128x128xf32>
    %96 = arith.subf %77, %95 : vector<128x128xf32>
    %97 = vector.broadcast %94 : vector<1x128xf32> to vector<128x128xf32>
    %98 = arith.mulf %96, %97 : vector<128x128xf32>
    %99 = vector.broadcast %6 : vector<1x128xf32> to vector<128x128xf32>
    %100 = arith.addf %98, %99 : vector<128x128xf32>
    %cst_44 = arith.constant 0.000000e+00 : f32
    %101 = vector.broadcast %cst_44 : f32 to vector<128x128xf32>
    %102 = arith.cmpf ogt, %100, %101 : vector<128x128xf32>
    %103 = math.exp %100 : vector<128x128xf32>
    %cst_45 = arith.constant 1.000000e+00 : f32
    %104 = vector.broadcast %cst_45 : f32 to vector<128x128xf32>
    %105 = arith.subf %103, %104 : vector<128x128xf32>
    %106 = arith.select %102, %100, %105 : vector<128x128xi1>, vector<128x128xf32>
    %107 = arith.truncf %106 : vector<128x128xf32> to vector<128x128xbf16>
    %cst_46 = arith.constant dense<0.000000e+00> : vector<128x128xf32>
    %108 = tpu.matmul %107, %7, %cst_46 {dimension_numbers = #tpu.dot_dimension_numbers<[1], [0], [0], [1], [0, 0, 1, 1], [], []>} : vector<128x128xbf16>, vector<128x128xbf16>, vector<128x128xf32> -> vector<128x128xf32>
    %109 = arith.truncf %108 : vector<128x128xf32> to vector<128x128xbf16>
    %cst_47 = arith.constant dense<0.000000e+00> : vector<128x2xf32>
    %110 = tpu.matmul %109, %9, %cst_47 {dimension_numbers = #tpu.dot_dimension_numbers<[1], [0], [0], [1], [0, 0, 1, 1], [], []>} : vector<128x128xbf16>, vector<128x2xbf16>, vector<128x2xf32> -> vector<128x2xf32>
    %cst_48 = arith.constant dense<0.000000e+00> : vector<2x128xf32>
    %111 = tpu.matmul %8, %109, %cst_48 {dimension_numbers = #tpu.dot_dimension_numbers<[1], [1], [0], [0], [0, 0, 1, 0], [], []>} : vector<2x128xbf16>, vector<128x128xbf16>, vector<2x128xf32> -> vector<2x128xf32>
    %cst_49 = arith.constant 1.000000e+00 : bf16
    %112 = vector.broadcast %cst_49 : bf16 to vector<128x1xbf16>
    %113 = vector.extract_strided_slice %110 {offsets = [0, 0], sizes = [128, 1], strides = [1, 1]} : vector<128x2xf32> to vector<128x1xf32>
    %114 = vector.extract_strided_slice %111 {offsets = [0, 0], sizes = [1, 128], strides = [1, 1]} : vector<2x128xf32> to vector<1x128xf32>
    %115 = vector.broadcast %113 : vector<128x1xf32> to vector<128x128xf32>
    %116 = vector.broadcast %114 : vector<1x128xf32> to vector<128x128xf32>
    %117 = arith.addf %115, %116 : vector<128x128xf32>
    %cst_50 = arith.constant 2.000000e-01 : f32
    %118 = vector.broadcast %cst_50 : f32 to vector<128x128xf32>
    %119 = arith.mulf %118, %117 : vector<128x128xf32>
    %120 = arith.maximumf %117, %119 : vector<128x128xf32>
    %121 = arith.addf %120, %17 : vector<128x128xf32>
    %cst_51 = arith.constant dense<0xFF800000> : vector<128xf32>
    %122 = vector.multi_reduction <maximumf>, %121, %cst_51 [1] : vector<128x128xf32> to vector<128xf32>
    %123 = vector.shape_cast %122 : vector<128xf32> to vector<128x1xf32>
    %124 = vector.broadcast %123 : vector<128x1xf32> to vector<128x128xf32>
    %125 = arith.subf %121, %124 : vector<128x128xf32>
    %126 = math.exp %125 : vector<128x128xf32>
    %127 = arith.truncf %126 : vector<128x128xf32> to vector<128x128xbf16>
    %128 = vector.extract_strided_slice %109 {offsets = [0, 0], sizes = [128, 64], strides = [1, 1]} : vector<128x128xbf16> to vector<128x64xbf16>
    %129 = tpu.concatenate %128, %112 in 1 : vector<128x64xbf16>, vector<128x1xbf16> -> vector<128x65xbf16>
    %cst_52 = arith.constant dense<0.000000e+00> : vector<128x65xf32>
    %130 = tpu.matmul %127, %129, %cst_52 {dimension_numbers = #tpu.dot_dimension_numbers<[1], [0], [0], [1], [0, 0, 1, 1], [], []>} : vector<128x128xbf16>, vector<128x65xbf16>, vector<128x65xf32> -> vector<128x65xf32>
    %131 = vector.extract_strided_slice %130 {offsets = [0, 64], sizes = [128, 1], strides = [1, 1]} : vector<128x65xf32> to vector<128x1xf32>
    %132 = vector.extract_strided_slice %130 {offsets = [0, 0], sizes = [128, 64], strides = [1, 1]} : vector<128x65xf32> to vector<128x64xf32>
    %133 = tpu.reciprocal %131 {approx = true} : vector<128x1xf32> -> vector<128x1xf32>
    %134 = arith.mulf %131, %133 : vector<128x1xf32>
    %cst_53 = arith.constant 2.000000e+00 : f32
    %135 = vector.broadcast %cst_53 : f32 to vector<128x1xf32>
    %136 = arith.subf %135, %134 : vector<128x1xf32>
    %137 = arith.mulf %133, %136 : vector<128x1xf32>
    %138 = vector.broadcast %137 : vector<128x1xf32> to vector<128x64xf32>
    %139 = arith.mulf %132, %138 : vector<128x64xf32>
    %140 = vector.extract_strided_slice %110 {offsets = [0, 1], sizes = [128, 1], strides = [1, 1]} : vector<128x2xf32> to vector<128x1xf32>
    %141 = vector.extract_strided_slice %111 {offsets = [1, 0], sizes = [1, 128], strides = [1, 1]} : vector<2x128xf32> to vector<1x128xf32>
    %142 = vector.broadcast %140 : vector<128x1xf32> to vector<128x128xf32>
    %143 = vector.broadcast %141 : vector<1x128xf32> to vector<128x128xf32>
    %144 = arith.addf %142, %143 : vector<128x128xf32>
    %cst_54 = arith.constant 2.000000e-01 : f32
    %145 = vector.broadcast %cst_54 : f32 to vector<128x128xf32>
    %146 = arith.mulf %145, %144 : vector<128x128xf32>
    %147 = arith.maximumf %144, %146 : vector<128x128xf32>
    %148 = arith.addf %147, %17 : vector<128x128xf32>
    %cst_55 = arith.constant dense<0xFF800000> : vector<128xf32>
    %149 = vector.multi_reduction <maximumf>, %148, %cst_55 [1] : vector<128x128xf32> to vector<128xf32>
    %150 = vector.shape_cast %149 : vector<128xf32> to vector<128x1xf32>
    %151 = vector.broadcast %150 : vector<128x1xf32> to vector<128x128xf32>
    %152 = arith.subf %148, %151 : vector<128x128xf32>
    %153 = math.exp %152 : vector<128x128xf32>
    %154 = arith.truncf %153 : vector<128x128xf32> to vector<128x128xbf16>
    %155 = vector.extract_strided_slice %109 {offsets = [0, 64], sizes = [128, 64], strides = [1, 1]} : vector<128x128xbf16> to vector<128x64xbf16>
    %156 = tpu.concatenate %155, %112 in 1 : vector<128x64xbf16>, vector<128x1xbf16> -> vector<128x65xbf16>
    %cst_56 = arith.constant dense<0.000000e+00> : vector<128x65xf32>
    %157 = tpu.matmul %154, %156, %cst_56 {dimension_numbers = #tpu.dot_dimension_numbers<[1], [0], [0], [1], [0, 0, 1, 1], [], []>} : vector<128x128xbf16>, vector<128x65xbf16>, vector<128x65xf32> -> vector<128x65xf32>
    %158 = vector.extract_strided_slice %157 {offsets = [0, 64], sizes = [128, 1], strides = [1, 1]} : vector<128x65xf32> to vector<128x1xf32>
    %159 = vector.extract_strided_slice %157 {offsets = [0, 0], sizes = [128, 64], strides = [1, 1]} : vector<128x65xf32> to vector<128x64xf32>
    %160 = tpu.reciprocal %158 {approx = true} : vector<128x1xf32> -> vector<128x1xf32>
    %161 = arith.mulf %158, %160 : vector<128x1xf32>
    %cst_57 = arith.constant 2.000000e+00 : f32
    %162 = vector.broadcast %cst_57 : f32 to vector<128x1xf32>
    %163 = arith.subf %162, %161 : vector<128x1xf32>
    %164 = arith.mulf %160, %163 : vector<128x1xf32>
    %165 = vector.broadcast %164 : vector<128x1xf32> to vector<128x64xf32>
    %166 = arith.mulf %159, %165 : vector<128x64xf32>
    %167 = tpu.concatenate %139, %166 in 1 : vector<128x64xf32>, vector<128x64xf32> -> vector<128x128xf32>
    %168 = vector.broadcast %10 : vector<1x128xf32> to vector<128x128xf32>
    %169 = arith.addf %167, %168 : vector<128x128xf32>
    %170 = arith.maximumf %106, %169 : vector<128x128xf32>
    %171 = arith.truncf %170 : vector<128x128xf32> to vector<128x128xbf16>
    %cst_58 = arith.constant dense<0.000000e+00> : vector<128x128xf32>
    %172 = tpu.matmul %171, %11, %cst_58 {dimension_numbers = #tpu.dot_dimension_numbers<[1], [0], [0], [1], [0, 0, 1, 1], [], []>} : vector<128x128xbf16>, vector<128x128xbf16>, vector<128x128xf32> -> vector<128x128xf32>
    %173 = vector.broadcast %12 : vector<1x128xf32> to vector<128x128xf32>
    %174 = arith.addf %172, %173 : vector<128x128xf32>
    %c0_59 = arith.constant 0 : index
    %c0_60 = arith.constant 0 : index
    %175 = vector.load %arg14[%c0_59, %c0_60] : memref<128x128xf32, #tpu.memory_space<vmem>>, vector<128x128xf32>
    tpu.vector_store %arg14[%c0_59, %c0_60], %174 {strides = array<i32>} : memref<128x128xf32, #tpu.memory_space<vmem>>, vector<128x128xf32>,
    return
  }
  func.func @transform_0(%arg0: i32) -> (i32, i32) {
    %c0_i32 = arith.constant 0 : i32
    %c0_i32_0 = arith.constant 0 : i32
    %c0_i32_1 = arith.constant 0 : i32
    return %c0_i32, %c0_i32_0 : i32, i32
  }
  func.func @transform_1(%arg0: i32) -> (i32, i32) {
    %c0_i32 = arith.constant 0 : i32
    %c0_i32_0 = arith.constant 0 : i32
    %c0_i32_1 = arith.constant 0 : i32
    return %c0_i32, %c0_i32_0 : i32, i32
  }
  func.func @transform_2(%arg0: i32) -> (i32, i32) {
    %c0_i32 = arith.constant 0 : i32
    %c0_i32_0 = arith.constant 0 : i32
    %c0_i32_1 = arith.constant 0 : i32
    return %c0_i32, %c0_i32_0 : i32, i32
  }
  func.func @transform_3(%arg0: i32) -> (i32, i32) {
    %c0_i32 = arith.constant 0 : i32
    %c0_i32_0 = arith.constant 0 : i32
    %c0_i32_1 = arith.constant 0 : i32
    return %c0_i32, %c0_i32_0 : i32, i32
  }
  func.func @transform_4(%arg0: i32) -> (i32, i32) {
    %c0_i32 = arith.constant 0 : i32
    %c0_i32_0 = arith.constant 0 : i32
    %c0_i32_1 = arith.constant 0 : i32
    return %c0_i32, %c0_i32_0 : i32, i32
  }
  func.func @transform_5(%arg0: i32) -> (i32, i32) {
    %c0_i32 = arith.constant 0 : i32
    %c0_i32_0 = arith.constant 0 : i32
    %c0_i32_1 = arith.constant 0 : i32
    return %c0_i32, %c0_i32_0 : i32, i32
  }
  func.func @transform_6(%arg0: i32) -> (i32, i32) {
    %c0_i32 = arith.constant 0 : i32
    %c0_i32_0 = arith.constant 0 : i32
    %c0_i32_1 = arith.constant 0 : i32
    return %c0_i32, %c0_i32_0 : i32, i32
  }
  func.func @transform_7(%arg0: i32) -> (i32, i32) {
    %c0_i32 = arith.constant 0 : i32
    %c0_i32_0 = arith.constant 0 : i32
    %c0_i32_1 = arith.constant 0 : i32
    return %c0_i32, %c0_i32_0 : i32, i32
  }
  func.func @transform_8(%arg0: i32) -> (i32, i32) {
    %c0_i32 = arith.constant 0 : i32
    %c0_i32_0 = arith.constant 0 : i32
    %c0_i32_1 = arith.constant 0 : i32
    return %c0_i32, %c0_i32_0 : i32, i32
  }
  func.func @transform_9(%arg0: i32) -> (i32, i32) {
    %c0_i32 = arith.constant 0 : i32
    %c0_i32_0 = arith.constant 0 : i32
    %c0_i32_1 = arith.constant 0 : i32
    return %c0_i32, %c0_i32_0 : i32, i32
  }
  func.func @transform_10(%arg0: i32) -> (i32, i32) {
    %c0_i32 = arith.constant 0 : i32
    %c0_i32_0 = arith.constant 0 : i32
    %c0_i32_1 = arith.constant 0 : i32
    return %c0_i32, %c0_i32_0 : i32, i32
  }
  func.func @transform_11(%arg0: i32) -> (i32, i32) {
    %c0_i32 = arith.constant 0 : i32
    %c0_i32_0 = arith.constant 0 : i32
    %c0_i32_1 = arith.constant 0 : i32
    return %c0_i32, %c0_i32_0 : i32, i32
  }
  func.func @transform_12(%arg0: i32) -> (i32, i32) {
    %c0_i32 = arith.constant 0 : i32
    %c0_i32_0 = arith.constant 0 : i32
    %c0_i32_1 = arith.constant 0 : i32
    return %c0_i32, %c0_i32_0 : i32, i32
  }
  func.func @transform_13(%arg0: i32) -> (i32, i32) {
    %c0_i32 = arith.constant 0 : i32
    %c0_i32_0 = arith.constant 0 : i32
    %c0_i32_1 = arith.constant 0 : i32
    return %c0_i32, %c0_i32_0 : i32, i32
  }
}

</mosaic_0001>

<llo_original>
// kernel: tpu_custom_call.1
$region0: #{tpu_custom_call.1}
  #allocation0 [shape = 'u32[]', space=smem, size = 0x4, offset = 0x4, fixed_abs, tag = 'smem constant byte address 0x4 - core index']
  #allocation1 [shape = 'u32[144,128]{1,0:T(1,128)}', space=vmem, size = 0x12000, scoped, tag = 'internal scratch']
  %s0 = inlined_call_operand.vmem [shape: s8[128,128], index: 0, kind: input, shape index: {}]
  %s1 = inlined_call_operand.vmem [shape: bf16[128,64], index: 1, kind: input, shape index: {}]
  %s2 = inlined_call_operand.vmem [shape: bf16[64,128], index: 2, kind: input, shape index: {}]
  %s3 = inlined_call_operand.vmem [shape: bf16[2,128], index: 3, kind: input, shape index: {}]
  %s4 = inlined_call_operand.vmem [shape: bf16[128,2], index: 4, kind: input, shape index: {}]
  %s5 = inlined_call_operand.vmem [shape: f32[1,128], index: 5, kind: input, shape index: {}]
  %s6 = inlined_call_operand.vmem [shape: f32[1,128], index: 6, kind: input, shape index: {}]
  %s7 = inlined_call_operand.vmem [shape: bf16[128,128], index: 7, kind: input, shape index: {}]
  %s8 = inlined_call_operand.vmem [shape: bf16[2,128], index: 8, kind: input, shape index: {}]
  %s9 = inlined_call_operand.vmem [shape: bf16[128,2], index: 9, kind: input, shape index: {}]
  %s10 = inlined_call_operand.vmem [shape: f32[1,128], index: 10, kind: input, shape index: {}]
  %s11 = inlined_call_operand.vmem [shape: bf16[128,128], index: 11, kind: input, shape index: {}]
  %s12 = inlined_call_operand.vmem [shape: f32[1,128], index: 12, kind: input, shape index: {}]
  %s13 = inlined_call_operand.hbm [shape: f32[128,128], index: 13, kind: output, shape index: {}]
  %s14 = sld [smem:[#allocation0]]
  $region62: #{tpu_custom_call.1} parent=0
    _
  %s16 = ssub.s32 1, %s14
  %s17 = scalar_select 0, %s16, %s14
  $region1: #{tpu_custom_call.1} parent=0
    #allocation2 [shape = 'u8[65536]{0}', space=vmem, size = 0x10000, scoped, tag = 'output window, operand 0, single buffered']
    #allocation3 [shape = 's32[1]{0}', space=sflag, size = 0x4, scoped, tag = 'scoped memory for tpu_custom_call.1']
    %18 = vsyncpa [#allocation3], 0
    // Predicated region
    $region2: #{tpu_custom_call.1} parent=1 // pred_check
      _
    $region3: #{tpu_custom_call.1} parent=1 // pred_check_branch
      %20 = sbr.rel (0) target = $region5
    $region4: #{tpu_custom_call.1} parent=1 // pred_region
      _
    $region5: #{tpu_custom_call.1} parent=1 // pred_fallthru
      _
    // Predicated region
    $region6: #{tpu_custom_call.1} parent=1 // pred_check
      _
    $region7: #{tpu_custom_call.1} parent=1 // pred_check_branch
      %22 = sbr.rel (0) target = $region9
    $region8: #{tpu_custom_call.1} parent=1 // pred_region
      _
    $region9: #{tpu_custom_call.1} parent=1 // pred_fallthru
      _
    // Predicated region
    $region10: #{tpu_custom_call.1} parent=1 // pred_check
      _
    $region11: #{tpu_custom_call.1} parent=1 // pred_check_branch
      %24 = sbr.rel (0) target = $region13
    $region12: #{tpu_custom_call.1} parent=1 // pred_region
      _
    $region13: #{tpu_custom_call.1} parent=1 // pred_fallthru
      _
    // Predicated region
    $region14: #{tpu_custom_call.1} parent=1 // pred_check
      _
    $region15: #{tpu_custom_call.1} parent=1 // pred_check_branch
      %26 = sbr.rel (0) target = $region17
    $region16: #{tpu_custom_call.1} parent=1 // pred_region
      _
    $region17: #{tpu_custom_call.1} parent=1 // pred_fallthru
      _
    // Predicated region
    $region18: #{tpu_custom_call.1} parent=1 // pred_check
      _
    $region19: #{tpu_custom_call.1} parent=1 // pred_check_branch
      %28 = sbr.rel (0) target = $region21
    $region20: #{tpu_custom_call.1} parent=1 // pred_region
      _
    $region21: #{tpu_custom_call.1} parent=1 // pred_fallthru
      _
    // Predicated region
    $region22: #{tpu_custom_call.1} parent=1 // pred_check
      _
    $region23: #{tpu_custom_call.1} parent=1 // pred_check_branch
      %30 = sbr.rel (0) target = $region25
    $region24: #{tpu_custom_call.1} parent=1 // pred_region
      _
    $region25: #{tpu_custom_call.1} parent=1 // pred_fallthru
      _
    // Predicated region
    $region26: #{tpu_custom_call.1} parent=1 // pred_check
      _
    $region27: #{tpu_custom_call.1} parent=1 // pred_check_branch
      %32 = sbr.rel (0) target = $region29
    $region28: #{tpu_custom_call.1} parent=1 // pred_region
      _
    $region29: #{tpu_custom_call.1} parent=1 // pred_fallthru
      _
    // Predicated region
    $region30: #{tpu_custom_call.1} parent=1 // pred_check
      _
    $region31: #{tpu_custom_call.1} parent=1 // pred_check_branch
      %34 = sbr.rel (0) target = $region33
    $region32: #{tpu_custom_call.1} parent=1 // pred_region
      _
    $region33: #{tpu_custom_call.1} parent=1 // pred_fallthru
      _
    // Predicated region
    $region34: #{tpu_custom_call.1} parent=1 // pred_check
      _
    $region35: #{tpu_custom_call.1} parent=1 // pred_check_branch
      %36 = sbr.rel (0) target = $region37
    $region36: #{tpu_custom_call.1} parent=1 // pred_region
      _
    $region37: #{tpu_custom_call.1} parent=1 // pred_fallthru
      _
    // Predicated region
    $region38: #{tpu_custom_call.1} parent=1 // pred_check
      _
    $region39: #{tpu_custom_call.1} parent=1 // pred_check_branch
      %38 = sbr.rel (0) target = $region41
    $region40: #{tpu_custom_call.1} parent=1 // pred_region
      _
    $region41: #{tpu_custom_call.1} parent=1 // pred_fallthru
      _
    // Predicated region
    $region42: #{tpu_custom_call.1} parent=1 // pred_check
      _
    $region43: #{tpu_custom_call.1} parent=1 // pred_check_branch
      %40 = sbr.rel (0) target = $region45
    $region44: #{tpu_custom_call.1} parent=1 // pred_region
      _
    $region45: #{tpu_custom_call.1} parent=1 // pred_fallthru
      _
    // Predicated region
    $region46: #{tpu_custom_call.1} parent=1 // pred_check
      _
    $region47: #{tpu_custom_call.1} parent=1 // pred_check_branch
      %42 = sbr.rel (0) target = $region49
    $region48: #{tpu_custom_call.1} parent=1 // pred_region
      _
    $region49: #{tpu_custom_call.1} parent=1 // pred_fallthru
      _
    // Predicated region
    $region50: #{tpu_custom_call.1} parent=1 // pred_check
      _
    $region51: #{tpu_custom_call.1} parent=1 // pred_check_branch
      %44 = sbr.rel (0) target = $region53
    $region52: #{tpu_custom_call.1} parent=1 // pred_region
      _
    $region53: #{tpu_custom_call.1} parent=1 // pred_fallthru
      _
    %v47 = vld [vmem:[%s0] sm:$0xff]
    %v48 = vld [vmem:[%s0 + $0x8] sm:$0xff]
    %v49 = vld [vmem:[%s0 + $0x10] sm:$0xff]
    %v50 = vld [vmem:[%s0 + $0x18] sm:$0xff]
    %v51 = vld [vmem:[%s1] sm:$0xf]
    %v52 = vld [vmem:[%s1 + $0x4] sm:$0xf]
    %v53 = vld [vmem:[%s1 + $0x8] sm:$0xf]
    %v54 = vld [vmem:[%s1 + $0xc] sm:$0xf]
    %v55 = vld [vmem:[%s1 + $0x10] sm:$0xf]
    %v56 = vld [vmem:[%s1 + $0x14] sm:$0xf]
    %v57 = vld [vmem:[%s1 + $0x18] sm:$0xf]
    %v58 = vld [vmem:[%s1 + $0x1c] sm:$0xf]
    %v59 = vld [vmem:[%s1 + $0x20] sm:$0xf]
    %v60 = vld [vmem:[%s1 + $0x24] sm:$0xf]
    %v61 = vld [vmem:[%s1 + $0x28] sm:$0xf]
    %v62 = vld [vmem:[%s1 + $0x2c] sm:$0xf]
    %v63 = vld [vmem:[%s1 + $0x30] sm:$0xf]
    %v64 = vld [vmem:[%s1 + $0x34] sm:$0xf]
    %v65 = vld [vmem:[%s1 + $0x38] sm:$0xf]
    %v66 = vld [vmem:[%s1 + $0x3c] sm:$0xf]
    %v67 = vld [vmem:[%s2] sm:$0xf]
    %v68 = vld [vmem:[%s2 + $0x4] sm:$0xf]
    %v69 = vld [vmem:[%s2 + $0x8] sm:$0xf]
    %v70 = vld [vmem:[%s2 + $0xc] sm:$0xf]
    %v71 = vld [vmem:[%s2 + $0x10] sm:$0xf]
    %v72 = vld [vmem:[%s2 + $0x14] sm:$0xf]
    %v73 = vld [vmem:[%s2 + $0x18] sm:$0xf]
    %v74 = vld [vmem:[%s2 + $0x1c] sm:$0xf]
    %v75 = vld [vmem:[%s3] sm:$0x1]
    %v76 = vld [vmem:[%s4] sm:$0xf]
    %v77 = vld [vmem:[%s4 + $0x4] sm:$0xf]
    %v78 = vld [vmem:[%s4 + $0x8] sm:$0xf]
    %v79 = vld [vmem:[%s4 + $0xc] sm:$0xf]
    %v80 = vld [vmem:[%s4 + $0x10] sm:$0xf]
    %v81 = vld [vmem:[%s4 + $0x14] sm:$0xf]
    %v82 = vld [vmem:[%s4 + $0x18] sm:$0xf]
    %v83 = vld [vmem:[%s4 + $0x1c] sm:$0xf]
    %v84 = vld [vmem:[%s4 + $0x20] sm:$0xf]
    %v85 = vld [vmem:[%s4 + $0x24] sm:$0xf]
    %v86 = vld [vmem:[%s4 + $0x28] sm:$0xf]
    %v87 = vld [vmem:[%s4 + $0x2c] sm:$0xf]
    %v88 = vld [vmem:[%s4 + $0x30] sm:$0xf]
    %v89 = vld [vmem:[%s4 + $0x34] sm:$0xf]
    %v90 = vld [vmem:[%s4 + $0x38] sm:$0xf]
    %v91 = vld [vmem:[%s4 + $0x3c] sm:$0xf]
    %v92 = vld [vmem:[%s5] sm:$0x1]
    %v93 = vld [vmem:[%s6] sm:$0x1]
    %v94 = vld [vmem:[%s7] sm:$0xf]
    %v95 = vld [vmem:[%s7 + $0x4] sm:$0xf]
    %v96 = vld [vmem:[%s7 + $0x8] sm:$0xf]
    %v97 = vld [vmem:[%s7 + $0xc] sm:$0xf]
    %v98 = vld [vmem:[%s7 + $0x10] sm:$0xf]
    %v99 = vld [vmem:[%s7 + $0x14] sm:$0xf]
    %v100 = vld [vmem:[%s7 + $0x18] sm:$0xf]
    %v101 = vld [vmem:[%s7 + $0x1c] sm:$0xf]
    %v102 = vld [vmem:[%s7 + $0x20] sm:$0xf]
    %v103 = vld [vmem:[%s7 + $0x24] sm:$0xf]
    %v104 = vld [vmem:[%s7 + $0x28] sm:$0xf]
    %v105 = vld [vmem:[%s7 + $0x2c] sm:$0xf]
    %v106 = vld [vmem:[%s7 + $0x30] sm:$0xf]
    %v107 = vld [vmem:[%s7 + $0x34] sm:$0xf]
    %v108 = vld [vmem:[%s7 + $0x38] sm:$0xf]
    %v109 = vld [vmem:[%s7 + $0x3c] sm:$0xf]
    %v110 = vld [vmem:[%s8] sm:$0x1]
    %v111 = vld [vmem:[%s9] sm:$0xf]
    %v112 = vld [vmem:[%s9 + $0x4] sm:$0xf]
    %v113 = vld [vmem:[%s9 + $0x8] sm:$0xf]
    %v114 = vld [vmem:[%s9 + $0xc] sm:$0xf]
    %v115 = vld [vmem:[%s9 + $0x10] sm:$0xf]
    %v116 = vld [vmem:[%s9 + $0x14] sm:$0xf]
    %v117 = vld [vmem:[%s9 + $0x18] sm:$0xf]
    %v118 = vld [vmem:[%s9 + $0x1c] sm:$0xf]
    %v119 = vld [vmem:[%s9 + $0x20] sm:$0xf]
    %v120 = vld [vmem:[%s9 + $0x24] sm:$0xf]
    %v121 = vld [vmem:[%s9 + $0x28] sm:$0xf]
    %v122 = vld [vmem:[%s9 + $0x2c] sm:$0xf]
    %v123 = vld [vmem:[%s9 + $0x30] sm:$0xf]
    %v124 = vld [vmem:[%s9 + $0x34] sm:$0xf]
    %v125 = vld [vmem:[%s9 + $0x38] sm:$0xf]
    %v126 = vld [vmem:[%s9 + $0x3c] sm:$0xf]
    %v127 = vld [vmem:[%s10] sm:$0x1]
    %v128 = vld [vmem:[%s11] sm:$0xf]
    %v129 = vld [vmem:[%s11 + $0x4] sm:$0xf]
    %v130 = vld [vmem:[%s11 + $0x8] sm:$0xf]
    %v131 = vld [vmem:[%s11 + $0xc] sm:$0xf]
    %v132 = vld [vmem:[%s11 + $0x10] sm:$0xf]
    %v133 = vld [vmem:[%s11 + $0x14] sm:$0xf]
    %v134 = vld [vmem:[%s11 + $0x18] sm:$0xf]
    %v135 = vld [vmem:[%s11 + $0x1c] sm:$0xf]
    %v136 = vld [vmem:[%s11 + $0x20] sm:$0xf]
    %v137 = vld [vmem:[%s11 + $0x24] sm:$0xf]
    %v138 = vld [vmem:[%s11 + $0x28] sm:$0xf]
    %v139 = vld [vmem:[%s11 + $0x2c] sm:$0xf]
    %v140 = vld [vmem:[%s11 + $0x30] sm:$0xf]
    %v141 = vld [vmem:[%s11 + $0x34] sm:$0xf]
    %v142 = vld [vmem:[%s11 + $0x38] sm:$0xf]
    %v143 = vld [vmem:[%s11 + $0x3c] sm:$0xf]
    %v144 = vld [vmem:[%s12] sm:$0x1]
    %v145 = vunpack.c.0.s8 %v47
    %v146 = vunpack.c.1.s8 %v47
    %v147 = vunpack.c.2.s8 %v47
    %v148 = vunpack.c.3.s8 %v47
    %v149 = vunpack.c.0.s8 %v48
    %v150 = vunpack.c.1.s8 %v48
    %v151 = vunpack.c.2.s8 %v48
    %v152 = vunpack.c.3.s8 %v48
    %v153 = vunpack.c.0.s8 %v49
    %v154 = vunpack.c.1.s8 %v49
    %v155 = vunpack.c.2.s8 %v49
    %v156 = vunpack.c.3.s8 %v49
    %v157 = vunpack.c.0.s8 %v50
    %v158 = vunpack.c.1.s8 %v50
    %v159 = vunpack.c.2.s8 %v50
    %v160 = vunpack.c.3.s8 %v50
    %v161 = vcvt.s32.f32 %v145
    %v162 = vcvt.s32.f32 %v146
    %v163 = vcvt.s32.f32 %v147
    %v164 = vcvt.s32.f32 %v148
    %v165 = vcvt.s32.f32 %v149
    %v166 = vcvt.s32.f32 %v150
    %v167 = vcvt.s32.f32 %v151
    %v168 = vcvt.s32.f32 %v152
    %v169 = vcvt.s32.f32 %v153
    %v170 = vcvt.s32.f32 %v154
    %v171 = vcvt.s32.f32 %v155
    %v172 = vcvt.s32.f32 %v156
    %v173 = vcvt.s32.f32 %v157
    %v174 = vcvt.s32.f32 %v158
    %v175 = vcvt.s32.f32 %v159
    %v176 = vcvt.s32.f32 %v160
    %v177 = vsub.f32 %v161, 1.0
    %v178 = vsub.f32 %v162, 1.0
    %v179 = vsub.f32 %v163, 1.0
    %v180 = vsub.f32 %v164, 1.0
    %v181 = vsub.f32 %v165, 1.0
    %v182 = vsub.f32 %v166, 1.0
    %v183 = vsub.f32 %v167, 1.0
    %v184 = vsub.f32 %v168, 1.0
    %v185 = vsub.f32 %v169, 1.0
    %v186 = vsub.f32 %v170, 1.0
    %v187 = vsub.f32 %v171, 1.0
    %v188 = vsub.f32 %v172, 1.0
    %v189 = vsub.f32 %v173, 1.0
    %v190 = vsub.f32 %v174, 1.0
    %v191 = vsub.f32 %v175, 1.0
    %v192 = vsub.f32 %v176, 1.0
    %v193 = vmul.f32 %v177, 1e+30
    %v194 = vmul.f32 %v178, 1e+30
    %v195 = vmul.f32 %v179, 1e+30
    %v196 = vmul.f32 %v180, 1e+30
    %v197 = vmul.f32 %v181, 1e+30
    %v198 = vmul.f32 %v182, 1e+30
    %v199 = vmul.f32 %v183, 1e+30
    %v200 = vmul.f32 %v184, 1e+30
    %v201 = vmul.f32 %v185, 1e+30
    %v202 = vmul.f32 %v186, 1e+30
    %v203 = vmul.f32 %v187, 1e+30
    %v204 = vmul.f32 %v188, 1e+30
    %v205 = vmul.f32 %v189, 1e+30
    %v206 = vmul.f32 %v190, 1e+30
    %v207 = vmul.f32 %v191, 1e+30
    %v208 = vmul.f32 %v192, 1e+30
    %v225 = vunpack.c.l.b16 %v51
    %v226 = vunpack.c.l.b16 %v52
    %v227 = vunpack.c.l.b16 %v53
    %v228 = vunpack.c.l.b16 %v54
    %v229 = vunpack.c.l.b16 %v55
    %v230 = vunpack.c.l.b16 %v56
    %v231 = vunpack.c.l.b16 %v57
    %v232 = vunpack.c.l.b16 %v58
    %v233 = vunpack.c.l.b16 %v59
    %v234 = vunpack.c.l.b16 %v60
    %v235 = vunpack.c.l.b16 %v61
    %v236 = vunpack.c.l.b16 %v62
    %v237 = vunpack.c.l.b16 %v63
    %v238 = vunpack.c.l.b16 %v64
    %v239 = vunpack.c.l.b16 %v65
    %v240 = vunpack.c.l.b16 %v66
    %v241 = vpack.c.b16 %v226, %v225
    %v242 = vpack.c.b16 %v228, %v227
    %v243 = vpack.c.b16 %v230, %v229
    %v244 = vpack.c.b16 %v232, %v231
    %v245 = vpack.c.b16 %v234, %v233
    %v246 = vpack.c.b16 %v236, %v235
    %v247 = vpack.c.b16 %v238, %v237
    %v248 = vpack.c.b16 %v240, %v239
    %v257 = vunpack.c.l.b16 %v67
    %v258 = vunpack.c.l.b16 %v68
    %v259 = vunpack.c.l.b16 %v69
    %v260 = vunpack.c.l.b16 %v70
    %v261 = vunpack.c.l.b16 %v71
    %v262 = vunpack.c.l.b16 %v72
    %v263 = vunpack.c.l.b16 %v73
    %v264 = vunpack.c.l.b16 %v74
    %v265 = vpack.c.b16 %v258, %v257
    %v266 = vpack.c.b16 %v260, %v259
    %v267 = vpack.c.b16 %v262, %v261
    %v268 = vpack.c.b16 %v264, %v263
    %vm273 = vcmask 523264
    %v275 = vsel %vm273, %v241, 0
    %v278 = vsel %vm273, %v242, 0
    %v281 = vsel %vm273, %v243, 0
    %v284 = vsel %vm273, %v244, 0
    %v287 = vsel %vm273, %v245, 0
    %v290 = vsel %vm273, %v246, 0
    %v293 = vsel %vm273, %v247, 0
    %v296 = vsel %vm273, %v248, 0
    %298 = vmatprep.subr.bf16.mxu0 0
    %299 = vmatpush1.bf16.msra.mxu0 %v265
    %300 = vmatprep.subr.bf16.mxu0 0
    %301 = vmatpush1.bf16.msra.mxu0 %v266
    %302 = vmatprep.subr.bf16.mxu0 0
    %303 = vmatpush1.bf16.msra.mxu0 %v267
    %304 = vmatprep.subr.bf16.mxu0 0
    %305 = vmatpush1.bf16.msra.mxu0 %v268
    %306 = vmatprep.subr.bf16.mxu0 0
    %307 = vmatpush1.bf16.msra.mxu0 0
    %308 = vmatprep.subr.bf16.mxu0 0
    %309 = vmatpush1.bf16.msra.mxu0 0
    %310 = vmatprep.subr.bf16.mxu0 0
    %311 = vmatpush1.bf16.msra.mxu0 0
    %312 = vmatprep.subr.bf16.mxu0 0
    %313 = vmatpush1.bf16.msra.mxu0 0
    %314 = vmatprep.subr.bf16.mxu0 0
    %315 = vmatpush1.bf16.msra.mxu0 0
    %316 = vmatprep.subr.bf16.mxu0 0
    %317 = vmatpush1.bf16.msra.mxu0 0
    %318 = vmatprep.subr.bf16.mxu0 0
    %319 = vmatpush1.bf16.msra.mxu0 0
    %320 = vmatprep.subr.bf16.mxu0 0
    %321 = vmatpush1.bf16.msra.mxu0 0
    %322 = vmatprep.subr.bf16.mxu0 0
    %323 = vmatpush1.bf16.msra.mxu0 0
    %324 = vmatprep.subr.bf16.mxu0 0
    %325 = vmatpush1.bf16.msra.mxu0 0
    %326 = vmatprep.subr.bf16.mxu0 0
    %327 = vmatpush1.bf16.msra.mxu0 0
    %328 = vmatprep.subr.bf16.mxu0 0
    %329 = vmatpush1.bf16.msra.mxu0 0
    %330 = vmatprep.mubr.bf16.mxu0 0
    %331 = vmatmul.mubr.bf16.gmra.mrb[0].mxu0 %v275
    %v332 = vpop.f32.mrb[0].mxu0
    %v333 = vadd.f32 0.0, %v332
    %v334 = vpop.f32.mrb[0].mxu0
    %v335 = vpop.f32.mrb[0].mxu0
    %v336 = vadd.f32 0.0, %v335
    %v337 = vpop.f32.mrb[0].mxu0
    %338 = vmatprep.mubr.bf16.mxu0 0
    %339 = vmatmul.mubr.bf16.gmra.mrb[0].mxu0 %v278
    %v340 = vpop.f32.mrb[0].mxu0
    %v341 = vadd.f32 0.0, %v340
    %v342 = vpop.f32.mrb[0].mxu0
    %v343 = vpop.f32.mrb[0].mxu0
    %v344 = vadd.f32 0.0, %v343
    %v345 = vpop.f32.mrb[0].mxu0
    %346 = vmatprep.mubr.bf16.mxu0 0
    %347 = vmatmul.mubr.bf16.gmra.mrb[0].mxu0 %v281
    %v348 = vpop.f32.mrb[0].mxu0
    %v349 = vadd.f32 0.0, %v348
    %v350 = vpop.f32.mrb[0].mxu0
    %v351 = vpop.f32.mrb[0].mxu0
    %v352 = vadd.f32 0.0, %v351
    %v353 = vpop.f32.mrb[0].mxu0
    %354 = vmatprep.mubr.bf16.mxu0 0
    %355 = vmatmul.mubr.bf16.gmra.mrb[0].mxu0 %v284
    %v356 = vpop.f32.mrb[0].mxu0
    %v357 = vadd.f32 0.0, %v356
    %v358 = vpop.f32.mrb[0].mxu0
    %v359 = vpop.f32.mrb[0].mxu0
    %v360 = vadd.f32 0.0, %v359
    %v361 = vpop.f32.mrb[0].mxu0
    %362 = vmatprep.mubr.bf16.mxu0 0
    %363 = vmatmul.mubr.bf16.gmra.mrb[0].mxu0 %v287
    %v364 = vpop.f32.mrb[0].mxu0
    %v365 = vadd.f32 0.0, %v364
    %v366 = vpop.f32.mrb[0].mxu0
    %v367 = vpop.f32.mrb[0].mxu0
    %v368 = vadd.f32 0.0, %v367
    %v369 = vpop.f32.mrb[0].mxu0
    %370 = vmatprep.mubr.bf16.mxu0 0
    %371 = vmatmul.mubr.bf16.gmra.mrb[0].mxu0 %v290
    %v372 = vpop.f32.mrb[0].mxu0
    %v373 = vadd.f32 0.0, %v372
    %v374 = vpop.f32.mrb[0].mxu0
    %v375 = vpop.f32.mrb[0].mxu0
    %v376 = vadd.f32 0.0, %v375
    %v377 = vpop.f32.mrb[0].mxu0
    %378 = vmatprep.mubr.bf16.mxu0 0
    %379 = vmatmul.mubr.bf16.gmra.mrb[0].mxu0 %v293
    %v380 = vpop.f32.mrb[0].mxu0
    %v381 = vadd.f32 0.0, %v380
    %v382 = vpop.f32.mrb[0].mxu0
    %v383 = vpop.f32.mrb[0].mxu0
    %v384 = vadd.f32 0.0, %v383
    %v385 = vpop.f32.mrb[0].mxu0
    %386 = vmatprep.mubr.bf16.mxu0 0
    %387 = vmatmul.mubr.bf16.gmra.mrb[0].mxu0 %v296
    %v388 = vpop.f32.mrb[0].mxu0
    %v389 = vadd.f32 0.0, %v388
    %v390 = vpop.f32.mrb[0].mxu0
    %v391 = vpop.f32.mrb[0].mxu0
    %v392 = vadd.f32 0.0, %v391
    %v393 = vpop.f32.mrb[0].mxu0
    %394 = vdwg.mxu0
    %v395 = vpack.c.bf16 %v336, %v333
    %v396 = vpack.c.bf16 %v344, %v341
    %v397 = vpack.c.bf16 %v352, %v349
    %v398 = vpack.c.bf16 %v360, %v357
    %v399 = vpack.c.bf16 %v368, %v365
    %v400 = vpack.c.bf16 %v376, %v373
    %v401 = vpack.c.bf16 %v384, %v381
    %v402 = vpack.c.bf16 %v392, %v389
    %v419 = vunpack.c.l.b16 %v76
    %v420 = vunpack.c.l.b16 %v77
    %v421 = vunpack.c.l.b16 %v78
    %v422 = vunpack.c.l.b16 %v79
    %v423 = vunpack.c.l.b16 %v80
    %v424 = vunpack.c.l.b16 %v81
    %v425 = vunpack.c.l.b16 %v82
    %v426 = vunpack.c.l.b16 %v83
    %v427 = vunpack.c.l.b16 %v84
    %v428 = vunpack.c.l.b16 %v85
    %v429 = vunpack.c.l.b16 %v86
    %v430 = vunpack.c.l.b16 %v87
    %v431 = vunpack.c.l.b16 %v88
    %v432 = vunpack.c.l.b16 %v89
    %v433 = vunpack.c.l.b16 %v90
    %v434 = vunpack.c.l.b16 %v91
    %v435 = vpack.c.b16 %v420, %v419
    %v436 = vpack.c.b16 %v422, %v421
    %v437 = vpack.c.b16 %v424, %v423
    %v438 = vpack.c.b16 %v426, %v425
    %v439 = vpack.c.b16 %v428, %v427
    %v440 = vpack.c.b16 %v430, %v429
    %v441 = vpack.c.b16 %v432, %v431
    %v442 = vpack.c.b16 %v434, %v433
    %451 = vmatprep.subr.bf16.mxu0 0
    %452 = vmatpush1.bf16.msra.mxu0 %v435
    %453 = vmatprep.subr.bf16.mxu0 0
    %454 = vmatpush1.bf16.msra.mxu0 %v436
    %455 = vmatprep.subr.bf16.mxu0 0
    %456 = vmatpush1.bf16.msra.mxu0 %v437
    %457 = vmatprep.subr.bf16.mxu0 0
    %458 = vmatpush1.bf16.msra.mxu0 %v438
    %459 = vmatprep.subr.bf16.mxu0 0
    %460 = vmatpush1.bf16.msra.mxu0 %v439
    %461 = vmatprep.subr.bf16.mxu0 0
    %462 = vmatpush1.bf16.msra.mxu0 %v440
    %463 = vmatprep.subr.bf16.mxu0 0
    %464 = vmatpush1.bf16.msra.mxu0 %v441
    %465 = vmatprep.subr.bf16.mxu0 0
    %466 = vmatpush1.bf16.msra.mxu0 %v442
    %467 = vmatprep.subr.bf16.mxu0 0
    %468 = vmatpush1.bf16.msra.mxu0 0
    %469 = vmatprep.subr.bf16.mxu0 0
    %470 = vmatpush1.bf16.msra.mxu0 0
    %471 = vmatprep.subr.bf16.mxu0 0
    %472 = vmatpush1.bf16.msra.mxu0 0
    %473 = vmatprep.subr.bf16.mxu0 0
    %474 = vmatpush1.bf16.msra.mxu0 0
    %475 = vmatprep.subr.bf16.mxu0 0
    %476 = vmatpush1.bf16.msra.mxu0 0
    %477 = vmatprep.subr.bf16.mxu0 0
    %478 = vmatpush1.bf16.msra.mxu0 0
    %479 = vmatprep.subr.bf16.mxu0 0
    %480 = vmatpush1.bf16.msra.mxu0 0
    %481 = vmatprep.subr.bf16.mxu0 0
    %482 = vmatpush1.bf16.msra.mxu0 0
    %483 = vmatprep.mubr.bf16.mxu0 0
    %484 = vmatmul.mubr.bf16.gmra.mrb[0].mxu0 %v395
    %v485 = vpop.f32.mrb[0].mxu0
    %v486 = vadd.f32 0.0, %v485
    %v487 = vpop.f32.mrb[0].mxu0
    %v488 = vpop.f32.mrb[0].mxu0
    %v489 = vadd.f32 0.0, %v488
    %v490 = vpop.f32.mrb[0].mxu0
    %491 = vmatprep.mubr.bf16.mxu0 0
    %492 = vmatmul.mubr.bf16.gmra.mrb[0].mxu0 %v396
    %v493 = vpop.f32.mrb[0].mxu0
    %v494 = vadd.f32 0.0, %v493
    %v495 = vpop.f32.mrb[0].mxu0
    %v496 = vpop.f32.mrb[0].mxu0
    %v497 = vadd.f32 0.0, %v496
    %v498 = vpop.f32.mrb[0].mxu0
    %499 = vmatprep.mubr.bf16.mxu0 0
    %500 = vmatmul.mubr.bf16.gmra.mrb[0].mxu0 %v397
    %v501 = vpop.f32.mrb[0].mxu0
    %v502 = vadd.f32 0.0, %v501
    %v503 = vpop.f32.mrb[0].mxu0
    %v504 = vpop.f32.mrb[0].mxu0
    %v505 = vadd.f32 0.0, %v504
    %v506 = vpop.f32.mrb[0].mxu0
    %507 = vmatprep.mubr.bf16.mxu0 0
    %508 = vmatmul.mubr.bf16.gmra.mrb[0].mxu0 %v398
    %v509 = vpop.f32.mrb[0].mxu0
    %v510 = vadd.f32 0.0, %v509
    %v511 = vpop.f32.mrb[0].mxu0
    %v512 = vpop.f32.mrb[0].mxu0
    %v513 = vadd.f32 0.0, %v512
    %v514 = vpop.f32.mrb[0].mxu0
    %515 = vmatprep.mubr.bf16.mxu0 0
    %516 = vmatmul.mubr.bf16.gmra.mrb[0].mxu0 %v399
    %v517 = vpop.f32.mrb[0].mxu0
    %v518 = vadd.f32 0.0, %v517
    %v519 = vpop.f32.mrb[0].mxu0
    %v520 = vpop.f32.mrb[0].mxu0
    %v521 = vadd.f32 0.0, %v520
    %v522 = vpop.f32.mrb[0].mxu0
    %523 = vmatprep.mubr.bf16.mxu0 0
    %524 = vmatmul.mubr.bf16.gmra.mrb[0].mxu0 %v400
    %v525 = vpop.f32.mrb[0].mxu0
    %v526 = vadd.f32 0.0, %v525
    %v527 = vpop.f32.mrb[0].mxu0
    %v528 = vpop.f32.mrb[0].mxu0
    %v529 = vadd.f32 0.0, %v528
    %v530 = vpop.f32.mrb[0].mxu0
    %531 = vmatprep.mubr.bf16.mxu0 0
    %532 = vmatmul.mubr.bf16.gmra.mrb[0].mxu0 %v401
    %v533 = vpop.f32.mrb[0].mxu0
    %v534 = vadd.f32 0.0, %v533
    %v535 = vpop.f32.mrb[0].mxu0
    %v536 = vpop.f32.mrb[0].mxu0
    %v537 = vadd.f32 0.0, %v536
    %v538 = vpop.f32.mrb[0].mxu0
    %539 = vmatprep.mubr.bf16.mxu0 0
    %540 = vmatmul.mubr.bf16.gmra.mrb[0].mxu0 %v402
    %v541 = vpop.f32.mrb[0].mxu0
    %v542 = vadd.f32 0.0, %v541
    %v543 = vpop.f32.mrb[0].mxu0
    %v544 = vpop.f32.mrb[0].mxu0
    %v545 = vadd.f32 0.0, %v544
    %v546 = vpop.f32.mrb[0].mxu0
    %547 = vdwg.mxu0
    %548 = vmatprep.subr.bf16.mxu0 0
    %549 = vmatpush1.bf16.xpose.msra.mxu0 %v395
    %550 = vmatprep.subr.bf16.mxu0 0
    %551 = vmatpush1.bf16.xpose.msra.mxu0 %v396
    %552 = vmatprep.subr.bf16.mxu0 0
    %553 = vmatpush1.bf16.xpose.msra.mxu0 %v397
    %554 = vmatprep.subr.bf16.mxu0 0
    %555 = vmatpush1.bf16.xpose.msra.mxu0 %v398
    %556 = vmatprep.subr.bf16.mxu0 0
    %557 = vmatpush1.bf16.xpose.msra.mxu0 %v399
    %558 = vmatprep.subr.bf16.mxu0 0
    %559 = vmatpush1.bf16.xpose.msra.mxu0 %v400
    %560 = vmatprep.subr.bf16.mxu0 0
    %561 = vmatpush1.bf16.xpose.msra.mxu0 %v401
    %562 = vmatprep.subr.bf16.mxu0 0
    %563 = vmatpush1.bf16.xpose.msra.mxu0 %v402
    %564 = vmatprep.subr.bf16.mxu0 0
    %565 = vmatpush1.bf16.xpose.msra.mxu0 0
    %566 = vmatprep.subr.bf16.mxu0 0
    %567 = vmatpush1.bf16.xpose.msra.mxu0 0
    %568 = vmatprep.subr.bf16.mxu0 0
    %569 = vmatpush1.bf16.xpose.msra.mxu0 0
    %570 = vmatprep.subr.bf16.mxu0 0
    %571 = vmatpush1.bf16.xpose.msra.mxu0 0
    %572 = vmatprep.subr.bf16.mxu0 0
    %573 = vmatpush1.bf16.xpose.msra.mxu0 0
    %574 = vmatprep.subr.bf16.mxu0 0
    %575 = vmatpush1.bf16.xpose.msra.mxu0 0
    %576 = vmatprep.subr.bf16.mxu0 0
    %577 = vmatpush1.bf16.xpose.msra.mxu0 0
    %578 = vmatprep.subr.bf16.mxu0 0
    %579 = vmatpush1.bf16.xpose.msra.mxu0 0
    %580 = vmatprep.mubr.bf16.mxu0 0
    %581 = vmatmul.mubr.bf16.gmra.mrb[0].mxu0 %v75
    %v582 = vpop.f32.mrb[0].mxu0
    %v583 = vadd.f32 0.0, %v582
    %v584 = vpop.f32.mrb[0].mxu0
    %v585 = vpop.f32.mrb[0].mxu0
    %v586 = vpop.f32.mrb[0].mxu0
    %587 = vdwg.mxu0
    %589 = vset.pattern.permute.xlu0 0
    %590 = vperm.xlu0 %589, %v486
    %v591 = vpop.permute.xlu0 %590
    %594 = vset.pattern.permute.xlu0 0
    %595 = vperm.xlu0 %594, %v489
    %v596 = vpop.permute.xlu0 %595
    %599 = vset.pattern.permute.xlu0 0
    %600 = vperm.xlu0 %599, %v494
    %v601 = vpop.permute.xlu0 %600
    %604 = vset.pattern.permute.xlu0 0
    %605 = vperm.xlu0 %604, %v497
    %v606 = vpop.permute.xlu0 %605
    %609 = vset.pattern.permute.xlu0 0
    %610 = vperm.xlu0 %609, %v502
    %v611 = vpop.permute.xlu0 %610
    %614 = vset.pattern.permute.xlu0 0
    %615 = vperm.xlu0 %614, %v505
    %v616 = vpop.permute.xlu0 %615
    %619 = vset.pattern.permute.xlu0 0
    %620 = vperm.xlu0 %619, %v510
    %v621 = vpop.permute.xlu0 %620
    %624 = vset.pattern.permute.xlu0 0
    %625 = vperm.xlu0 %624, %v513
    %v626 = vpop.permute.xlu0 %625
    %629 = vset.pattern.permute.xlu0 0
    %630 = vperm.xlu0 %629, %v518
    %v631 = vpop.permute.xlu0 %630
    %634 = vset.pattern.permute.xlu0 0
    %635 = vperm.xlu0 %634, %v521
    %v636 = vpop.permute.xlu0 %635
    %639 = vset.pattern.permute.xlu0 0
    %640 = vperm.xlu0 %639, %v526
    %v641 = vpop.permute.xlu0 %640
    %644 = vset.pattern.permute.xlu0 0
    %645 = vperm.xlu0 %644, %v529
    %v646 = vpop.permute.xlu0 %645
    %649 = vset.pattern.permute.xlu0 0
    %650 = vperm.xlu0 %649, %v534
    %v651 = vpop.permute.xlu0 %650
    %654 = vset.pattern.permute.xlu0 0
    %655 = vperm.xlu0 %654, %v537
    %v656 = vpop.permute.xlu0 %655
    %659 = vset.pattern.permute.xlu0 0
    %660 = vperm.xlu0 %659, %v542
    %v661 = vpop.permute.xlu0 %660
    %664 = vset.pattern.permute.xlu0 0
    %665 = vperm.xlu0 %664, %v545
    %v666 = vpop.permute.xlu0 %665
    %v668 = vlaneseq
    %v669 = vshrl.u32 %v668, 7
    %v670 = vsub.s32 0, %v669
    %v671 = vrot.slane %v583, %v670
    %v672 = vadd.f32 %v591, %v671
    %v673 = vadd.f32 %v596, %v671
    %v674 = vadd.f32 %v601, %v671
    %v675 = vadd.f32 %v606, %v671
    %v676 = vadd.f32 %v611, %v671
    %v677 = vadd.f32 %v616, %v671
    %v678 = vadd.f32 %v621, %v671
    %v679 = vadd.f32 %v626, %v671
    %v680 = vadd.f32 %v631, %v671
    %v681 = vadd.f32 %v636, %v671
    %v682 = vadd.f32 %v641, %v671
    %v683 = vadd.f32 %v646, %v671
    %v684 = vadd.f32 %v651, %v671
    %v685 = vadd.f32 %v656, %v671
    %v686 = vadd.f32 %v661, %v671
    %v687 = vadd.f32 %v666, %v671
    %v688 = vmul.f32 %v672, 0.2
    %v689 = vmul.f32 %v673, 0.2
    %v690 = vmul.f32 %v674, 0.2
    %v691 = vmul.f32 %v675, 0.2
    %v692 = vmul.f32 %v676, 0.2
    %v693 = vmul.f32 %v677, 0.2
    %v694 = vmul.f32 %v678, 0.2
    %v695 = vmul.f32 %v679, 0.2
    %v696 = vmul.f32 %v680, 0.2
    %v697 = vmul.f32 %v681, 0.2
    %v698 = vmul.f32 %v682, 0.2
    %v699 = vmul.f32 %v683, 0.2
    %v700 = vmul.f32 %v684, 0.2
    %v701 = vmul.f32 %v685, 0.2
    %v702 = vmul.f32 %v686, 0.2
    %v703 = vmul.f32 %v687, 0.2
    %v704 = vmax.f32 %v672, %v688
    %v705 = vmax.f32 %v673, %v689
    %v706 = vmax.f32 %v674, %v690
    %v707 = vmax.f32 %v675, %v691
    %v708 = vmax.f32 %v676, %v692
    %v709 = vmax.f32 %v677, %v693
    %v710 = vmax.f32 %v678, %v694
    %v711 = vmax.f32 %v679, %v695
    %v712 = vmax.f32 %v680, %v696
    %v713 = vmax.f32 %v681, %v697
    %v714 = vmax.f32 %v682, %v698
    %v715 = vmax.f32 %v683, %v699
    %v716 = vmax.f32 %v684, %v700
    %v717 = vmax.f32 %v685, %v701
    %v718 = vmax.f32 %v686, %v702
    %v719 = vmax.f32 %v687, %v703
    %v720 = vadd.f32 %v704, %v193
    %v721 = vadd.f32 %v705, %v194
    %v722 = vadd.f32 %v706, %v195
    %v723 = vadd.f32 %v707, %v196
    %v724 = vadd.f32 %v708, %v197
    %v725 = vadd.f32 %v709, %v198
    %v726 = vadd.f32 %v710, %v199
    %v727 = vadd.f32 %v711, %v200
    %v728 = vadd.f32 %v712, %v201
    %v729 = vadd.f32 %v713, %v202
    %v730 = vadd.f32 %v714, %v203
    %v731 = vadd.f32 %v715, %v204
    %v732 = vadd.f32 %v716, %v205
    %v733 = vadd.f32 %v717, %v206
    %v734 = vadd.f32 %v718, %v207
    %v735 = vadd.f32 %v719, %v208
    %736 = vmax.xlane.f32.xlu0 %v720
    %v737 = vpop.xlane.xlu0 %736
    %738 = vmax.xlane.f32.xlu0 %v721
    %v739 = vpop.xlane.xlu0 %738
    %740 = vmax.xlane.f32.xlu0 %v722
    %v741 = vpop.xlane.xlu0 %740
    %742 = vmax.xlane.f32.xlu0 %v723
    %v743 = vpop.xlane.xlu0 %742
    %744 = vmax.xlane.f32.xlu0 %v724
    %v745 = vpop.xlane.xlu0 %744
    %746 = vmax.xlane.f32.xlu0 %v725
    %v747 = vpop.xlane.xlu0 %746
    %748 = vmax.xlane.f32.xlu0 %v726
    %v749 = vpop.xlane.xlu0 %748
    %750 = vmax.xlane.f32.xlu0 %v727
    %v751 = vpop.xlane.xlu0 %750
    %752 = vmax.xlane.f32.xlu0 %v728
    %v753 = vpop.xlane.xlu0 %752
    %754 = vmax.xlane.f32.xlu0 %v729
    %v755 = vpop.xlane.xlu0 %754
    %756 = vmax.xlane.f32.xlu0 %v730
    %v757 = vpop.xlane.xlu0 %756
    %758 = vmax.xlane.f32.xlu0 %v731
    %v759 = vpop.xlane.xlu0 %758
    %760 = vmax.xlane.f32.xlu0 %v732
    %v761 = vpop.xlane.xlu0 %760
    %762 = vmax.xlane.f32.xlu0 %v733
    %v763 = vpop.xlane.xlu0 %762
    %764 = vmax.xlane.f32.xlu0 %v734
    %v765 = vpop.xlane.xlu0 %764
    %766 = vmax.xlane.f32.xlu0 %v735
    %v767 = vpop.xlane.xlu0 %766
    %v768 = vsub.f32 %v720, %v737
    %v769 = vsub.f32 %v721, %v739
    %v770 = vsub.f32 %v722, %v741
    %v771 = vsub.f32 %v723, %v743
    %v772 = vsub.f32 %v724, %v745
    %v773 = vsub.f32 %v725, %v747
    %v774 = vsub.f32 %v726, %v749
    %v775 = vsub.f32 %v727, %v751
    %v776 = vsub.f32 %v728, %v753
    %v777 = vsub.f32 %v729, %v755
    %v778 = vsub.f32 %v730, %v757
    %v779 = vsub.f32 %v731, %v759
    %v780 = vsub.f32 %v732, %v761
    %v781 = vsub.f32 %v733, %v763
    %v782 = vsub.f32 %v734, %v765
    %v783 = vsub.f32 %v735, %v767
    %v784 = vmul.f32 %v768, 1.442695
    %v785 = vpow.pop %v784
    %v786 = vmul.f32 %v769, 1.442695
    %v787 = vpow.pop %v786
    %v788 = vmul.f32 %v770, 1.442695
    %v789 = vpow.pop %v788
    %v790 = vmul.f32 %v771, 1.442695
    %v791 = vpow.pop %v790
    %v792 = vmul.f32 %v772, 1.442695
    %v793 = vpow.pop %v792
    %v794 = vmul.f32 %v773, 1.442695
    %v795 = vpow.pop %v794
    %v796 = vmul.f32 %v774, 1.442695
    %v797 = vpow.pop %v796
    %v798 = vmul.f32 %v775, 1.442695
    %v799 = vpow.pop %v798
    %v800 = vmul.f32 %v776, 1.442695
    %v801 = vpow.pop %v800
    %v802 = vmul.f32 %v777, 1.442695
    %v803 = vpow.pop %v802
    %v804 = vmul.f32 %v778, 1.442695
    %v805 = vpow.pop %v804
    %v806 = vmul.f32 %v779, 1.442695
    %v807 = vpow.pop %v806
    %v808 = vmul.f32 %v780, 1.442695
    %v809 = vpow.pop %v808
    %v810 = vmul.f32 %v781, 1.442695
    %v811 = vpow.pop %v810
    %v812 = vmul.f32 %v782, 1.442695
    %v813 = vpow.pop %v812
    %v814 = vmul.f32 %v783, 1.442695
    %v815 = vpow.pop %v814
    %v816 = vpack.c.bf16 %v787, %v785
    %v817 = vpack.c.bf16 %v791, %v789
    %v818 = vpack.c.bf16 %v795, %v793
    %v819 = vpack.c.bf16 %v799, %v797
    %v820 = vpack.c.bf16 %v803, %v801
    %v821 = vpack.c.bf16 %v807, %v805
    %v822 = vpack.c.bf16 %v811, %v809
    %v823 = vpack.c.bf16 %v815, %v813
    %v826 = vsel %vm273, %v395, 1065369472
    %v829 = vsel %vm273, %v396, 1065369472
    %v832 = vsel %vm273, %v397, 1065369472
    %v835 = vsel %vm273, %v398, 1065369472
    %v838 = vsel %vm273, %v399, 1065369472
    %v841 = vsel %vm273, %v400, 1065369472
    %v844 = vsel %vm273, %v401, 1065369472
    %v847 = vsel %vm273, %v402, 1065369472
    %849 = vmatprep.subr.bf16.mxu0 0
    %850 = vmatpush1.bf16.msra.mxu0 %v826
    %851 = vmatprep.subr.bf16.mxu0 0
    %852 = vmatpush1.bf16.msra.mxu0 %v829
    %853 = vmatprep.subr.bf16.mxu0 0
    %854 = vmatpush1.bf16.msra.mxu0 %v832
    %855 = vmatprep.subr.bf16.mxu0 0
    %856 = vmatpush1.bf16.msra.mxu0 %v835
    %857 = vmatprep.subr.bf16.mxu0 0
    %858 = vmatpush1.bf16.msra.mxu0 %v838
    %859 = vmatprep.subr.bf16.mxu0 0
    %860 = vmatpush1.bf16.msra.mxu0 %v841
    %861 = vmatprep.subr.bf16.mxu0 0
    %862 = vmatpush1.bf16.msra.mxu0 %v844
    %863 = vmatprep.subr.bf16.mxu0 0
    %864 = vmatpush1.bf16.msra.mxu0 %v847
    %865 = vmatprep.subr.bf16.mxu0 0
    %866 = vmatpush1.bf16.msra.mxu0 0
    %867 = vmatprep.subr.bf16.mxu0 0
    %868 = vmatpush1.bf16.msra.mxu0 0
    %869 = vmatprep.subr.bf16.mxu0 0
    %870 = vmatpush1.bf16.msra.mxu0 0
    %871 = vmatprep.subr.bf16.mxu0 0
    %872 = vmatpush1.bf16.msra.mxu0 0
    %873 = vmatprep.subr.bf16.mxu0 0
    %874 = vmatpush1.bf16.msra.mxu0 0
    %875 = vmatprep.subr.bf16.mxu0 0
    %876 = vmatpush1.bf16.msra.mxu0 0
    %877 = vmatprep.subr.bf16.mxu0 0
    %878 = vmatpush1.bf16.msra.mxu0 0
    %879 = vmatprep.subr.bf16.mxu0 0
    %880 = vmatpush1.bf16.msra.mxu0 0
    %881 = vmatprep.mubr.bf16.mxu0 0
    %882 = vmatmul.mubr.bf16.gmra.mrb[0].mxu0 %v816
    %v883 = vpop.f32.mrb[0].mxu0
    %v884 = vadd.f32 0.0, %v883
    %v885 = vpop.f32.mrb[0].mxu0
    %v886 = vpop.f32.mrb[0].mxu0
    %v887 = vadd.f32 0.0, %v886
    %v888 = vpop.f32.mrb[0].mxu0
    %889 = vmatprep.mubr.bf16.mxu0 0
    %890 = vmatmul.mubr.bf16.gmra.mrb[0].mxu0 %v817
    %v891 = vpop.f32.mrb[0].mxu0
    %v892 = vadd.f32 0.0, %v891
    %v893 = vpop.f32.mrb[0].mxu0
    %v894 = vpop.f32.mrb[0].mxu0
    %v895 = vadd.f32 0.0, %v894
    %v896 = vpop.f32.mrb[0].mxu0
    %897 = vmatprep.mubr.bf16.mxu0 0
    %898 = vmatmul.mubr.bf16.gmra.mrb[0].mxu0 %v818
    %v899 = vpop.f32.mrb[0].mxu0
    %v900 = vadd.f32 0.0, %v899
    %v901 = vpop.f32.mrb[0].mxu0
    %v902 = vpop.f32.mrb[0].mxu0
    %v903 = vadd.f32 0.0, %v902
    %v904 = vpop.f32.mrb[0].mxu0
    %905 = vmatprep.mubr.bf16.mxu0 0
    %906 = vmatmul.mubr.bf16.gmra.mrb[0].mxu0 %v819
    %v907 = vpop.f32.mrb[0].mxu0
    %v908 = vadd.f32 0.0, %v907
    %v909 = vpop.f32.mrb[0].mxu0
    %v910 = vpop.f32.mrb[0].mxu0
    %v911 = vadd.f32 0.0, %v910
    %v912 = vpop.f32.mrb[0].mxu0
    %913 = vmatprep.mubr.bf16.mxu0 0
    %914 = vmatmul.mubr.bf16.gmra.mrb[0].mxu0 %v820
    %v915 = vpop.f32.mrb[0].mxu0
    %v916 = vadd.f32 0.0, %v915
    %v917 = vpop.f32.mrb[0].mxu0
    %v918 = vpop.f32.mrb[0].mxu0
    %v919 = vadd.f32 0.0, %v918
    %v920 = vpop.f32.mrb[0].mxu0
    %921 = vmatprep.mubr.bf16.mxu0 0
    %922 = vmatmul.mubr.bf16.gmra.mrb[0].mxu0 %v821
    %v923 = vpop.f32.mrb[0].mxu0
    %v924 = vadd.f32 0.0, %v923
    %v925 = vpop.f32.mrb[0].mxu0
    %v926 = vpop.f32.mrb[0].mxu0
    %v927 = vadd.f32 0.0, %v926
    %v928 = vpop.f32.mrb[0].mxu0
    %929 = vmatprep.mubr.bf16.mxu0 0
    %930 = vmatmul.mubr.bf16.gmra.mrb[0].mxu0 %v822
    %v931 = vpop.f32.mrb[0].mxu0
    %v932 = vadd.f32 0.0, %v931
    %v933 = vpop.f32.mrb[0].mxu0
    %v934 = vpop.f32.mrb[0].mxu0
    %v935 = vadd.f32 0.0, %v934
    %v936 = vpop.f32.mrb[0].mxu0
    %937 = vmatprep.mubr.bf16.mxu0 0
    %938 = vmatmul.mubr.bf16.gmra.mrb[0].mxu0 %v823
    %v939 = vpop.f32.mrb[0].mxu0
    %v940 = vadd.f32 0.0, %v939
    %v941 = vpop.f32.mrb[0].mxu0
    %v942 = vpop.f32.mrb[0].mxu0
    %v943 = vadd.f32 0.0, %v942
    %v944 = vpop.f32.mrb[0].mxu0
    %945 = vdwg.mxu0
    %v946 = vrcp.pop %v884
    %v947 = vrcp.pop %v887
    %v948 = vrcp.pop %v892
    %v949 = vrcp.pop %v895
    %v950 = vrcp.pop %v900
    %v951 = vrcp.pop %v903
    %v952 = vrcp.pop %v908
    %v953 = vrcp.pop %v911
    %v954 = vrcp.pop %v916
    %v955 = vrcp.pop %v919
    %v956 = vrcp.pop %v924
    %v957 = vrcp.pop %v927
    %v958 = vrcp.pop %v932
    %v959 = vrcp.pop %v935
    %v960 = vrcp.pop %v940
    %v961 = vrcp.pop %v943
    %v962 = vmul.f32 %v884, %v946
    %v963 = vmul.f32 %v887, %v947
    %v964 = vmul.f32 %v892, %v948
    %v965 = vmul.f32 %v895, %v949
    %v966 = vmul.f32 %v900, %v950
    %v967 = vmul.f32 %v903, %v951
    %v968 = vmul.f32 %v908, %v952
    %v969 = vmul.f32 %v911, %v953
    %v970 = vmul.f32 %v916, %v954
    %v971 = vmul.f32 %v919, %v955
    %v972 = vmul.f32 %v924, %v956
    %v973 = vmul.f32 %v927, %v957
    %v974 = vmul.f32 %v932, %v958
    %v975 = vmul.f32 %v935, %v959
    %v976 = vmul.f32 %v940, %v960
    %v977 = vmul.f32 %v943, %v961
    %v978 = vsub.f32 2.0, %v962
    %v979 = vsub.f32 2.0, %v963
    %v980 = vsub.f32 2.0, %v964
    %v981 = vsub.f32 2.0, %v965
    %v982 = vsub.f32 2.0, %v966
    %v983 = vsub.f32 2.0, %v967
    %v984 = vsub.f32 2.0, %v968
    %v985 = vsub.f32 2.0, %v969
    %v986 = vsub.f32 2.0, %v970
    %v987 = vsub.f32 2.0, %v971
    %v988 = vsub.f32 2.0, %v972
    %v989 = vsub.f32 2.0, %v973
    %v990 = vsub.f32 2.0, %v974
    %v991 = vsub.f32 2.0, %v975
    %v992 = vsub.f32 2.0, %v976
    %v993 = vsub.f32 2.0, %v977
    %v994 = vmul.f32 %v946, %v978
    %v995 = vmul.f32 %v947, %v979
    %v996 = vmul.f32 %v948, %v980
    %v997 = vmul.f32 %v949, %v981
    %v998 = vmul.f32 %v950, %v982
    %v999 = vmul.f32 %v951, %v983
    %v1000 = vmul.f32 %v952, %v984
    %v1001 = vmul.f32 %v953, %v985
    %v1002 = vmul.f32 %v954, %v986
    %v1003 = vmul.f32 %v955, %v987
    %v1004 = vmul.f32 %v956, %v988
    %v1005 = vmul.f32 %v957, %v989
    %v1006 = vmul.f32 %v958, %v990
    %v1007 = vmul.f32 %v959, %v991
    %v1008 = vmul.f32 %v960, %v992
    %v1009 = vmul.f32 %v961, %v993
    %1011 = vset.pattern.permute.xlu0 64
    %1012 = vperm.xlu0 %1011, %v994
    %v1013 = vpop.permute.xlu0 %1012
    %1016 = vset.pattern.permute.xlu0 64
    %1017 = vperm.xlu0 %1016, %v995
    %v1018 = vpop.permute.xlu0 %1017
    %1021 = vset.pattern.permute.xlu0 64
    %1022 = vperm.xlu0 %1021, %v996
    %v1023 = vpop.permute.xlu0 %1022
    %1026 = vset.pattern.permute.xlu0 64
    %1027 = vperm.xlu0 %1026, %v997
    %v1028 = vpop.permute.xlu0 %1027
    %1031 = vset.pattern.permute.xlu0 64
    %1032 = vperm.xlu0 %1031, %v998
    %v1033 = vpop.permute.xlu0 %1032
    %1036 = vset.pattern.permute.xlu0 64
    %1037 = vperm.xlu0 %1036, %v999
    %v1038 = vpop.permute.xlu0 %1037
    %1041 = vset.pattern.permute.xlu0 64
    %1042 = vperm.xlu0 %1041, %v1000
    %v1043 = vpop.permute.xlu0 %1042
    %1046 = vset.pattern.permute.xlu0 64
    %1047 = vperm.xlu0 %1046, %v1001
    %v1048 = vpop.permute.xlu0 %1047
    %1051 = vset.pattern.permute.xlu0 64
    %1052 = vperm.xlu0 %1051, %v1002
    %v1053 = vpop.permute.xlu0 %1052
    %1056 = vset.pattern.permute.xlu0 64
    %1057 = vperm.xlu0 %1056, %v1003
    %v1058 = vpop.permute.xlu0 %1057
    %1061 = vset.pattern.permute.xlu0 64
    %1062 = vperm.xlu0 %1061, %v1004
    %v1063 = vpop.permute.xlu0 %1062
    %1066 = vset.pattern.permute.xlu0 64
    %1067 = vperm.xlu0 %1066, %v1005
    %v1068 = vpop.permute.xlu0 %1067
    %1071 = vset.pattern.permute.xlu0 64
    %1072 = vperm.xlu0 %1071, %v1006
    %v1073 = vpop.permute.xlu0 %1072
    %1076 = vset.pattern.permute.xlu0 64
    %1077 = vperm.xlu0 %1076, %v1007
    %v1078 = vpop.permute.xlu0 %1077
    %1081 = vset.pattern.permute.xlu0 64
    %1082 = vperm.xlu0 %1081, %v1008
    %v1083 = vpop.permute.xlu0 %1082
    %1086 = vset.pattern.permute.xlu0 64
    %1087 = vperm.xlu0 %1086, %v1009
    %v1088 = vpop.permute.xlu0 %1087
    %v1090 = vmul.f32 %v884, %v1013
    %v1091 = vmul.f32 %v887, %v1018
    %v1092 = vmul.f32 %v892, %v1023
    %v1093 = vmul.f32 %v895, %v1028
    %v1094 = vmul.f32 %v900, %v1033
    %v1095 = vmul.f32 %v903, %v1038
    %v1096 = vmul.f32 %v908, %v1043
    %v1097 = vmul.f32 %v911, %v1048
    %v1098 = vmul.f32 %v916, %v1053
    %v1099 = vmul.f32 %v919, %v1058
    %v1100 = vmul.f32 %v924, %v1063
    %v1101 = vmul.f32 %v927, %v1068
    %v1102 = vmul.f32 %v932, %v1073
    %v1103 = vmul.f32 %v935, %v1078
    %v1104 = vmul.f32 %v940, %v1083
    %v1105 = vmul.f32 %v943, %v1088
    %1106 = vset.pattern.permute.xlu0 1
    %1107 = vperm.xlu0 %1106, %v486
    %v1108 = vpop.permute.xlu0 %1107
    %1110 = vset.pattern.permute.xlu0 1
    %1111 = vperm.xlu0 %1110, %v489
    %v1112 = vpop.permute.xlu0 %1111
    %1114 = vset.pattern.permute.xlu0 1
    %1115 = vperm.xlu0 %1114, %v494
    %v1116 = vpop.permute.xlu0 %1115
    %1118 = vset.pattern.permute.xlu0 1
    %1119 = vperm.xlu0 %1118, %v497
    %v1120 = vpop.permute.xlu0 %1119
    %1122 = vset.pattern.permute.xlu0 1
    %1123 = vperm.xlu0 %1122, %v502
    %v1124 = vpop.permute.xlu0 %1123
    %1126 = vset.pattern.permute.xlu0 1
    %1127 = vperm.xlu0 %1126, %v505
    %v1128 = vpop.permute.xlu0 %1127
    %1130 = vset.pattern.permute.xlu0 1
    %1131 = vperm.xlu0 %1130, %v510
    %v1132 = vpop.permute.xlu0 %1131
    %1134 = vset.pattern.permute.xlu0 1
    %1135 = vperm.xlu0 %1134, %v513
    %v1136 = vpop.permute.xlu0 %1135
    %1138 = vset.pattern.permute.xlu0 1
    %1139 = vperm.xlu0 %1138, %v518
    %v1140 = vpop.permute.xlu0 %1139
    %1142 = vset.pattern.permute.xlu0 1
    %1143 = vperm.xlu0 %1142, %v521
    %v1144 = vpop.permute.xlu0 %1143
    %1146 = vset.pattern.permute.xlu0 1
    %1147 = vperm.xlu0 %1146, %v526
    %v1148 = vpop.permute.xlu0 %1147
    %1150 = vset.pattern.permute.xlu0 1
    %1151 = vperm.xlu0 %1150, %v529
    %v1152 = vpop.permute.xlu0 %1151
    %1154 = vset.pattern.permute.xlu0 1
    %1155 = vperm.xlu0 %1154, %v534
    %v1156 = vpop.permute.xlu0 %1155
    %1158 = vset.pattern.permute.xlu0 1
    %1159 = vperm.xlu0 %1158, %v537
    %v1160 = vpop.permute.xlu0 %1159
    %1162 = vset.pattern.permute.xlu0 1
    %1163 = vperm.xlu0 %1162, %v542
    %v1164 = vpop.permute.xlu0 %1163
    %1166 = vset.pattern.permute.xlu0 1
    %1167 = vperm.xlu0 %1166, %v545
    %v1168 = vpop.permute.xlu0 %1167
    %v1170 = vlaneseq
    %v1171 = vshrl.u32 %v1170, 7
    %v1172 = vsub.s32 1, %v1171
    %v1173 = vrot.slane %v583, %v1172
    %v1174 = vadd.f32 %v1108, %v1173
    %v1175 = vadd.f32 %v1112, %v1173
    %v1176 = vadd.f32 %v1116, %v1173
    %v1177 = vadd.f32 %v1120, %v1173
    %v1178 = vadd.f32 %v1124, %v1173
    %v1179 = vadd.f32 %v1128, %v1173
    %v1180 = vadd.f32 %v1132, %v1173
    %v1181 = vadd.f32 %v1136, %v1173
    %v1182 = vadd.f32 %v1140, %v1173
    %v1183 = vadd.f32 %v1144, %v1173
    %v1184 = vadd.f32 %v1148, %v1173
    %v1185 = vadd.f32 %v1152, %v1173
    %v1186 = vadd.f32 %v1156, %v1173
    %v1187 = vadd.f32 %v1160, %v1173
    %v1188 = vadd.f32 %v1164, %v1173
    %v1189 = vadd.f32 %v1168, %v1173
    %v1190 = vmul.f32 %v1174, 0.2
    %v1191 = vmul.f32 %v1175, 0.2
    %v1192 = vmul.f32 %v1176, 0.2
    %v1193 = vmul.f32 %v1177, 0.2
    %v1194 = vmul.f32 %v1178, 0.2
    %v1195 = vmul.f32 %v1179, 0.2
    %v1196 = vmul.f32 %v1180, 0.2
    %v1197 = vmul.f32 %v1181, 0.2
    %v1198 = vmul.f32 %v1182, 0.2
    %v1199 = vmul.f32 %v1183, 0.2
    %v1200 = vmul.f32 %v1184, 0.2
    %v1201 = vmul.f32 %v1185, 0.2
    %v1202 = vmul.f32 %v1186, 0.2
    %v1203 = vmul.f32 %v1187, 0.2
    %v1204 = vmul.f32 %v1188, 0.2
    %v1205 = vmul.f32 %v1189, 0.2
    %v1206 = vmax.f32 %v1174, %v1190
    %v1207 = vmax.f32 %v1175, %v1191
    %v1208 = vmax.f32 %v1176, %v1192
    %v1209 = vmax.f32 %v1177, %v1193
    %v1210 = vmax.f32 %v1178, %v1194
    %v1211 = vmax.f32 %v1179, %v1195
    %v1212 = vmax.f32 %v1180, %v1196
    %v1213 = vmax.f32 %v1181, %v1197
    %v1214 = vmax.f32 %v1182, %v1198
    %v1215 = vmax.f32 %v1183, %v1199
    %v1216 = vmax.f32 %v1184, %v1200
    %v1217 = vmax.f32 %v1185, %v1201
    %v1218 = vmax.f32 %v1186, %v1202
    %v1219 = vmax.f32 %v1187, %v1203
    %v1220 = vmax.f32 %v1188, %v1204
    %v1221 = vmax.f32 %v1189, %v1205
    %v1222 = vadd.f32 %v1206, %v193
    %v1223 = vadd.f32 %v1207, %v194
    %v1224 = vadd.f32 %v1208, %v195
    %v1225 = vadd.f32 %v1209, %v196
    %v1226 = vadd.f32 %v1210, %v197
    %v1227 = vadd.f32 %v1211, %v198
    %v1228 = vadd.f32 %v1212, %v199
    %v1229 = vadd.f32 %v1213, %v200
    %v1230 = vadd.f32 %v1214, %v201
    %v1231 = vadd.f32 %v1215, %v202
    %v1232 = vadd.f32 %v1216, %v203
    %v1233 = vadd.f32 %v1217, %v204
    %v1234 = vadd.f32 %v1218, %v205
    %v1235 = vadd.f32 %v1219, %v206
    %v1236 = vadd.f32 %v1220, %v207
    %v1237 = vadd.f32 %v1221, %v208
    %1238 = vmax.xlane.f32.xlu0 %v1222
    %v1239 = vpop.xlane.xlu0 %1238
    %1240 = vmax.xlane.f32.xlu0 %v1223
    %v1241 = vpop.xlane.xlu0 %1240
    %1242 = vmax.xlane.f32.xlu0 %v1224
    %v1243 = vpop.xlane.xlu0 %1242
    %1244 = vmax.xlane.f32.xlu0 %v1225
    %v1245 = vpop.xlane.xlu0 %1244
    %1246 = vmax.xlane.f32.xlu0 %v1226
    %v1247 = vpop.xlane.xlu0 %1246
    %1248 = vmax.xlane.f32.xlu0 %v1227
    %v1249 = vpop.xlane.xlu0 %1248
    %1250 = vmax.xlane.f32.xlu0 %v1228
    %v1251 = vpop.xlane.xlu0 %1250
    %1252 = vmax.xlane.f32.xlu0 %v1229
    %v1253 = vpop.xlane.xlu0 %1252
    %1254 = vmax.xlane.f32.xlu0 %v1230
    %v1255 = vpop.xlane.xlu0 %1254
    %1256 = vmax.xlane.f32.xlu0 %v1231
    %v1257 = vpop.xlane.xlu0 %1256
    %1258 = vmax.xlane.f32.xlu0 %v1232
    %v1259 = vpop.xlane.xlu0 %1258
    %1260 = vmax.xlane.f32.xlu0 %v1233
    %v1261 = vpop.xlane.xlu0 %1260
    %1262 = vmax.xlane.f32.xlu0 %v1234
    %v1263 = vpop.xlane.xlu0 %1262
    %1264 = vmax.xlane.f32.xlu0 %v1235
    %v1265 = vpop.xlane.xlu0 %1264
    %1266 = vmax.xlane.f32.xlu0 %v1236
    %v1267 = vpop.xlane.xlu0 %1266
    %1268 = vmax.xlane.f32.xlu0 %v1237
    %v1269 = vpop.xlane.xlu0 %1268
    %v1270 = vsub.f32 %v1222, %v1239
    %v1271 = vsub.f32 %v1223, %v1241
    %v1272 = vsub.f32 %v1224, %v1243
    %v1273 = vsub.f32 %v1225, %v1245
    %v1274 = vsub.f32 %v1226, %v1247
    %v1275 = vsub.f32 %v1227, %v1249
    %v1276 = vsub.f32 %v1228, %v1251
    %v1277 = vsub.f32 %v1229, %v1253
    %v1278 = vsub.f32 %v1230, %v1255
    %v1279 = vsub.f32 %v1231, %v1257
    %v1280 = vsub.f32 %v1232, %v1259
    %v1281 = vsub.f32 %v1233, %v1261
    %v1282 = vsub.f32 %v1234, %v1263
    %v1283 = vsub.f32 %v1235, %v1265
    %v1284 = vsub.f32 %v1236, %v1267
    %v1285 = vsub.f32 %v1237, %v1269
    %v1286 = vmul.f32 %v1270, 1.442695
    %v1287 = vpow.pop %v1286
    %v1288 = vmul.f32 %v1271, 1.442695
    %v1289 = vpow.pop %v1288
    %v1290 = vmul.f32 %v1272, 1.442695
    %v1291 = vpow.pop %v1290
    %v1292 = vmul.f32 %v1273, 1.442695
    %v1293 = vpow.pop %v1292
    %v1294 = vmul.f32 %v1274, 1.442695
    %v1295 = vpow.pop %v1294
    %v1296 = vmul.f32 %v1275, 1.442695
    %v1297 = vpow.pop %v1296
    %v1298 = vmul.f32 %v1276, 1.442695
    %v1299 = vpow.pop %v1298
    %v1300 = vmul.f32 %v1277, 1.442695
    %v1301 = vpow.pop %v1300
    %v1302 = vmul.f32 %v1278, 1.442695
    %v1303 = vpow.pop %v1302
    %v1304 = vmul.f32 %v1279, 1.442695
    %v1305 = vpow.pop %v1304
    %v1306 = vmul.f32 %v1280, 1.442695
    %v1307 = vpow.pop %v1306
    %v1308 = vmul.f32 %v1281, 1.442695
    %v1309 = vpow.pop %v1308
    %v1310 = vmul.f32 %v1282, 1.442695
    %v1311 = vpow.pop %v1310
    %v1312 = vmul.f32 %v1283, 1.442695
    %v1313 = vpow.pop %v1312
    %v1314 = vmul.f32 %v1284, 1.442695
    %v1315 = vpow.pop %v1314
    %v1316 = vmul.f32 %v1285, 1.442695
    %v1317 = vpow.pop %v1316
    %v1318 = vpack.c.bf16 %v1289, %v1287
    %v1319 = vpack.c.bf16 %v1293, %v1291
    %v1320 = vpack.c.bf16 %v1297, %v1295
    %v1321 = vpack.c.bf16 %v1301, %v1299
    %v1322 = vpack.c.bf16 %v1305, %v1303
    %v1323 = vpack.c.bf16 %v1309, %v1307
    %v1324 = vpack.c.bf16 %v1313, %v1311
    %v1325 = vpack.c.bf16 %v1317, %v1315
    %1334 = vrot.lane.b32.xlu0 %v395, 64
    %v1335 = vpop.permute.xlu0 %1334
    %1336 = vrot.lane.b32.xlu0 %v396, 64
    %v1337 = vpop.permute.xlu0 %1336
    %1338 = vrot.lane.b32.xlu0 %v397, 64
    %v1339 = vpop.permute.xlu0 %1338
    %1340 = vrot.lane.b32.xlu0 %v398, 64
    %v1341 = vpop.permute.xlu0 %1340
    %1342 = vrot.lane.b32.xlu0 %v399, 64
    %v1343 = vpop.permute.xlu0 %1342
    %1344 = vrot.lane.b32.xlu0 %v400, 64
    %v1345 = vpop.permute.xlu0 %1344
    %1346 = vrot.lane.b32.xlu0 %v401, 64
    %v1347 = vpop.permute.xlu0 %1346
    %1348 = vrot.lane.b32.xlu0 %v402, 64
    %v1349 = vpop.permute.xlu0 %1348
    %v1351 = vsel %vm273, %v1335, 1065369472
    %v1354 = vsel %vm273, %v1337, 1065369472
    %v1357 = vsel %vm273, %v1339, 1065369472
    %v1360 = vsel %vm273, %v1341, 1065369472
    %v1363 = vsel %vm273, %v1343, 1065369472
    %v1366 = vsel %vm273, %v1345, 1065369472
    %v1369 = vsel %vm273, %v1347, 1065369472
    %v1372 = vsel %vm273, %v1349, 1065369472
    %1374 = vmatprep.subr.bf16.mxu0 0
    %1375 = vmatpush1.bf16.msra.mxu0 %v1351
    %1376 = vmatprep.subr.bf16.mxu0 0
    %1377 = vmatpush1.bf16.msra.mxu0 %v1354
    %1378 = vmatprep.subr.bf16.mxu0 0
    %1379 = vmatpush1.bf16.msra.mxu0 %v1357
    %1380 = vmatprep.subr.bf16.mxu0 0
    %1381 = vmatpush1.bf16.msra.mxu0 %v1360
    %1382 = vmatprep.subr.bf16.mxu0 0
    %1383 = vmatpush1.bf16.msra.mxu0 %v1363
    %1384 = vmatprep.subr.bf16.mxu0 0
    %1385 = vmatpush1.bf16.msra.mxu0 %v1366
    %1386 = vmatprep.subr.bf16.mxu0 0
    %1387 = vmatpush1.bf16.msra.mxu0 %v1369
    %1388 = vmatprep.subr.bf16.mxu0 0
    %1389 = vmatpush1.bf16.msra.mxu0 %v1372
    %1390 = vmatprep.subr.bf16.mxu0 0
    %1391 = vmatpush1.bf16.msra.mxu0 0
    %1392 = vmatprep.subr.bf16.mxu0 0
    %1393 = vmatpush1.bf16.msra.mxu0 0
    %1394 = vmatprep.subr.bf16.mxu0 0
    %1395 = vmatpush1.bf16.msra.mxu0 0
    %1396 = vmatprep.subr.bf16.mxu0 0
    %1397 = vmatpush1.bf16.msra.mxu0 0
    %1398 = vmatprep.subr.bf16.mxu0 0
    %1399 = vmatpush1.bf16.msra.mxu0 0
    %1400 = vmatprep.subr.bf16.mxu0 0
    %1401 = vmatpush1.bf16.msra.mxu0 0
    %1402 = vmatprep.subr.bf16.mxu0 0
    %1403 = vmatpush1.bf16.msra.mxu0 0
    %1404 = vmatprep.subr.bf16.mxu0 0
    %1405 = vmatpush1.bf16.msra.mxu0 0
    %1406 = vmatprep.mubr.bf16.mxu0 0
    %1407 = vmatmul.mubr.bf16.gmra.mrb[0].mxu0 %v1318
    %v1408 = vpop.f32.mrb[0].mxu0
    %v1409 = vadd.f32 0.0, %v1408
    %v1410 = vpop.f32.mrb[0].mxu0
    %v1411 = vpop.f32.mrb[0].mxu0
    %v1412 = vadd.f32 0.0, %v1411
    %v1413 = vpop.f32.mrb[0].mxu0
    %1414 = vmatprep.mubr.bf16.mxu0 0
    %1415 = vmatmul.mubr.bf16.gmra.mrb[0].mxu0 %v1319
    %v1416 = vpop.f32.mrb[0].mxu0
    %v1417 = vadd.f32 0.0, %v1416
    %v1418 = vpop.f32.mrb[0].mxu0
    %v1419 = vpop.f32.mrb[0].mxu0
    %v1420 = vadd.f32 0.0, %v1419
    %v1421 = vpop.f32.mrb[0].mxu0
    %1422 = vmatprep.mubr.bf16.mxu0 0
    %1423 = vmatmul.mubr.bf16.gmra.mrb[0].mxu0 %v1320
    %v1424 = vpop.f32.mrb[0].mxu0
    %v1425 = vadd.f32 0.0, %v1424
    %v1426 = vpop.f32.mrb[0].mxu0
    %v1427 = vpop.f32.mrb[0].mxu0
    %v1428 = vadd.f32 0.0, %v1427
    %v1429 = vpop.f32.mrb[0].mxu0
    %1430 = vmatprep.mubr.bf16.mxu0 0
    %1431 = vmatmul.mubr.bf16.gmra.mrb[0].mxu0 %v1321
    %v1432 = vpop.f32.mrb[0].mxu0
    %v1433 = vadd.f32 0.0, %v1432
    %v1434 = vpop.f32.mrb[0].mxu0
    %v1435 = vpop.f32.mrb[0].mxu0
    %v1436 = vadd.f32 0.0, %v1435
    %v1437 = vpop.f32.mrb[0].mxu0
    %1438 = vmatprep.mubr.bf16.mxu0 0
    %1439 = vmatmul.mubr.bf16.gmra.mrb[0].mxu0 %v1322
    %v1440 = vpop.f32.mrb[0].mxu0
    %v1441 = vadd.f32 0.0, %v1440
    %v1442 = vpop.f32.mrb[0].mxu0
    %v1443 = vpop.f32.mrb[0].mxu0
    %v1444 = vadd.f32 0.0, %v1443
    %v1445 = vpop.f32.mrb[0].mxu0
    %1446 = vmatprep.mubr.bf16.mxu0 0
    %1447 = vmatmul.mubr.bf16.gmra.mrb[0].mxu0 %v1323
    %v1448 = vpop.f32.mrb[0].mxu0
    %v1449 = vadd.f32 0.0, %v1448
    %v1450 = vpop.f32.mrb[0].mxu0
    %v1451 = vpop.f32.mrb[0].mxu0
    %v1452 = vadd.f32 0.0, %v1451
    %v1453 = vpop.f32.mrb[0].mxu0
    %1454 = vmatprep.mubr.bf16.mxu0 0
    %1455 = vmatmul.mubr.bf16.gmra.mrb[0].mxu0 %v1324
    %v1456 = vpop.f32.mrb[0].mxu0
    %v1457 = vadd.f32 0.0, %v1456
    %v1458 = vpop.f32.mrb[0].mxu0
    %v1459 = vpop.f32.mrb[0].mxu0
    %v1460 = vadd.f32 0.0, %v1459
    %v1461 = vpop.f32.mrb[0].mxu0
    %1462 = vmatprep.mubr.bf16.mxu0 0
    %1463 = vmatmul.mubr.bf16.gmra.mrb[0].mxu0 %v1325
    %v1464 = vpop.f32.mrb[0].mxu0
    %v1465 = vadd.f32 0.0, %v1464
    %v1466 = vpop.f32.mrb[0].mxu0
    %v1467 = vpop.f32.mrb[0].mxu0
    %v1468 = vadd.f32 0.0, %v1467
    %v1469 = vpop.f32.mrb[0].mxu0
    %1470 = vdwg.mxu0
    %v1471 = vrcp.pop %v1409
    %v1472 = vrcp.pop %v1412
    %v1473 = vrcp.pop %v1417
    %v1474 = vrcp.pop %v1420
    %v1475 = vrcp.pop %v1425
    %v1476 = vrcp.pop %v1428
    %v1477 = vrcp.pop %v1433
    %v1478 = vrcp.pop %v1436
    %v1479 = vrcp.pop %v1441
    %v1480 = vrcp.pop %v1444
    %v1481 = vrcp.pop %v1449
    %v1482 = vrcp.pop %v1452
    %v1483 = vrcp.pop %v1457
    %v1484 = vrcp.pop %v1460
    %v1485 = vrcp.pop %v1465
    %v1486 = vrcp.pop %v1468
    %v1487 = vmul.f32 %v1409, %v1471
    %v1488 = vmul.f32 %v1412, %v1472
    %v1489 = vmul.f32 %v1417, %v1473
    %v1490 = vmul.f32 %v1420, %v1474
    %v1491 = vmul.f32 %v1425, %v1475
    %v1492 = vmul.f32 %v1428, %v1476
    %v1493 = vmul.f32 %v1433, %v1477
    %v1494 = vmul.f32 %v1436, %v1478
    %v1495 = vmul.f32 %v1441, %v1479
    %v1496 = vmul.f32 %v1444, %v1480
    %v1497 = vmul.f32 %v1449, %v1481
    %v1498 = vmul.f32 %v1452, %v1482
    %v1499 = vmul.f32 %v1457, %v1483
    %v1500 = vmul.f32 %v1460, %v1484
    %v1501 = vmul.f32 %v1465, %v1485
    %v1502 = vmul.f32 %v1468, %v1486
    %v1503 = vsub.f32 2.0, %v1487
    %v1504 = vsub.f32 2.0, %v1488
    %v1505 = vsub.f32 2.0, %v1489
    %v1506 = vsub.f32 2.0, %v1490
    %v1507 = vsub.f32 2.0, %v1491
    %v1508 = vsub.f32 2.0, %v1492
    %v1509 = vsub.f32 2.0, %v1493
    %v1510 = vsub.f32 2.0, %v1494
    %v1511 = vsub.f32 2.0, %v1495
    %v1512 = vsub.f32 2.0, %v1496
    %v1513 = vsub.f32 2.0, %v1497
    %v1514 = vsub.f32 2.0, %v1498
    %v1515 = vsub.f32 2.0, %v1499
    %v1516 = vsub.f32 2.0, %v1500
    %v1517 = vsub.f32 2.0, %v1501
    %v1518 = vsub.f32 2.0, %v1502
    %v1519 = vmul.f32 %v1471, %v1503
    %v1520 = vmul.f32 %v1472, %v1504
    %v1521 = vmul.f32 %v1473, %v1505
    %v1522 = vmul.f32 %v1474, %v1506
    %v1523 = vmul.f32 %v1475, %v1507
    %v1524 = vmul.f32 %v1476, %v1508
    %v1525 = vmul.f32 %v1477, %v1509
    %v1526 = vmul.f32 %v1478, %v1510
    %v1527 = vmul.f32 %v1479, %v1511
    %v1528 = vmul.f32 %v1480, %v1512
    %v1529 = vmul.f32 %v1481, %v1513
    %v1530 = vmul.f32 %v1482, %v1514
    %v1531 = vmul.f32 %v1483, %v1515
    %v1532 = vmul.f32 %v1484, %v1516
    %v1533 = vmul.f32 %v1485, %v1517
    %v1534 = vmul.f32 %v1486, %v1518
    %1536 = vset.pattern.permute.xlu0 64
    %1537 = vperm.xlu0 %1536, %v1519
    %v1538 = vpop.permute.xlu0 %1537
    %1541 = vset.pattern.permute.xlu0 64
    %1542 = vperm.xlu0 %1541, %v1520
    %v1543 = vpop.permute.xlu0 %1542
    %1546 = vset.pattern.permute.xlu0 64
    %1547 = vperm.xlu0 %1546, %v1521
    %v1548 = vpop.permute.xlu0 %1547
    %1551 = vset.pattern.permute.xlu0 64
    %1552 = vperm.xlu0 %1551, %v1522
    %v1553 = vpop.permute.xlu0 %1552
    %1556 = vset.pattern.permute.xlu0 64
    %1557 = vperm.xlu0 %1556, %v1523
    %v1558 = vpop.permute.xlu0 %1557
    %1561 = vset.pattern.permute.xlu0 64
    %1562 = vperm.xlu0 %1561, %v1524
    %v1563 = vpop.permute.xlu0 %1562
    %1566 = vset.pattern.permute.xlu0 64
    %1567 = vperm.xlu0 %1566, %v1525
    %v1568 = vpop.permute.xlu0 %1567
    %1571 = vset.pattern.permute.xlu0 64
    %1572 = vperm.xlu0 %1571, %v1526
    %v1573 = vpop.permute.xlu0 %1572
    %1576 = vset.pattern.permute.xlu0 64
    %1577 = vperm.xlu0 %1576, %v1527
    %v1578 = vpop.permute.xlu0 %1577
    %1581 = vset.pattern.permute.xlu0 64
    %1582 = vperm.xlu0 %1581, %v1528
    %v1583 = vpop.permute.xlu0 %1582
    %1586 = vset.pattern.permute.xlu0 64
    %1587 = vperm.xlu0 %1586, %v1529
    %v1588 = vpop.permute.xlu0 %1587
    %1591 = vset.pattern.permute.xlu0 64
    %1592 = vperm.xlu0 %1591, %v1530
    %v1593 = vpop.permute.xlu0 %1592
    %1596 = vset.pattern.permute.xlu0 64
    %1597 = vperm.xlu0 %1596, %v1531
    %v1598 = vpop.permute.xlu0 %1597
    %1601 = vset.pattern.permute.xlu0 64
    %1602 = vperm.xlu0 %1601, %v1532
    %v1603 = vpop.permute.xlu0 %1602
    %1606 = vset.pattern.permute.xlu0 64
    %1607 = vperm.xlu0 %1606, %v1533
    %v1608 = vpop.permute.xlu0 %1607
    %1611 = vset.pattern.permute.xlu0 64
    %1612 = vperm.xlu0 %1611, %v1534
    %v1613 = vpop.permute.xlu0 %1612
    %v1615 = vmul.f32 %v1409, %v1538
    %v1616 = vmul.f32 %v1412, %v1543
    %v1617 = vmul.f32 %v1417, %v1548
    %v1618 = vmul.f32 %v1420, %v1553
    %v1619 = vmul.f32 %v1425, %v1558
    %v1620 = vmul.f32 %v1428, %v1563
    %v1621 = vmul.f32 %v1433, %v1568
    %v1622 = vmul.f32 %v1436, %v1573
    %v1623 = vmul.f32 %v1441, %v1578
    %v1624 = vmul.f32 %v1444, %v1583
    %v1625 = vmul.f32 %v1449, %v1588
    %v1626 = vmul.f32 %v1452, %v1593
    %v1627 = vmul.f32 %v1457, %v1598
    %v1628 = vmul.f32 %v1460, %v1603
    %v1629 = vmul.f32 %v1465, %v1608
    %v1630 = vmul.f32 %v1468, %v1613
    %1647 = vrot.lane.b32.xlu0 %v1615, 64
    %v1648 = vpop.permute.xlu0 %1647
    %1649 = vrot.lane.b32.xlu0 %v1616, 64
    %v1650 = vpop.permute.xlu0 %1649
    %1651 = vrot.lane.b32.xlu0 %v1617, 64
    %v1652 = vpop.permute.xlu0 %1651
    %1653 = vrot.lane.b32.xlu0 %v1618, 64
    %v1654 = vpop.permute.xlu0 %1653
    %1655 = vrot.lane.b32.xlu0 %v1619, 64
    %v1656 = vpop.permute.xlu0 %1655
    %1657 = vrot.lane.b32.xlu0 %v1620, 64
    %v1658 = vpop.permute.xlu0 %1657
    %1659 = vrot.lane.b32.xlu0 %v1621, 64
    %v1660 = vpop.permute.xlu0 %1659
    %1661 = vrot.lane.b32.xlu0 %v1622, 64
    %v1662 = vpop.permute.xlu0 %1661
    %1663 = vrot.lane.b32.xlu0 %v1623, 64
    %v1664 = vpop.permute.xlu0 %1663
    %1665 = vrot.lane.b32.xlu0 %v1624, 64
    %v1666 = vpop.permute.xlu0 %1665
    %1667 = vrot.lane.b32.xlu0 %v1625, 64
    %v1668 = vpop.permute.xlu0 %1667
    %1669 = vrot.lane.b32.xlu0 %v1626, 64
    %v1670 = vpop.permute.xlu0 %1669
    %1671 = vrot.lane.b32.xlu0 %v1627, 64
    %v1672 = vpop.permute.xlu0 %1671
    %1673 = vrot.lane.b32.xlu0 %v1628, 64
    %v1674 = vpop.permute.xlu0 %1673
    %1675 = vrot.lane.b32.xlu0 %v1629, 64
    %v1676 = vpop.permute.xlu0 %1675
    %1677 = vrot.lane.b32.xlu0 %v1630, 64
    %v1678 = vpop.permute.xlu0 %1677
    %v1695 = vsel %vm273, %v1090, %v1648
    %v1696 = vsel %vm273, %v1091, %v1650
    %v1697 = vsel %vm273, %v1092, %v1652
    %v1698 = vsel %vm273, %v1093, %v1654
    %v1699 = vsel %vm273, %v1094, %v1656
    %v1700 = vsel %vm273, %v1095, %v1658
    %v1701 = vsel %vm273, %v1096, %v1660
    %v1702 = vsel %vm273, %v1097, %v1662
    %v1703 = vsel %vm273, %v1098, %v1664
    %v1704 = vsel %vm273, %v1099, %v1666
    %v1705 = vsel %vm273, %v1100, %v1668
    %v1706 = vsel %vm273, %v1101, %v1670
    %v1707 = vsel %vm273, %v1102, %v1672
    %v1708 = vsel %vm273, %v1103, %v1674
    %v1709 = vsel %vm273, %v1104, %v1676
    %v1710 = vsel %vm273, %v1105, %v1678
    %v1711 = vadd.f32 %v1695, %v1696
    %v1712 = vadd.f32 %v1711, %v1697
    %v1713 = vadd.f32 %v1712, %v1698
    %v1714 = vadd.f32 %v1713, %v1699
    %v1715 = vadd.f32 %v1714, %v1700
    %v1716 = vadd.f32 %v1715, %v1701
    %v1717 = vadd.f32 %v1716, %v1702
    %v1718 = vadd.f32 %v1717, %v1703
    %v1719 = vadd.f32 %v1718, %v1704
    %v1720 = vadd.f32 %v1719, %v1705
    %v1721 = vadd.f32 %v1720, %v1706
    %v1722 = vadd.f32 %v1721, %v1707
    %v1723 = vadd.f32 %v1722, %v1708
    %v1724 = vadd.f32 %v1723, %v1709
    %v1725 = vadd.f32 %v1724, %v1710
    %v1726 = vrot.slane %v1725, 4
    %v1727 = vadd.f32 %v1725, %v1726
    %v1728 = vrot.slane %v1727, 2
    %v1729 = vadd.f32 %v1727, %v1728
    %v1730 = vrot.slane %v1729, 1
    %v1731 = vadd.f32 %v1729, %v1730
    %v1732 = vrcp.pop 128.0
    %v1733 = vmul.f32 %v1731, %v1732
    %v1734 = vmul.f32 %v1695, %v1695
    %v1735 = vmul.f32 %v1696, %v1696
    %v1736 = vmul.f32 %v1697, %v1697
    %v1737 = vmul.f32 %v1698, %v1698
    %v1738 = vmul.f32 %v1699, %v1699
    %v1739 = vmul.f32 %v1700, %v1700
    %v1740 = vmul.f32 %v1701, %v1701
    %v1741 = vmul.f32 %v1702, %v1702
    %v1742 = vmul.f32 %v1703, %v1703
    %v1743 = vmul.f32 %v1704, %v1704
    %v1744 = vmul.f32 %v1705, %v1705
    %v1745 = vmul.f32 %v1706, %v1706
    %v1746 = vmul.f32 %v1707, %v1707
    %v1747 = vmul.f32 %v1708, %v1708
    %v1748 = vmul.f32 %v1709, %v1709
    %v1749 = vmul.f32 %v1710, %v1710
    %v1750 = vadd.f32 %v1734, %v1735
    %v1751 = vadd.f32 %v1750, %v1736
    %v1752 = vadd.f32 %v1751, %v1737
    %v1753 = vadd.f32 %v1752, %v1738
    %v1754 = vadd.f32 %v1753, %v1739
    %v1755 = vadd.f32 %v1754, %v1740
    %v1756 = vadd.f32 %v1755, %v1741
    %v1757 = vadd.f32 %v1756, %v1742
    %v1758 = vadd.f32 %v1757, %v1743
    %v1759 = vadd.f32 %v1758, %v1744
    %v1760 = vadd.f32 %v1759, %v1745
    %v1761 = vadd.f32 %v1760, %v1746
    %v1762 = vadd.f32 %v1761, %v1747
    %v1763 = vadd.f32 %v1762, %v1748
    %v1764 = vadd.f32 %v1763, %v1749
    %v1765 = vrot.slane %v1764, 4
    %v1766 = vadd.f32 %v1764, %v1765
    %v1767 = vrot.slane %v1766, 2
    %v1768 = vadd.f32 %v1766, %v1767
    %v1769 = vrot.slane %v1768, 1
    %v1770 = vadd.f32 %v1768, %v1769
    %v1771 = vmul.f32 %v1770, %v1732
    %v1772 = vmul.f32 %v1733, %v1733
    %v1773 = vsub.f32 %v1771, %v1772
    %v1774 = vmax.f32 %v1773, 0.0
    %v1775 = vadd.f32 %v1774, 1e-05
    %v1776 = vrsqrt.pop %v1775
    %v1777 = vmul.f32 %v92, %v1776
    %v1778 = vsub.f32 %v1695, %v1733
    %v1779 = vsub.f32 %v1696, %v1733
    %v1780 = vsub.f32 %v1697, %v1733
    %v1781 = vsub.f32 %v1698, %v1733
    %v1782 = vsub.f32 %v1699, %v1733
    %v1783 = vsub.f32 %v1700, %v1733
    %v1784 = vsub.f32 %v1701, %v1733
    %v1785 = vsub.f32 %v1702, %v1733
    %v1786 = vsub.f32 %v1703, %v1733
    %v1787 = vsub.f32 %v1704, %v1733
    %v1788 = vsub.f32 %v1705, %v1733
    %v1789 = vsub.f32 %v1706, %v1733
    %v1790 = vsub.f32 %v1707, %v1733
    %v1791 = vsub.f32 %v1708, %v1733
    %v1792 = vsub.f32 %v1709, %v1733
    %v1793 = vsub.f32 %v1710, %v1733
    %v1795 = vlaneseq
    %v1796 = vshrl.u32 %v1795, 7
    %v1797 = vsub.s32 0, %v1796
    %v1798 = vrot.slane %v1777, %v1797
    %v1800 = vmul.f32 %v1778, %v1798
    %v1801 = vmul.f32 %v1779, %v1798
    %v1802 = vmul.f32 %v1780, %v1798
    %v1803 = vmul.f32 %v1781, %v1798
    %v1804 = vmul.f32 %v1782, %v1798
    %v1805 = vmul.f32 %v1783, %v1798
    %v1806 = vmul.f32 %v1784, %v1798
    %v1807 = vmul.f32 %v1785, %v1798
    %v1808 = vmul.f32 %v1786, %v1798
    %v1809 = vmul.f32 %v1787, %v1798
    %v1810 = vmul.f32 %v1788, %v1798
    %v1811 = vmul.f32 %v1789, %v1798
    %v1812 = vmul.f32 %v1790, %v1798
    %v1813 = vmul.f32 %v1791, %v1798
    %v1814 = vmul.f32 %v1792, %v1798
    %v1815 = vmul.f32 %v1793, %v1798
    %v1817 = vlaneseq
    %v1818 = vshrl.u32 %v1817, 7
    %v1819 = vsub.s32 0, %v1818
    %v1820 = vrot.slane %v93, %v1819
    %v1822 = vadd.f32 %v1800, %v1820
    %v1823 = vadd.f32 %v1801, %v1820
    %v1824 = vadd.f32 %v1802, %v1820
    %v1825 = vadd.f32 %v1803, %v1820
    %v1826 = vadd.f32 %v1804, %v1820
    %v1827 = vadd.f32 %v1805, %v1820
    %v1828 = vadd.f32 %v1806, %v1820
    %v1829 = vadd.f32 %v1807, %v1820
    %v1830 = vadd.f32 %v1808, %v1820
    %v1831 = vadd.f32 %v1809, %v1820
    %v1832 = vadd.f32 %v1810, %v1820
    %v1833 = vadd.f32 %v1811, %v1820
    %v1834 = vadd.f32 %v1812, %v1820
    %v1835 = vadd.f32 %v1813, %v1820
    %v1836 = vadd.f32 %v1814, %v1820
    %v1837 = vadd.f32 %v1815, %v1820
    %vm1838 = vcmp.gt.f32.partialorder %v1822, 0.0
    %vm1839 = vcmp.gt.f32.partialorder %v1823, 0.0
    %vm1840 = vcmp.gt.f32.partialorder %v1824, 0.0
    %vm1841 = vcmp.gt.f32.partialorder %v1825, 0.0
    %vm1842 = vcmp.gt.f32.partialorder %v1826, 0.0
    %vm1843 = vcmp.gt.f32.partialorder %v1827, 0.0
    %vm1844 = vcmp.gt.f32.partialorder %v1828, 0.0
    %vm1845 = vcmp.gt.f32.partialorder %v1829, 0.0
    %vm1846 = vcmp.gt.f32.partialorder %v1830, 0.0
    %vm1847 = vcmp.gt.f32.partialorder %v1831, 0.0
    %vm1848 = vcmp.gt.f32.partialorder %v1832, 0.0
    %vm1849 = vcmp.gt.f32.partialorder %v1833, 0.0
    %vm1850 = vcmp.gt.f32.partialorder %v1834, 0.0
    %vm1851 = vcmp.gt.f32.partialorder %v1835, 0.0
    %vm1852 = vcmp.gt.f32.partialorder %v1836, 0.0
    %vm1853 = vcmp.gt.f32.partialorder %v1837, 0.0
    %v1854 = vmul.f32 %v1822, 1.442695
    %v1855 = vpow.pop %v1854
    %v1856 = vmul.f32 %v1823, 1.442695
    %v1857 = vpow.pop %v1856
    %v1858 = vmul.f32 %v1824, 1.442695
    %v1859 = vpow.pop %v1858
    %v1860 = vmul.f32 %v1825, 1.442695
    %v1861 = vpow.pop %v1860
    %v1862 = vmul.f32 %v1826, 1.442695
    %v1863 = vpow.pop %v1862
    %v1864 = vmul.f32 %v1827, 1.442695
    %v1865 = vpow.pop %v1864
    %v1866 = vmul.f32 %v1828, 1.442695
    %v1867 = vpow.pop %v1866
    %v1868 = vmul.f32 %v1829, 1.442695
    %v1869 = vpow.pop %v1868
    %v1870 = vmul.f32 %v1830, 1.442695
    %v1871 = vpow.pop %v1870
    %v1872 = vmul.f32 %v1831, 1.442695
    %v1873 = vpow.pop %v1872
    %v1874 = vmul.f32 %v1832, 1.442695
    %v1875 = vpow.pop %v1874
    %v1876 = vmul.f32 %v1833, 1.442695
    %v1877 = vpow.pop %v1876
    %v1878 = vmul.f32 %v1834, 1.442695
    %v1879 = vpow.pop %v1878
    %v1880 = vmul.f32 %v1835, 1.442695
    %v1881 = vpow.pop %v1880
    %v1882 = vmul.f32 %v1836, 1.442695
    %v1883 = vpow.pop %v1882
    %v1884 = vmul.f32 %v1837, 1.442695
    %v1885 = vpow.pop %v1884
    %v1886 = vsub.f32 %v1855, 1.0
    %v1887 = vsub.f32 %v1857, 1.0
    %v1888 = vsub.f32 %v1859, 1.0
    %v1889 = vsub.f32 %v1861, 1.0
    %v1890 = vsub.f32 %v1863, 1.0
    %v1891 = vsub.f32 %v1865, 1.0
    %v1892 = vsub.f32 %v1867, 1.0
    %v1893 = vsub.f32 %v1869, 1.0
    %v1894 = vsub.f32 %v1871, 1.0
    %v1895 = vsub.f32 %v1873, 1.0
    %v1896 = vsub.f32 %v1875, 1.0
    %v1897 = vsub.f32 %v1877, 1.0
    %v1898 = vsub.f32 %v1879, 1.0
    %v1899 = vsub.f32 %v1881, 1.0
    %v1900 = vsub.f32 %v1883, 1.0
    %v1901 = vsub.f32 %v1885, 1.0
    %v1902 = vsel %vm1838, %v1822, %v1886
    %v1903 = vsel %vm1839, %v1823, %v1887
    %v1904 = vsel %vm1840, %v1824, %v1888
    %v1905 = vsel %vm1841, %v1825, %v1889
    %v1906 = vsel %vm1842, %v1826, %v1890
    %v1907 = vsel %vm1843, %v1827, %v1891
    %v1908 = vsel %vm1844, %v1828, %v1892
    %v1909 = vsel %vm1845, %v1829, %v1893
    %v1910 = vsel %vm1846, %v1830, %v1894
    %v1911 = vsel %vm1847, %v1831, %v1895
    %v1912 = vsel %vm1848, %v1832, %v1896
    %v1913 = vsel %vm1849, %v1833, %v1897
    %v1914 = vsel %vm1850, %v1834, %v1898
    %v1915 = vsel %vm1851, %v1835, %v1899
    %v1916 = vsel %vm1852, %v1836, %v1900
    %v1917 = vsel %vm1853, %v1837, %v1901
    %v1918 = vpack.c.bf16 %v1903, %v1902
    %v1919 = vpack.c.bf16 %v1905, %v1904
    %v1920 = vpack.c.bf16 %v1907, %v1906
    %v1921 = vpack.c.bf16 %v1909, %v1908
    %v1922 = vpack.c.bf16 %v1911, %v1910
    %v1923 = vpack.c.bf16 %v1913, %v1912
    %v1924 = vpack.c.bf16 %v1915, %v1914
    %v1925 = vpack.c.bf16 %v1917, %v1916
    %v1942 = vunpack.c.l.b16 %v94
    %v1943 = vunpack.c.l.b16 %v95
    %v1944 = vunpack.c.l.b16 %v96
    %v1945 = vunpack.c.l.b16 %v97
    %v1946 = vunpack.c.l.b16 %v98
    %v1947 = vunpack.c.l.b16 %v99
    %v1948 = vunpack.c.l.b16 %v100
    %v1949 = vunpack.c.l.b16 %v101
    %v1950 = vunpack.c.l.b16 %v102
    %v1951 = vunpack.c.l.b16 %v103
    %v1952 = vunpack.c.l.b16 %v104
    %v1953 = vunpack.c.l.b16 %v105
    %v1954 = vunpack.c.l.b16 %v106
    %v1955 = vunpack.c.l.b16 %v107
    %v1956 = vunpack.c.l.b16 %v108
    %v1957 = vunpack.c.l.b16 %v109
    %v1958 = vpack.c.b16 %v1943, %v1942
    %v1959 = vpack.c.b16 %v1945, %v1944
    %v1960 = vpack.c.b16 %v1947, %v1946
    %v1961 = vpack.c.b16 %v1949, %v1948
    %v1962 = vpack.c.b16 %v1951, %v1950
    %v1963 = vpack.c.b16 %v1953, %v1952
    %v1964 = vpack.c.b16 %v1955, %v1954
    %v1965 = vpack.c.b16 %v1957, %v1956
    %1974 = vmatprep.subr.bf16.mxu0 0
    %1975 = vmatpush1.bf16.msra.mxu0 %v1958
    %1976 = vmatprep.subr.bf16.mxu0 0
    %1977 = vmatpush1.bf16.msra.mxu0 %v1959
    %1978 = vmatprep.subr.bf16.mxu0 0
    %1979 = vmatpush1.bf16.msra.mxu0 %v1960
    %1980 = vmatprep.subr.bf16.mxu0 0
    %1981 = vmatpush1.bf16.msra.mxu0 %v1961
    %1982 = vmatprep.subr.bf16.mxu0 0
    %1983 = vmatpush1.bf16.msra.mxu0 %v1962
    %1984 = vmatprep.subr.bf16.mxu0 0
    %1985 = vmatpush1.bf16.msra.mxu0 %v1963
    %1986 = vmatprep.subr.bf16.mxu0 0
    %1987 = vmatpush1.bf16.msra.mxu0 %v1964
    %1988 = vmatprep.subr.bf16.mxu0 0
    %1989 = vmatpush1.bf16.msra.mxu0 %v1965
    %1990 = vmatprep.subr.bf16.mxu0 0
    %1991 = vmatpush1.bf16.msra.mxu0 0
    %1992 = vmatprep.subr.bf16.mxu0 0
    %1993 = vmatpush1.bf16.msra.mxu0 0
    %1994 = vmatprep.subr.bf16.mxu0 0
    %1995 = vmatpush1.bf16.msra.mxu0 0
    %1996 = vmatprep.subr.bf16.mxu0 0
    %1997 = vmatpush1.bf16.msra.mxu0 0
    %1998 = vmatprep.subr.bf16.mxu0 0
    %1999 = vmatpush1.bf16.msra.mxu0 0
    %2000 = vmatprep.subr.bf16.mxu0 0
    %2001 = vmatpush1.bf16.msra.mxu0 0
    %2002 = vmatprep.subr.bf16.mxu0 0
    %2003 = vmatpush1.bf16.msra.mxu0 0
    %2004 = vmatprep.subr.bf16.mxu0 0
    %2005 = vmatpush1.bf16.msra.mxu0 0
    %2006 = vmatprep.mubr.bf16.mxu0 0
    %2007 = vmatmul.mubr.bf16.gmra.mrb[0].mxu0 %v1918
    %v2008 = vpop.f32.mrb[0].mxu0
    %v2009 = vadd.f32 0.0, %v2008
    %v2010 = vpop.f32.mrb[0].mxu0
    %v2011 = vpop.f32.mrb[0].mxu0
    %v2012 = vadd.f32 0.0, %v2011
    %v2013 = vpop.f32.mrb[0].mxu0
    %2014 = vmatprep.mubr.bf16.mxu0 0
    %2015 = vmatmul.mubr.bf16.gmra.mrb[0].mxu0 %v1919
    %v2016 = vpop.f32.mrb[0].mxu0
    %v2017 = vadd.f32 0.0, %v2016
    %v2018 = vpop.f32.mrb[0].mxu0
    %v2019 = vpop.f32.mrb[0].mxu0
    %v2020 = vadd.f32 0.0, %v2019
    %v2021 = vpop.f32.mrb[0].mxu0
    %2022 = vmatprep.mubr.bf16.mxu0 0
    %2023 = vmatmul.mubr.bf16.gmra.mrb[0].mxu0 %v1920
    %v2024 = vpop.f32.mrb[0].mxu0
    %v2025 = vadd.f32 0.0, %v2024
    %v2026 = vpop.f32.mrb[0].mxu0
    %v2027 = vpop.f32.mrb[0].mxu0
    %v2028 = vadd.f32 0.0, %v2027
    %v2029 = vpop.f32.mrb[0].mxu0
    %2030 = vmatprep.mubr.bf16.mxu0 0
    %2031 = vmatmul.mubr.bf16.gmra.mrb[0].mxu0 %v1921
    %v2032 = vpop.f32.mrb[0].mxu0
    %v2033 = vadd.f32 0.0, %v2032
    %v2034 = vpop.f32.mrb[0].mxu0
    %v2035 = vpop.f32.mrb[0].mxu0
    %v2036 = vadd.f32 0.0, %v2035
    %v2037 = vpop.f32.mrb[0].mxu0
    %2038 = vmatprep.mubr.bf16.mxu0 0
    %2039 = vmatmul.mubr.bf16.gmra.mrb[0].mxu0 %v1922
    %v2040 = vpop.f32.mrb[0].mxu0
    %v2041 = vadd.f32 0.0, %v2040
    %v2042 = vpop.f32.mrb[0].mxu0
    %v2043 = vpop.f32.mrb[0].mxu0
    %v2044 = vadd.f32 0.0, %v2043
    %v2045 = vpop.f32.mrb[0].mxu0
    %2046 = vmatprep.mubr.bf16.mxu0 0
    %2047 = vmatmul.mubr.bf16.gmra.mrb[0].mxu0 %v1923
    %v2048 = vpop.f32.mrb[0].mxu0
    %v2049 = vadd.f32 0.0, %v2048
    %v2050 = vpop.f32.mrb[0].mxu0
    %v2051 = vpop.f32.mrb[0].mxu0
    %v2052 = vadd.f32 0.0, %v2051
    %v2053 = vpop.f32.mrb[0].mxu0
    %2054 = vmatprep.mubr.bf16.mxu0 0
    %2055 = vmatmul.mubr.bf16.gmra.mrb[0].mxu0 %v1924
    %v2056 = vpop.f32.mrb[0].mxu0
    %v2057 = vadd.f32 0.0, %v2056
    %v2058 = vpop.f32.mrb[0].mxu0
    %v2059 = vpop.f32.mrb[0].mxu0
    %v2060 = vadd.f32 0.0, %v2059
    %v2061 = vpop.f32.mrb[0].mxu0
    %2062 = vmatprep.mubr.bf16.mxu0 0
    %2063 = vmatmul.mubr.bf16.gmra.mrb[0].mxu0 %v1925
    %v2064 = vpop.f32.mrb[0].mxu0
    %v2065 = vadd.f32 0.0, %v2064
    %v2066 = vpop.f32.mrb[0].mxu0
    %v2067 = vpop.f32.mrb[0].mxu0
    %v2068 = vadd.f32 0.0, %v2067
    %v2069 = vpop.f32.mrb[0].mxu0
    %2070 = vdwg.mxu0
    %v2071 = vpack.c.bf16 %v2012, %v2009
    %v2072 = vpack.c.bf16 %v2020, %v2017
    %v2073 = vpack.c.bf16 %v2028, %v2025
    %v2074 = vpack.c.bf16 %v2036, %v2033
    %v2075 = vpack.c.bf16 %v2044, %v2041
    %v2076 = vpack.c.bf16 %v2052, %v2049
    %v2077 = vpack.c.bf16 %v2060, %v2057
    %v2078 = vpack.c.bf16 %v2068, %v2065
    %v2095 = vunpack.c.l.b16 %v111
    %v2096 = vunpack.c.l.b16 %v112
    %v2097 = vunpack.c.l.b16 %v113
    %v2098 = vunpack.c.l.b16 %v114
    %v2099 = vunpack.c.l.b16 %v115
    %v2100 = vunpack.c.l.b16 %v116
    %v2101 = vunpack.c.l.b16 %v117
    %v2102 = vunpack.c.l.b16 %v118
    %v2103 = vunpack.c.l.b16 %v119
    %v2104 = vunpack.c.l.b16 %v120
    %v2105 = vunpack.c.l.b16 %v121
    %v2106 = vunpack.c.l.b16 %v122
    %v2107 = vunpack.c.l.b16 %v123
    %v2108 = vunpack.c.l.b16 %v124
    %v2109 = vunpack.c.l.b16 %v125
    %v2110 = vunpack.c.l.b16 %v126
    %v2111 = vpack.c.b16 %v2096, %v2095
    %v2112 = vpack.c.b16 %v2098, %v2097
    %v2113 = vpack.c.b16 %v2100, %v2099
    %v2114 = vpack.c.b16 %v2102, %v2101
    %v2115 = vpack.c.b16 %v2104, %v2103
    %v2116 = vpack.c.b16 %v2106, %v2105
    %v2117 = vpack.c.b16 %v2108, %v2107
    %v2118 = vpack.c.b16 %v2110, %v2109
    %2127 = vmatprep.subr.bf16.mxu0 0
    %2128 = vmatpush1.bf16.msra.mxu0 %v2111
    %2129 = vmatprep.subr.bf16.mxu0 0
    %2130 = vmatpush1.bf16.msra.mxu0 %v2112
    %2131 = vmatprep.subr.bf16.mxu0 0
    %2132 = vmatpush1.bf16.msra.mxu0 %v2113
    %2133 = vmatprep.subr.bf16.mxu0 0
    %2134 = vmatpush1.bf16.msra.mxu0 %v2114
    %2135 = vmatprep.subr.bf16.mxu0 0
    %2136 = vmatpush1.bf16.msra.mxu0 %v2115
    %2137 = vmatprep.subr.bf16.mxu0 0
    %2138 = vmatpush1.bf16.msra.mxu0 %v2116
    %2139 = vmatprep.subr.bf16.mxu0 0
    %2140 = vmatpush1.bf16.msra.mxu0 %v2117
    %2141 = vmatprep.subr.bf16.mxu0 0
    %2142 = vmatpush1.bf16.msra.mxu0 %v2118
    %2143 = vmatprep.subr.bf16.mxu0 0
    %2144 = vmatpush1.bf16.msra.mxu0 0
    %2145 = vmatprep.subr.bf16.mxu0 0
    %2146 = vmatpush1.bf16.msra.mxu0 0
    %2147 = vmatprep.subr.bf16.mxu0 0
    %2148 = vmatpush1.bf16.msra.mxu0 0
    %2149 = vmatprep.subr.bf16.mxu0 0
    %2150 = vmatpush1.bf16.msra.mxu0 0
    %2151 = vmatprep.subr.bf16.mxu0 0
    %2152 = vmatpush1.bf16.msra.mxu0 0
    %2153 = vmatprep.subr.bf16.mxu0 0
    %2154 = vmatpush1.bf16.msra.mxu0 0
    %2155 = vmatprep.subr.bf16.mxu0 0
    %2156 = vmatpush1.bf16.msra.mxu0 0
    %2157 = vmatprep.subr.bf16.mxu0 0
    %2158 = vmatpush1.bf16.msra.mxu0 0
    %2159 = vmatprep.mubr.bf16.mxu0 0
    %2160 = vmatmul.mubr.bf16.gmra.mrb[0].mxu0 %v2071
    %v2161 = vpop.f32.mrb[0].mxu0
    %v2162 = vadd.f32 0.0, %v2161
    %v2163 = vpop.f32.mrb[0].mxu0
    %v2164 = vpop.f32.mrb[0].mxu0
    %v2165 = vadd.f32 0.0, %v2164
    %v2166 = vpop.f32.mrb[0].mxu0
    %2167 = vmatprep.mubr.bf16.mxu0 0
    %2168 = vmatmul.mubr.bf16.gmra.mrb[0].mxu0 %v2072
    %v2169 = vpop.f32.mrb[0].mxu0
    %v2170 = vadd.f32 0.0, %v2169
    %v2171 = vpop.f32.mrb[0].mxu0
    %v2172 = vpop.f32.mrb[0].mxu0
    %v2173 = vadd.f32 0.0, %v2172
    %v2174 = vpop.f32.mrb[0].mxu0
    %2175 = vmatprep.mubr.bf16.mxu0 0
    %2176 = vmatmul.mubr.bf16.gmra.mrb[0].mxu0 %v2073
    %v2177 = vpop.f32.mrb[0].mxu0
    %v2178 = vadd.f32 0.0, %v2177
    %v2179 = vpop.f32.mrb[0].mxu0
    %v2180 = vpop.f32.mrb[0].mxu0
    %v2181 = vadd.f32 0.0, %v2180
    %v2182 = vpop.f32.mrb[0].mxu0
    %2183 = vmatprep.mubr.bf16.mxu0 0
    %2184 = vmatmul.mubr.bf16.gmra.mrb[0].mxu0 %v2074
    %v2185 = vpop.f32.mrb[0].mxu0
    %v2186 = vadd.f32 0.0, %v2185
    %v2187 = vpop.f32.mrb[0].mxu0
    %v2188 = vpop.f32.mrb[0].mxu0
    %v2189 = vadd.f32 0.0, %v2188
    %v2190 = vpop.f32.mrb[0].mxu0
    %2191 = vmatprep.mubr.bf16.mxu0 0
    %2192 = vmatmul.mubr.bf16.gmra.mrb[0].mxu0 %v2075
    %v2193 = vpop.f32.mrb[0].mxu0
    %v2194 = vadd.f32 0.0, %v2193
    %v2195 = vpop.f32.mrb[0].mxu0
    %v2196 = vpop.f32.mrb[0].mxu0
    %v2197 = vadd.f32 0.0, %v2196
    %v2198 = vpop.f32.mrb[0].mxu0
    %2199 = vmatprep.mubr.bf16.mxu0 0
    %2200 = vmatmul.mubr.bf16.gmra.mrb[0].mxu0 %v2076
    %v2201 = vpop.f32.mrb[0].mxu0
    %v2202 = vadd.f32 0.0, %v2201
    %v2203 = vpop.f32.mrb[0].mxu0
    %v2204 = vpop.f32.mrb[0].mxu0
    %v2205 = vadd.f32 0.0, %v2204
    %v2206 = vpop.f32.mrb[0].mxu0
    %2207 = vmatprep.mubr.bf16.mxu0 0
    %2208 = vmatmul.mubr.bf16.gmra.mrb[0].mxu0 %v2077
    %v2209 = vpop.f32.mrb[0].mxu0
    %v2210 = vadd.f32 0.0, %v2209
    %v2211 = vpop.f32.mrb[0].mxu0
    %v2212 = vpop.f32.mrb[0].mxu0
    %v2213 = vadd.f32 0.0, %v2212
    %v2214 = vpop.f32.mrb[0].mxu0
    %2215 = vmatprep.mubr.bf16.mxu0 0
    %2216 = vmatmul.mubr.bf16.gmra.mrb[0].mxu0 %v2078
    %v2217 = vpop.f32.mrb[0].mxu0
    %v2218 = vadd.f32 0.0, %v2217
    %v2219 = vpop.f32.mrb[0].mxu0
    %v2220 = vpop.f32.mrb[0].mxu0
    %v2221 = vadd.f32 0.0, %v2220
    %v2222 = vpop.f32.mrb[0].mxu0
    %2223 = vdwg.mxu0
    %2224 = vmatprep.subr.bf16.mxu0 0
    %2225 = vmatpush1.bf16.xpose.msra.mxu0 %v2071
    %2226 = vmatprep.subr.bf16.mxu0 0
    %2227 = vmatpush1.bf16.xpose.msra.mxu0 %v2072
    %2228 = vmatprep.subr.bf16.mxu0 0
    %2229 = vmatpush1.bf16.xpose.msra.mxu0 %v2073
    %2230 = vmatprep.subr.bf16.mxu0 0
    %2231 = vmatpush1.bf16.xpose.msra.mxu0 %v2074
    %2232 = vmatprep.subr.bf16.mxu0 0
    %2233 = vmatpush1.bf16.xpose.msra.mxu0 %v2075
    %2234 = vmatprep.subr.bf16.mxu0 0
    %2235 = vmatpush1.bf16.xpose.msra.mxu0 %v2076
    %2236 = vmatprep.subr.bf16.mxu0 0
    %2237 = vmatpush1.bf16.xpose.msra.mxu0 %v2077
    %2238 = vmatprep.subr.bf16.mxu0 0
    %2239 = vmatpush1.bf16.xpose.msra.mxu0 %v2078
    %2240 = vmatprep.subr.bf16.mxu0 0
    %2241 = vmatpush1.bf16.xpose.msra.mxu0 0
    %2242 = vmatprep.subr.bf16.mxu0 0
    %2243 = vmatpush1.bf16.xpose.msra.mxu0 0
    %2244 = vmatprep.subr.bf16.mxu0 0
    %2245 = vmatpush1.bf16.xpose.msra.mxu0 0
    %2246 = vmatprep.subr.bf16.mxu0 0
    %2247 = vmatpush1.bf16.xpose.msra.mxu0 0
    %2248 = vmatprep.subr.bf16.mxu0 0
    %2249 = vmatpush1.bf16.xpose.msra.mxu0 0
    %2250 = vmatprep.subr.bf16.mxu0 0
    %2251 = vmatpush1.bf16.xpose.msra.mxu0 0
    %2252 = vmatprep.subr.bf16.mxu0 0
    %2253 = vmatpush1.bf16.xpose.msra.mxu0 0
    %2254 = vmatprep.subr.bf16.mxu0 0
    %2255 = vmatpush1.bf16.xpose.msra.mxu0 0
    %2256 = vmatprep.mubr.bf16.mxu0 0
    %2257 = vmatmul.mubr.bf16.gmra.mrb[0].mxu0 %v110
    %v2258 = vpop.f32.mrb[0].mxu0
    %v2259 = vadd.f32 0.0, %v2258
    %v2260 = vpop.f32.mrb[0].mxu0
    %v2261 = vpop.f32.mrb[0].mxu0
    %v2262 = vpop.f32.mrb[0].mxu0
    %2263 = vdwg.mxu0
    %2265 = vset.pattern.permute.xlu0 0
    %2266 = vperm.xlu0 %2265, %v2162
    %v2267 = vpop.permute.xlu0 %2266
    %2270 = vset.pattern.permute.xlu0 0
    %2271 = vperm.xlu0 %2270, %v2165
    %v2272 = vpop.permute.xlu0 %2271
    %2275 = vset.pattern.permute.xlu0 0
    %2276 = vperm.xlu0 %2275, %v2170
    %v2277 = vpop.permute.xlu0 %2276
    %2280 = vset.pattern.permute.xlu0 0
    %2281 = vperm.xlu0 %2280, %v2173
    %v2282 = vpop.permute.xlu0 %2281
    %2285 = vset.pattern.permute.xlu0 0
    %2286 = vperm.xlu0 %2285, %v2178
    %v2287 = vpop.permute.xlu0 %2286
    %2290 = vset.pattern.permute.xlu0 0
    %2291 = vperm.xlu0 %2290, %v2181
    %v2292 = vpop.permute.xlu0 %2291
    %2295 = vset.pattern.permute.xlu0 0
    %2296 = vperm.xlu0 %2295, %v2186
    %v2297 = vpop.permute.xlu0 %2296
    %2300 = vset.pattern.permute.xlu0 0
    %2301 = vperm.xlu0 %2300, %v2189
    %v2302 = vpop.permute.xlu0 %2301
    %2305 = vset.pattern.permute.xlu0 0
    %2306 = vperm.xlu0 %2305, %v2194
    %v2307 = vpop.permute.xlu0 %2306
    %2310 = vset.pattern.permute.xlu0 0
    %2311 = vperm.xlu0 %2310, %v2197
    %v2312 = vpop.permute.xlu0 %2311
    %2315 = vset.pattern.permute.xlu0 0
    %2316 = vperm.xlu0 %2315, %v2202
    %v2317 = vpop.permute.xlu0 %2316
    %2320 = vset.pattern.permute.xlu0 0
    %2321 = vperm.xlu0 %2320, %v2205
    %v2322 = vpop.permute.xlu0 %2321
    %2325 = vset.pattern.permute.xlu0 0
    %2326 = vperm.xlu0 %2325, %v2210
    %v2327 = vpop.permute.xlu0 %2326
    %2330 = vset.pattern.permute.xlu0 0
    %2331 = vperm.xlu0 %2330, %v2213
    %v2332 = vpop.permute.xlu0 %2331
    %2335 = vset.pattern.permute.xlu0 0
    %2336 = vperm.xlu0 %2335, %v2218
    %v2337 = vpop.permute.xlu0 %2336
    %2340 = vset.pattern.permute.xlu0 0
    %2341 = vperm.xlu0 %2340, %v2221
    %v2342 = vpop.permute.xlu0 %2341
    %v2344 = vlaneseq
    %v2345 = vshrl.u32 %v2344, 7
    %v2346 = vsub.s32 0, %v2345
    %v2347 = vrot.slane %v2259, %v2346
    %v2348 = vadd.f32 %v2267, %v2347
    %v2349 = vadd.f32 %v2272, %v2347
    %v2350 = vadd.f32 %v2277, %v2347
    %v2351 = vadd.f32 %v2282, %v2347
    %v2352 = vadd.f32 %v2287, %v2347
    %v2353 = vadd.f32 %v2292, %v2347
    %v2354 = vadd.f32 %v2297, %v2347
    %v2355 = vadd.f32 %v2302, %v2347
    %v2356 = vadd.f32 %v2307, %v2347
    %v2357 = vadd.f32 %v2312, %v2347
    %v2358 = vadd.f32 %v2317, %v2347
    %v2359 = vadd.f32 %v2322, %v2347
    %v2360 = vadd.f32 %v2327, %v2347
    %v2361 = vadd.f32 %v2332, %v2347
    %v2362 = vadd.f32 %v2337, %v2347
    %v2363 = vadd.f32 %v2342, %v2347
    %v2364 = vmul.f32 %v2348, 0.2
    %v2365 = vmul.f32 %v2349, 0.2
    %v2366 = vmul.f32 %v2350, 0.2
    %v2367 = vmul.f32 %v2351, 0.2
    %v2368 = vmul.f32 %v2352, 0.2
    %v2369 = vmul.f32 %v2353, 0.2
    %v2370 = vmul.f32 %v2354, 0.2
    %v2371 = vmul.f32 %v2355, 0.2
    %v2372 = vmul.f32 %v2356, 0.2
    %v2373 = vmul.f32 %v2357, 0.2
    %v2374 = vmul.f32 %v2358, 0.2
    %v2375 = vmul.f32 %v2359, 0.2
    %v2376 = vmul.f32 %v2360, 0.2
    %v2377 = vmul.f32 %v2361, 0.2
    %v2378 = vmul.f32 %v2362, 0.2
    %v2379 = vmul.f32 %v2363, 0.2
    %v2380 = vmax.f32 %v2348, %v2364
    %v2381 = vmax.f32 %v2349, %v2365
    %v2382 = vmax.f32 %v2350, %v2366
    %v2383 = vmax.f32 %v2351, %v2367
    %v2384 = vmax.f32 %v2352, %v2368
    %v2385 = vmax.f32 %v2353, %v2369
    %v2386 = vmax.f32 %v2354, %v2370
    %v2387 = vmax.f32 %v2355, %v2371
    %v2388 = vmax.f32 %v2356, %v2372
    %v2389 = vmax.f32 %v2357, %v2373
    %v2390 = vmax.f32 %v2358, %v2374
    %v2391 = vmax.f32 %v2359, %v2375
    %v2392 = vmax.f32 %v2360, %v2376
    %v2393 = vmax.f32 %v2361, %v2377
    %v2394 = vmax.f32 %v2362, %v2378
    %v2395 = vmax.f32 %v2363, %v2379
    %v2396 = vadd.f32 %v2380, %v193
    %v2397 = vadd.f32 %v2381, %v194
    %v2398 = vadd.f32 %v2382, %v195
    %v2399 = vadd.f32 %v2383, %v196
    %v2400 = vadd.f32 %v2384, %v197
    %v2401 = vadd.f32 %v2385, %v198
    %v2402 = vadd.f32 %v2386, %v199
    %v2403 = vadd.f32 %v2387, %v200
    %v2404 = vadd.f32 %v2388, %v201
    %v2405 = vadd.f32 %v2389, %v202
    %v2406 = vadd.f32 %v2390, %v203
    %v2407 = vadd.f32 %v2391, %v204
    %v2408 = vadd.f32 %v2392, %v205
    %v2409 = vadd.f32 %v2393, %v206
    %v2410 = vadd.f32 %v2394, %v207
    %v2411 = vadd.f32 %v2395, %v208
    %2412 = vmax.xlane.f32.xlu0 %v2396
    %v2413 = vpop.xlane.xlu0 %2412
    %2414 = vmax.xlane.f32.xlu0 %v2397
    %v2415 = vpop.xlane.xlu0 %2414
    %2416 = vmax.xlane.f32.xlu0 %v2398
    %v2417 = vpop.xlane.xlu0 %2416
    %2418 = vmax.xlane.f32.xlu0 %v2399
    %v2419 = vpop.xlane.xlu0 %2418
    %2420 = vmax.xlane.f32.xlu0 %v2400
    %v2421 = vpop.xlane.xlu0 %2420
    %2422 = vmax.xlane.f32.xlu0 %v2401
    %v2423 = vpop.xlane.xlu0 %2422
    %2424 = vmax.xlane.f32.xlu0 %v2402
    %v2425 = vpop.xlane.xlu0 %2424
    %2426 = vmax.xlane.f32.xlu0 %v2403
    %v2427 = vpop.xlane.xlu0 %2426
    %2428 = vmax.xlane.f32.xlu0 %v2404
    %v2429 = vpop.xlane.xlu0 %2428
    %2430 = vmax.xlane.f32.xlu0 %v2405
    %v2431 = vpop.xlane.xlu0 %2430
    %2432 = vmax.xlane.f32.xlu0 %v2406
    %v2433 = vpop.xlane.xlu0 %2432
    %2434 = vmax.xlane.f32.xlu0 %v2407
    %v2435 = vpop.xlane.xlu0 %2434
    %2436 = vmax.xlane.f32.xlu0 %v2408
    %v2437 = vpop.xlane.xlu0 %2436
    %2438 = vmax.xlane.f32.xlu0 %v2409
    %v2439 = vpop.xlane.xlu0 %2438
    %2440 = vmax.xlane.f32.xlu0 %v2410
    %v2441 = vpop.xlane.xlu0 %2440
    %2442 = vmax.xlane.f32.xlu0 %v2411
    %v2443 = vpop.xlane.xlu0 %2442
    %v2444 = vsub.f32 %v2396, %v2413
    %v2445 = vsub.f32 %v2397, %v2415
    %v2446 = vsub.f32 %v2398, %v2417
    %v2447 = vsub.f32 %v2399, %v2419
    %v2448 = vsub.f32 %v2400, %v2421
    %v2449 = vsub.f32 %v2401, %v2423
    %v2450 = vsub.f32 %v2402, %v2425
    %v2451 = vsub.f32 %v2403, %v2427
    %v2452 = vsub.f32 %v2404, %v2429
    %v2453 = vsub.f32 %v2405, %v2431
    %v2454 = vsub.f32 %v2406, %v2433
    %v2455 = vsub.f32 %v2407, %v2435
    %v2456 = vsub.f32 %v2408, %v2437
    %v2457 = vsub.f32 %v2409, %v2439
    %v2458 = vsub.f32 %v2410, %v2441
    %v2459 = vsub.f32 %v2411, %v2443
    %v2460 = vmul.f32 %v2444, 1.442695
    %v2461 = vpow.pop %v2460
    %v2462 = vmul.f32 %v2445, 1.442695
    %v2463 = vpow.pop %v2462
    %v2464 = vmul.f32 %v2446, 1.442695
    %v2465 = vpow.pop %v2464
    %v2466 = vmul.f32 %v2447, 1.442695
    %v2467 = vpow.pop %v2466
    %v2468 = vmul.f32 %v2448, 1.442695
    %v2469 = vpow.pop %v2468
    %v2470 = vmul.f32 %v2449, 1.442695
    %v2471 = vpow.pop %v2470
    %v2472 = vmul.f32 %v2450, 1.442695
    %v2473 = vpow.pop %v2472
    %v2474 = vmul.f32 %v2451, 1.442695
    %v2475 = vpow.pop %v2474
    %v2476 = vmul.f32 %v2452, 1.442695
    %v2477 = vpow.pop %v2476
    %v2478 = vmul.f32 %v2453, 1.442695
    %v2479 = vpow.pop %v2478
    %v2480 = vmul.f32 %v2454, 1.442695
    %v2481 = vpow.pop %v2480
    %v2482 = vmul.f32 %v2455, 1.442695
    %v2483 = vpow.pop %v2482
    %v2484 = vmul.f32 %v2456, 1.442695
    %v2485 = vpow.pop %v2484
    %v2486 = vmul.f32 %v2457, 1.442695
    %v2487 = vpow.pop %v2486
    %v2488 = vmul.f32 %v2458, 1.442695
    %v2489 = vpow.pop %v2488
    %v2490 = vmul.f32 %v2459, 1.442695
    %v2491 = vpow.pop %v2490
    %v2492 = vpack.c.bf16 %v2463, %v2461
    %v2493 = vpack.c.bf16 %v2467, %v2465
    %v2494 = vpack.c.bf16 %v2471, %v2469
    %v2495 = vpack.c.bf16 %v2475, %v2473
    %v2496 = vpack.c.bf16 %v2479, %v2477
    %v2497 = vpack.c.bf16 %v2483, %v2481
    %v2498 = vpack.c.bf16 %v2487, %v2485
    %v2499 = vpack.c.bf16 %v2491, %v2489
    %v2501 = vsel %vm273, %v2071, 1065369472
    %v2504 = vsel %vm273, %v2072, 1065369472
    %v2507 = vsel %vm273, %v2073, 1065369472
    %v2510 = vsel %vm273, %v2074, 1065369472
    %v2513 = vsel %vm273, %v2075, 1065369472
    %v2516 = vsel %vm273, %v2076, 1065369472
    %v2519 = vsel %vm273, %v2077, 1065369472
    %v2522 = vsel %vm273, %v2078, 1065369472
    %2524 = vmatprep.subr.bf16.mxu0 0
    %2525 = vmatpush1.bf16.msra.mxu0 %v2501
    %2526 = vmatprep.subr.bf16.mxu0 0
    %2527 = vmatpush1.bf16.msra.mxu0 %v2504
    %2528 = vmatprep.subr.bf16.mxu0 0
    %2529 = vmatpush1.bf16.msra.mxu0 %v2507
    %2530 = vmatprep.subr.bf16.mxu0 0
    %2531 = vmatpush1.bf16.msra.mxu0 %v2510
    %2532 = vmatprep.subr.bf16.mxu0 0
    %2533 = vmatpush1.bf16.msra.mxu0 %v2513
    %2534 = vmatprep.subr.bf16.mxu0 0
    %2535 = vmatpush1.bf16.msra.mxu0 %v2516
    %2536 = vmatprep.subr.bf16.mxu0 0
    %2537 = vmatpush1.bf16.msra.mxu0 %v2519
    %2538 = vmatprep.subr.bf16.mxu0 0
    %2539 = vmatpush1.bf16.msra.mxu0 %v2522
    %2540 = vmatprep.subr.bf16.mxu0 0
    %2541 = vmatpush1.bf16.msra.mxu0 0
    %2542 = vmatprep.subr.bf16.mxu0 0
    %2543 = vmatpush1.bf16.msra.mxu0 0
    %2544 = vmatprep.subr.bf16.mxu0 0
    %2545 = vmatpush1.bf16.msra.mxu0 0
    %2546 = vmatprep.subr.bf16.mxu0 0
    %2547 = vmatpush1.bf16.msra.mxu0 0
    %2548 = vmatprep.subr.bf16.mxu0 0
    %2549 = vmatpush1.bf16.msra.mxu0 0
    %2550 = vmatprep.subr.bf16.mxu0 0
    %2551 = vmatpush1.bf16.msra.mxu0 0
    %2552 = vmatprep.subr.bf16.mxu0 0
    %2553 = vmatpush1.bf16.msra.mxu0 0
    %2554 = vmatprep.subr.bf16.mxu0 0
    %2555 = vmatpush1.bf16.msra.mxu0 0
    %2556 = vmatprep.mubr.bf16.mxu0 0
    %2557 = vmatmul.mubr.bf16.gmra.mrb[0].mxu0 %v2492
    %v2558 = vpop.f32.mrb[0].mxu0
    %v2559 = vadd.f32 0.0, %v2558
    %v2560 = vpop.f32.mrb[0].mxu0
    %v2561 = vpop.f32.mrb[0].mxu0
    %v2562 = vadd.f32 0.0, %v2561
    %v2563 = vpop.f32.mrb[0].mxu0
    %2564 = vmatprep.mubr.bf16.mxu0 0
    %2565 = vmatmul.mubr.bf16.gmra.mrb[0].mxu0 %v2493
    %v2566 = vpop.f32.mrb[0].mxu0
    %v2567 = vadd.f32 0.0, %v2566
    %v2568 = vpop.f32.mrb[0].mxu0
    %v2569 = vpop.f32.mrb[0].mxu0
    %v2570 = vadd.f32 0.0, %v2569
    %v2571 = vpop.f32.mrb[0].mxu0
    %2572 = vmatprep.mubr.bf16.mxu0 0
    %2573 = vmatmul.mubr.bf16.gmra.mrb[0].mxu0 %v2494
    %v2574 = vpop.f32.mrb[0].mxu0
    %v2575 = vadd.f32 0.0, %v2574
    %v2576 = vpop.f32.mrb[0].mxu0
    %v2577 = vpop.f32.mrb[0].mxu0
    %v2578 = vadd.f32 0.0, %v2577
    %v2579 = vpop.f32.mrb[0].mxu0
    %2580 = vmatprep.mubr.bf16.mxu0 0
    %2581 = vmatmul.mubr.bf16.gmra.mrb[0].mxu0 %v2495
    %v2582 = vpop.f32.mrb[0].mxu0
    %v2583 = vadd.f32 0.0, %v2582
    %v2584 = vpop.f32.mrb[0].mxu0
    %v2585 = vpop.f32.mrb[0].mxu0
    %v2586 = vadd.f32 0.0, %v2585
    %v2587 = vpop.f32.mrb[0].mxu0
    %2588 = vmatprep.mubr.bf16.mxu0 0
    %2589 = vmatmul.mubr.bf16.gmra.mrb[0].mxu0 %v2496
    %v2590 = vpop.f32.mrb[0].mxu0
    %v2591 = vadd.f32 0.0, %v2590
    %v2592 = vpop.f32.mrb[0].mxu0
    %v2593 = vpop.f32.mrb[0].mxu0
    %v2594 = vadd.f32 0.0, %v2593
    %v2595 = vpop.f32.mrb[0].mxu0
    %2596 = vmatprep.mubr.bf16.mxu0 0
    %2597 = vmatmul.mubr.bf16.gmra.mrb[0].mxu0 %v2497
    %v2598 = vpop.f32.mrb[0].mxu0
    %v2599 = vadd.f32 0.0, %v2598
    %v2600 = vpop.f32.mrb[0].mxu0
    %v2601 = vpop.f32.mrb[0].mxu0
    %v2602 = vadd.f32 0.0, %v2601
    %v2603 = vpop.f32.mrb[0].mxu0
    %2604 = vmatprep.mubr.bf16.mxu0 0
    %2605 = vmatmul.mubr.bf16.gmra.mrb[0].mxu0 %v2498
    %v2606 = vpop.f32.mrb[0].mxu0
    %v2607 = vadd.f32 0.0, %v2606
    %v2608 = vpop.f32.mrb[0].mxu0
    %v2609 = vpop.f32.mrb[0].mxu0
    %v2610 = vadd.f32 0.0, %v2609
    %v2611 = vpop.f32.mrb[0].mxu0
    %2612 = vmatprep.mubr.bf16.mxu0 0
    %2613 = vmatmul.mubr.bf16.gmra.mrb[0].mxu0 %v2499
    %v2614 = vpop.f32.mrb[0].mxu0
    %v2615 = vadd.f32 0.0, %v2614
    %v2616 = vpop.f32.mrb[0].mxu0
    %v2617 = vpop.f32.mrb[0].mxu0
    %v2618 = vadd.f32 0.0, %v2617
    %v2619 = vpop.f32.mrb[0].mxu0
    %2620 = vdwg.mxu0
    %v2621 = vrcp.pop %v2559
    %v2622 = vrcp.pop %v2562
    %v2623 = vrcp.pop %v2567
    %v2624 = vrcp.pop %v2570
    %v2625 = vrcp.pop %v2575
    %v2626 = vrcp.pop %v2578
    %v2627 = vrcp.pop %v2583
    %v2628 = vrcp.pop %v2586
    %v2629 = vrcp.pop %v2591
    %v2630 = vrcp.pop %v2594
    %v2631 = vrcp.pop %v2599
    %v2632 = vrcp.pop %v2602
    %v2633 = vrcp.pop %v2607
    %v2634 = vrcp.pop %v2610
    %v2635 = vrcp.pop %v2615
    %v2636 = vrcp.pop %v2618
    %v2637 = vmul.f32 %v2559, %v2621
    %v2638 = vmul.f32 %v2562, %v2622
    %v2639 = vmul.f32 %v2567, %v2623
    %v2640 = vmul.f32 %v2570, %v2624
    %v2641 = vmul.f32 %v2575, %v2625
    %v2642 = vmul.f32 %v2578, %v2626
    %v2643 = vmul.f32 %v2583, %v2627
    %v2644 = vmul.f32 %v2586, %v2628
    %v2645 = vmul.f32 %v2591, %v2629
    %v2646 = vmul.f32 %v2594, %v2630
    %v2647 = vmul.f32 %v2599, %v2631
    %v2648 = vmul.f32 %v2602, %v2632
    %v2649 = vmul.f32 %v2607, %v2633
    %v2650 = vmul.f32 %v2610, %v2634
    %v2651 = vmul.f32 %v2615, %v2635
    %v2652 = vmul.f32 %v2618, %v2636
    %v2653 = vsub.f32 2.0, %v2637
    %v2654 = vsub.f32 2.0, %v2638
    %v2655 = vsub.f32 2.0, %v2639
    %v2656 = vsub.f32 2.0, %v2640
    %v2657 = vsub.f32 2.0, %v2641
    %v2658 = vsub.f32 2.0, %v2642
    %v2659 = vsub.f32 2.0, %v2643
    %v2660 = vsub.f32 2.0, %v2644
    %v2661 = vsub.f32 2.0, %v2645
    %v2662 = vsub.f32 2.0, %v2646
    %v2663 = vsub.f32 2.0, %v2647
    %v2664 = vsub.f32 2.0, %v2648
    %v2665 = vsub.f32 2.0, %v2649
    %v2666 = vsub.f32 2.0, %v2650
    %v2667 = vsub.f32 2.0, %v2651
    %v2668 = vsub.f32 2.0, %v2652
    %v2669 = vmul.f32 %v2621, %v2653
    %v2670 = vmul.f32 %v2622, %v2654
    %v2671 = vmul.f32 %v2623, %v2655
    %v2672 = vmul.f32 %v2624, %v2656
    %v2673 = vmul.f32 %v2625, %v2657
    %v2674 = vmul.f32 %v2626, %v2658
    %v2675 = vmul.f32 %v2627, %v2659
    %v2676 = vmul.f32 %v2628, %v2660
    %v2677 = vmul.f32 %v2629, %v2661
    %v2678 = vmul.f32 %v2630, %v2662
    %v2679 = vmul.f32 %v2631, %v2663
    %v2680 = vmul.f32 %v2632, %v2664
    %v2681 = vmul.f32 %v2633, %v2665
    %v2682 = vmul.f32 %v2634, %v2666
    %v2683 = vmul.f32 %v2635, %v2667
    %v2684 = vmul.f32 %v2636, %v2668
    %2686 = vset.pattern.permute.xlu0 64
    %2687 = vperm.xlu0 %2686, %v2669
    %v2688 = vpop.permute.xlu0 %2687
    %2691 = vset.pattern.permute.xlu0 64
    %2692 = vperm.xlu0 %2691, %v2670
    %v2693 = vpop.permute.xlu0 %2692
    %2696 = vset.pattern.permute.xlu0 64
    %2697 = vperm.xlu0 %2696, %v2671
    %v2698 = vpop.permute.xlu0 %2697
    %2701 = vset.pattern.permute.xlu0 64
    %2702 = vperm.xlu0 %2701, %v2672
    %v2703 = vpop.permute.xlu0 %2702
    %2706 = vset.pattern.permute.xlu0 64
    %2707 = vperm.xlu0 %2706, %v2673
    %v2708 = vpop.permute.xlu0 %2707
    %2711 = vset.pattern.permute.xlu0 64
    %2712 = vperm.xlu0 %2711, %v2674
    %v2713 = vpop.permute.xlu0 %2712
    %2716 = vset.pattern.permute.xlu0 64
    %2717 = vperm.xlu0 %2716, %v2675
    %v2718 = vpop.permute.xlu0 %2717
    %2721 = vset.pattern.permute.xlu0 64
    %2722 = vperm.xlu0 %2721, %v2676
    %v2723 = vpop.permute.xlu0 %2722
    %2726 = vset.pattern.permute.xlu0 64
    %2727 = vperm.xlu0 %2726, %v2677
    %v2728 = vpop.permute.xlu0 %2727
    %2731 = vset.pattern.permute.xlu0 64
    %2732 = vperm.xlu0 %2731, %v2678
    %v2733 = vpop.permute.xlu0 %2732
    %2736 = vset.pattern.permute.xlu0 64
    %2737 = vperm.xlu0 %2736, %v2679
    %v2738 = vpop.permute.xlu0 %2737
    %2741 = vset.pattern.permute.xlu0 64
    %2742 = vperm.xlu0 %2741, %v2680
    %v2743 = vpop.permute.xlu0 %2742
    %2746 = vset.pattern.permute.xlu0 64
    %2747 = vperm.xlu0 %2746, %v2681
    %v2748 = vpop.permute.xlu0 %2747
    %2751 = vset.pattern.permute.xlu0 64
    %2752 = vperm.xlu0 %2751, %v2682
    %v2753 = vpop.permute.xlu0 %2752
    %2756 = vset.pattern.permute.xlu0 64
    %2757 = vperm.xlu0 %2756, %v2683
    %v2758 = vpop.permute.xlu0 %2757
    %2761 = vset.pattern.permute.xlu0 64
    %2762 = vperm.xlu0 %2761, %v2684
    %v2763 = vpop.permute.xlu0 %2762
    %v2765 = vmul.f32 %v2559, %v2688
    %v2766 = vmul.f32 %v2562, %v2693
    %v2767 = vmul.f32 %v2567, %v2698
    %v2768 = vmul.f32 %v2570, %v2703
    %v2769 = vmul.f32 %v2575, %v2708
    %v2770 = vmul.f32 %v2578, %v2713
    %v2771 = vmul.f32 %v2583, %v2718
    %v2772 = vmul.f32 %v2586, %v2723
    %v2773 = vmul.f32 %v2591, %v2728
    %v2774 = vmul.f32 %v2594, %v2733
    %v2775 = vmul.f32 %v2599, %v2738
    %v2776 = vmul.f32 %v2602, %v2743
    %v2777 = vmul.f32 %v2607, %v2748
    %v2778 = vmul.f32 %v2610, %v2753
    %v2779 = vmul.f32 %v2615, %v2758
    %v2780 = vmul.f32 %v2618, %v2763
    %2781 = vset.pattern.permute.xlu0 1
    %2782 = vperm.xlu0 %2781, %v2162
    %v2783 = vpop.permute.xlu0 %2782
    %2785 = vset.pattern.permute.xlu0 1
    %2786 = vperm.xlu0 %2785, %v2165
    %v2787 = vpop.permute.xlu0 %2786
    %2789 = vset.pattern.permute.xlu0 1
    %2790 = vperm.xlu0 %2789, %v2170
    %v2791 = vpop.permute.xlu0 %2790
    %2793 = vset.pattern.permute.xlu0 1
    %2794 = vperm.xlu0 %2793, %v2173
    %v2795 = vpop.permute.xlu0 %2794
    %2797 = vset.pattern.permute.xlu0 1
    %2798 = vperm.xlu0 %2797, %v2178
    %v2799 = vpop.permute.xlu0 %2798
    %2801 = vset.pattern.permute.xlu0 1
    %2802 = vperm.xlu0 %2801, %v2181
    %v2803 = vpop.permute.xlu0 %2802
    %2805 = vset.pattern.permute.xlu0 1
    %2806 = vperm.xlu0 %2805, %v2186
    %v2807 = vpop.permute.xlu0 %2806
    %2809 = vset.pattern.permute.xlu0 1
    %2810 = vperm.xlu0 %2809, %v2189
    %v2811 = vpop.permute.xlu0 %2810
    %2813 = vset.pattern.permute.xlu0 1
    %2814 = vperm.xlu0 %2813, %v2194
    %v2815 = vpop.permute.xlu0 %2814
    %2817 = vset.pattern.permute.xlu0 1
    %2818 = vperm.xlu0 %2817, %v2197
    %v2819 = vpop.permute.xlu0 %2818
    %2821 = vset.pattern.permute.xlu0 1
    %2822 = vperm.xlu0 %2821, %v2202
    %v2823 = vpop.permute.xlu0 %2822
    %2825 = vset.pattern.permute.xlu0 1
    %2826 = vperm.xlu0 %2825, %v2205
    %v2827 = vpop.permute.xlu0 %2826
    %2829 = vset.pattern.permute.xlu0 1
    %2830 = vperm.xlu0 %2829, %v2210
    %v2831 = vpop.permute.xlu0 %2830
    %2833 = vset.pattern.permute.xlu0 1
    %2834 = vperm.xlu0 %2833, %v2213
    %v2835 = vpop.permute.xlu0 %2834
    %2837 = vset.pattern.permute.xlu0 1
    %2838 = vperm.xlu0 %2837, %v2218
    %v2839 = vpop.permute.xlu0 %2838
    %2841 = vset.pattern.permute.xlu0 1
    %2842 = vperm.xlu0 %2841, %v2221
    %v2843 = vpop.permute.xlu0 %2842
    %v2845 = vlaneseq
    %v2846 = vshrl.u32 %v2845, 7
    %v2847 = vsub.s32 1, %v2846
    %v2848 = vrot.slane %v2259, %v2847
    %v2849 = vadd.f32 %v2783, %v2848
    %v2850 = vadd.f32 %v2787, %v2848
    %v2851 = vadd.f32 %v2791, %v2848
    %v2852 = vadd.f32 %v2795, %v2848
    %v2853 = vadd.f32 %v2799, %v2848
    %v2854 = vadd.f32 %v2803, %v2848
    %v2855 = vadd.f32 %v2807, %v2848
    %v2856 = vadd.f32 %v2811, %v2848
    %v2857 = vadd.f32 %v2815, %v2848
    %v2858 = vadd.f32 %v2819, %v2848
    %v2859 = vadd.f32 %v2823, %v2848
    %v2860 = vadd.f32 %v2827, %v2848
    %v2861 = vadd.f32 %v2831, %v2848
    %v2862 = vadd.f32 %v2835, %v2848
    %v2863 = vadd.f32 %v2839, %v2848
    %v2864 = vadd.f32 %v2843, %v2848
    %v2865 = vmul.f32 %v2849, 0.2
    %v2866 = vmul.f32 %v2850, 0.2
    %v2867 = vmul.f32 %v2851, 0.2
    %v2868 = vmul.f32 %v2852, 0.2
    %v2869 = vmul.f32 %v2853, 0.2
    %v2870 = vmul.f32 %v2854, 0.2
    %v2871 = vmul.f32 %v2855, 0.2
    %v2872 = vmul.f32 %v2856, 0.2
    %v2873 = vmul.f32 %v2857, 0.2
    %v2874 = vmul.f32 %v2858, 0.2
    %v2875 = vmul.f32 %v2859, 0.2
    %v2876 = vmul.f32 %v2860, 0.2
    %v2877 = vmul.f32 %v2861, 0.2
    %v2878 = vmul.f32 %v2862, 0.2
    %v2879 = vmul.f32 %v2863, 0.2
    %v2880 = vmul.f32 %v2864, 0.2
    %v2881 = vmax.f32 %v2849, %v2865
    %v2882 = vmax.f32 %v2850, %v2866
    %v2883 = vmax.f32 %v2851, %v2867
    %v2884 = vmax.f32 %v2852, %v2868
    %v2885 = vmax.f32 %v2853, %v2869
    %v2886 = vmax.f32 %v2854, %v2870
    %v2887 = vmax.f32 %v2855, %v2871
    %v2888 = vmax.f32 %v2856, %v2872
    %v2889 = vmax.f32 %v2857, %v2873
    %v2890 = vmax.f32 %v2858, %v2874
    %v2891 = vmax.f32 %v2859, %v2875
    %v2892 = vmax.f32 %v2860, %v2876
    %v2893 = vmax.f32 %v2861, %v2877
    %v2894 = vmax.f32 %v2862, %v2878
    %v2895 = vmax.f32 %v2863, %v2879
    %v2896 = vmax.f32 %v2864, %v2880
    %v2897 = vadd.f32 %v2881, %v193
    %v2898 = vadd.f32 %v2882, %v194
    %v2899 = vadd.f32 %v2883, %v195
    %v2900 = vadd.f32 %v2884, %v196
    %v2901 = vadd.f32 %v2885, %v197
    %v2902 = vadd.f32 %v2886, %v198
    %v2903 = vadd.f32 %v2887, %v199
    %v2904 = vadd.f32 %v2888, %v200
    %v2905 = vadd.f32 %v2889, %v201
    %v2906 = vadd.f32 %v2890, %v202
    %v2907 = vadd.f32 %v2891, %v203
    %v2908 = vadd.f32 %v2892, %v204
    %v2909 = vadd.f32 %v2893, %v205
    %v2910 = vadd.f32 %v2894, %v206
    %v2911 = vadd.f32 %v2895, %v207
    %v2912 = vadd.f32 %v2896, %v208
    %2913 = vmax.xlane.f32.xlu0 %v2897
    %v2914 = vpop.xlane.xlu0 %2913
    %2915 = vmax.xlane.f32.xlu0 %v2898
    %v2916 = vpop.xlane.xlu0 %2915
    %2917 = vmax.xlane.f32.xlu0 %v2899
    %v2918 = vpop.xlane.xlu0 %2917
    %2919 = vmax.xlane.f32.xlu0 %v2900
    %v2920 = vpop.xlane.xlu0 %2919
    %2921 = vmax.xlane.f32.xlu0 %v2901
    %v2922 = vpop.xlane.xlu0 %2921
    %2923 = vmax.xlane.f32.xlu0 %v2902
    %v2924 = vpop.xlane.xlu0 %2923
    %2925 = vmax.xlane.f32.xlu0 %v2903
    %v2926 = vpop.xlane.xlu0 %2925
    %2927 = vmax.xlane.f32.xlu0 %v2904
    %v2928 = vpop.xlane.xlu0 %2927
    %2929 = vmax.xlane.f32.xlu0 %v2905
    %v2930 = vpop.xlane.xlu0 %2929
    %2931 = vmax.xlane.f32.xlu0 %v2906
    %v2932 = vpop.xlane.xlu0 %2931
    %2933 = vmax.xlane.f32.xlu0 %v2907
    %v2934 = vpop.xlane.xlu0 %2933
    %2935 = vmax.xlane.f32.xlu0 %v2908
    %v2936 = vpop.xlane.xlu0 %2935
    %2937 = vmax.xlane.f32.xlu0 %v2909
    %v2938 = vpop.xlane.xlu0 %2937
    %2939 = vmax.xlane.f32.xlu0 %v2910
    %v2940 = vpop.xlane.xlu0 %2939
    %2941 = vmax.xlane.f32.xlu0 %v2911
    %v2942 = vpop.xlane.xlu0 %2941
    %2943 = vmax.xlane.f32.xlu0 %v2912
    %v2944 = vpop.xlane.xlu0 %2943
    %v2945 = vsub.f32 %v2897, %v2914
    %v2946 = vsub.f32 %v2898, %v2916
    %v2947 = vsub.f32 %v2899, %v2918
    %v2948 = vsub.f32 %v2900, %v2920
    %v2949 = vsub.f32 %v2901, %v2922
    %v2950 = vsub.f32 %v2902, %v2924
    %v2951 = vsub.f32 %v2903, %v2926
    %v2952 = vsub.f32 %v2904, %v2928
    %v2953 = vsub.f32 %v2905, %v2930
    %v2954 = vsub.f32 %v2906, %v2932
    %v2955 = vsub.f32 %v2907, %v2934
    %v2956 = vsub.f32 %v2908, %v2936
    %v2957 = vsub.f32 %v2909, %v2938
    %v2958 = vsub.f32 %v2910, %v2940
    %v2959 = vsub.f32 %v2911, %v2942
    %v2960 = vsub.f32 %v2912, %v2944
    %v2961 = vmul.f32 %v2945, 1.442695
    %v2962 = vpow.pop %v2961
    %v2963 = vmul.f32 %v2946, 1.442695
    %v2964 = vpow.pop %v2963
    %v2965 = vmul.f32 %v2947, 1.442695
    %v2966 = vpow.pop %v2965
    %v2967 = vmul.f32 %v2948, 1.442695
    %v2968 = vpow.pop %v2967
    %v2969 = vmul.f32 %v2949, 1.442695
    %v2970 = vpow.pop %v2969
    %v2971 = vmul.f32 %v2950, 1.442695
    %v2972 = vpow.pop %v2971
    %v2973 = vmul.f32 %v2951, 1.442695
    %v2974 = vpow.pop %v2973
    %v2975 = vmul.f32 %v2952, 1.442695
    %v2976 = vpow.pop %v2975
    %v2977 = vmul.f32 %v2953, 1.442695
    %v2978 = vpow.pop %v2977
    %v2979 = vmul.f32 %v2954, 1.442695
    %v2980 = vpow.pop %v2979
    %v2981 = vmul.f32 %v2955, 1.442695
    %v2982 = vpow.pop %v2981
    %v2983 = vmul.f32 %v2956, 1.442695
    %v2984 = vpow.pop %v2983
    %v2985 = vmul.f32 %v2957, 1.442695
    %v2986 = vpow.pop %v2985
    %v2987 = vmul.f32 %v2958, 1.442695
    %v2988 = vpow.pop %v2987
    %v2989 = vmul.f32 %v2959, 1.442695
    %v2990 = vpow.pop %v2989
    %v2991 = vmul.f32 %v2960, 1.442695
    %v2992 = vpow.pop %v2991
    %v2993 = vpack.c.bf16 %v2964, %v2962
    %v2994 = vpack.c.bf16 %v2968, %v2966
    %v2995 = vpack.c.bf16 %v2972, %v2970
    %v2996 = vpack.c.bf16 %v2976, %v2974
    %v2997 = vpack.c.bf16 %v2980, %v2978
    %v2998 = vpack.c.bf16 %v2984, %v2982
    %v2999 = vpack.c.bf16 %v2988, %v2986
    %v3000 = vpack.c.bf16 %v2992, %v2990
    %3009 = vrot.lane.b32.xlu0 %v2071, 64
    %v3010 = vpop.permute.xlu0 %3009
    %3011 = vrot.lane.b32.xlu0 %v2072, 64
    %v3012 = vpop.permute.xlu0 %3011
    %3013 = vrot.lane.b32.xlu0 %v2073, 64
    %v3014 = vpop.permute.xlu0 %3013
    %3015 = vrot.lane.b32.xlu0 %v2074, 64
    %v3016 = vpop.permute.xlu0 %3015
    %3017 = vrot.lane.b32.xlu0 %v2075, 64
    %v3018 = vpop.permute.xlu0 %3017
    %3019 = vrot.lane.b32.xlu0 %v2076, 64
    %v3020 = vpop.permute.xlu0 %3019
    %3021 = vrot.lane.b32.xlu0 %v2077, 64
    %v3022 = vpop.permute.xlu0 %3021
    %3023 = vrot.lane.b32.xlu0 %v2078, 64
    %v3024 = vpop.permute.xlu0 %3023
    %v3026 = vsel %vm273, %v3010, 1065369472
    %v3029 = vsel %vm273, %v3012, 1065369472
    %v3032 = vsel %vm273, %v3014, 1065369472
    %v3035 = vsel %vm273, %v3016, 1065369472
    %v3038 = vsel %vm273, %v3018, 1065369472
    %v3041 = vsel %vm273, %v3020, 1065369472
    %v3044 = vsel %vm273, %v3022, 1065369472
    %v3047 = vsel %vm273, %v3024, 1065369472
    %3049 = vmatprep.subr.bf16.mxu0 0
    %3050 = vmatpush1.bf16.msra.mxu0 %v3026
    %3051 = vmatprep.subr.bf16.mxu0 0
    %3052 = vmatpush1.bf16.msra.mxu0 %v3029
    %3053 = vmatprep.subr.bf16.mxu0 0
    %3054 = vmatpush1.bf16.msra.mxu0 %v3032
    %3055 = vmatprep.subr.bf16.mxu0 0
    %3056 = vmatpush1.bf16.msra.mxu0 %v3035
    %3057 = vmatprep.subr.bf16.mxu0 0
    %3058 = vmatpush1.bf16.msra.mxu0 %v3038
    %3059 = vmatprep.subr.bf16.mxu0 0
    %3060 = vmatpush1.bf16.msra.mxu0 %v3041
    %3061 = vmatprep.subr.bf16.mxu0 0
    %3062 = vmatpush1.bf16.msra.mxu0 %v3044
    %3063 = vmatprep.subr.bf16.mxu0 0
    %3064 = vmatpush1.bf16.msra.mxu0 %v3047
    %3065 = vmatprep.subr.bf16.mxu0 0
    %3066 = vmatpush1.bf16.msra.mxu0 0
    %3067 = vmatprep.subr.bf16.mxu0 0
    %3068 = vmatpush1.bf16.msra.mxu0 0
    %3069 = vmatprep.subr.bf16.mxu0 0
    %3070 = vmatpush1.bf16.msra.mxu0 0
    %3071 = vmatprep.subr.bf16.mxu0 0
    %3072 = vmatpush1.bf16.msra.mxu0 0
    %3073 = vmatprep.subr.bf16.mxu0 0
    %3074 = vmatpush1.bf16.msra.mxu0 0
    %3075 = vmatprep.subr.bf16.mxu0 0
    %3076 = vmatpush1.bf16.msra.mxu0 0
    %3077 = vmatprep.subr.bf16.mxu0 0
    %3078 = vmatpush1.bf16.msra.mxu0 0
    %3079 = vmatprep.subr.bf16.mxu0 0
    %3080 = vmatpush1.bf16.msra.mxu0 0
    %3081 = vmatprep.mubr.bf16.mxu0 0
    %3082 = vmatmul.mubr.bf16.gmra.mrb[0].mxu0 %v2993
    %v3083 = vpop.f32.mrb[0].mxu0
    %v3084 = vadd.f32 0.0, %v3083
    %v3085 = vpop.f32.mrb[0].mxu0
    %v3086 = vpop.f32.mrb[0].mxu0
    %v3087 = vadd.f32 0.0, %v3086
    %v3088 = vpop.f32.mrb[0].mxu0
    %3089 = vmatprep.mubr.bf16.mxu0 0
    %3090 = vmatmul.mubr.bf16.gmra.mrb[0].mxu0 %v2994
    %v3091 = vpop.f32.mrb[0].mxu0
    %v3092 = vadd.f32 0.0, %v3091
    %v3093 = vpop.f32.mrb[0].mxu0
    %v3094 = vpop.f32.mrb[0].mxu0
    %v3095 = vadd.f32 0.0, %v3094
    %v3096 = vpop.f32.mrb[0].mxu0
    %3097 = vmatprep.mubr.bf16.mxu0 0
    %3098 = vmatmul.mubr.bf16.gmra.mrb[0].mxu0 %v2995
    %v3099 = vpop.f32.mrb[0].mxu0
    %v3100 = vadd.f32 0.0, %v3099
    %v3101 = vpop.f32.mrb[0].mxu0
    %v3102 = vpop.f32.mrb[0].mxu0
    %v3103 = vadd.f32 0.0, %v3102
    %v3104 = vpop.f32.mrb[0].mxu0
    %3105 = vmatprep.mubr.bf16.mxu0 0
    %3106 = vmatmul.mubr.bf16.gmra.mrb[0].mxu0 %v2996
    %v3107 = vpop.f32.mrb[0].mxu0
    %v3108 = vadd.f32 0.0, %v3107
    %v3109 = vpop.f32.mrb[0].mxu0
    %v3110 = vpop.f32.mrb[0].mxu0
    %v3111 = vadd.f32 0.0, %v3110
    %v3112 = vpop.f32.mrb[0].mxu0
    %3113 = vmatprep.mubr.bf16.mxu0 0
    %3114 = vmatmul.mubr.bf16.gmra.mrb[0].mxu0 %v2997
    %v3115 = vpop.f32.mrb[0].mxu0
    %v3116 = vadd.f32 0.0, %v3115
    %v3117 = vpop.f32.mrb[0].mxu0
    %v3118 = vpop.f32.mrb[0].mxu0
    %v3119 = vadd.f32 0.0, %v3118
    %v3120 = vpop.f32.mrb[0].mxu0
    %3121 = vmatprep.mubr.bf16.mxu0 0
    %3122 = vmatmul.mubr.bf16.gmra.mrb[0].mxu0 %v2998
    %v3123 = vpop.f32.mrb[0].mxu0
    %v3124 = vadd.f32 0.0, %v3123
    %v3125 = vpop.f32.mrb[0].mxu0
    %v3126 = vpop.f32.mrb[0].mxu0
    %v3127 = vadd.f32 0.0, %v3126
    %v3128 = vpop.f32.mrb[0].mxu0
    %3129 = vmatprep.mubr.bf16.mxu0 0
    %3130 = vmatmul.mubr.bf16.gmra.mrb[0].mxu0 %v2999
    %v3131 = vpop.f32.mrb[0].mxu0
    %v3132 = vadd.f32 0.0, %v3131
    %v3133 = vpop.f32.mrb[0].mxu0
    %v3134 = vpop.f32.mrb[0].mxu0
    %v3135 = vadd.f32 0.0, %v3134
    %v3136 = vpop.f32.mrb[0].mxu0
    %3137 = vmatprep.mubr.bf16.mxu0 0
    %3138 = vmatmul.mubr.bf16.gmra.mrb[0].mxu0 %v3000
    %v3139 = vpop.f32.mrb[0].mxu0
    %v3140 = vadd.f32 0.0, %v3139
    %v3141 = vpop.f32.mrb[0].mxu0
    %v3142 = vpop.f32.mrb[0].mxu0
    %v3143 = vadd.f32 0.0, %v3142
    %v3144 = vpop.f32.mrb[0].mxu0
    %3145 = vdwg.mxu0
    %v3146 = vrcp.pop %v3084
    %v3147 = vrcp.pop %v3087
    %v3148 = vrcp.pop %v3092
    %v3149 = vrcp.pop %v3095
    %v3150 = vrcp.pop %v3100
    %v3151 = vrcp.pop %v3103
    %v3152 = vrcp.pop %v3108
    %v3153 = vrcp.pop %v3111
    %v3154 = vrcp.pop %v3116
    %v3155 = vrcp.pop %v3119
    %v3156 = vrcp.pop %v3124
    %v3157 = vrcp.pop %v3127
    %v3158 = vrcp.pop %v3132
    %v3159 = vrcp.pop %v3135
    %v3160 = vrcp.pop %v3140
    %v3161 = vrcp.pop %v3143
    %v3162 = vmul.f32 %v3084, %v3146
    %v3163 = vmul.f32 %v3087, %v3147
    %v3164 = vmul.f32 %v3092, %v3148
    %v3165 = vmul.f32 %v3095, %v3149
    %v3166 = vmul.f32 %v3100, %v3150
    %v3167 = vmul.f32 %v3103, %v3151
    %v3168 = vmul.f32 %v3108, %v3152
    %v3169 = vmul.f32 %v3111, %v3153
    %v3170 = vmul.f32 %v3116, %v3154
    %v3171 = vmul.f32 %v3119, %v3155
    %v3172 = vmul.f32 %v3124, %v3156
    %v3173 = vmul.f32 %v3127, %v3157
    %v3174 = vmul.f32 %v3132, %v3158
    %v3175 = vmul.f32 %v3135, %v3159
    %v3176 = vmul.f32 %v3140, %v3160
    %v3177 = vmul.f32 %v3143, %v3161
    %v3178 = vsub.f32 2.0, %v3162
    %v3179 = vsub.f32 2.0, %v3163
    %v3180 = vsub.f32 2.0, %v3164
    %v3181 = vsub.f32 2.0, %v3165
    %v3182 = vsub.f32 2.0, %v3166
    %v3183 = vsub.f32 2.0, %v3167
    %v3184 = vsub.f32 2.0, %v3168
    %v3185 = vsub.f32 2.0, %v3169
    %v3186 = vsub.f32 2.0, %v3170
    %v3187 = vsub.f32 2.0, %v3171
    %v3188 = vsub.f32 2.0, %v3172
    %v3189 = vsub.f32 2.0, %v3173
    %v3190 = vsub.f32 2.0, %v3174
    %v3191 = vsub.f32 2.0, %v3175
    %v3192 = vsub.f32 2.0, %v3176
    %v3193 = vsub.f32 2.0, %v3177
    %v3194 = vmul.f32 %v3146, %v3178
    %v3195 = vmul.f32 %v3147, %v3179
    %v3196 = vmul.f32 %v3148, %v3180
    %v3197 = vmul.f32 %v3149, %v3181
    %v3198 = vmul.f32 %v3150, %v3182
    %v3199 = vmul.f32 %v3151, %v3183
    %v3200 = vmul.f32 %v3152, %v3184
    %v3201 = vmul.f32 %v3153, %v3185
    %v3202 = vmul.f32 %v3154, %v3186
    %v3203 = vmul.f32 %v3155, %v3187
    %v3204 = vmul.f32 %v3156, %v3188
    %v3205 = vmul.f32 %v3157, %v3189
    %v3206 = vmul.f32 %v3158, %v3190
    %v3207 = vmul.f32 %v3159, %v3191
    %v3208 = vmul.f32 %v3160, %v3192
    %v3209 = vmul.f32 %v3161, %v3193
    %3211 = vset.pattern.permute.xlu0 64
    %3212 = vperm.xlu0 %3211, %v3194
    %v3213 = vpop.permute.xlu0 %3212
    %3216 = vset.pattern.permute.xlu0 64
    %3217 = vperm.xlu0 %3216, %v3195
    %v3218 = vpop.permute.xlu0 %3217
    %3221 = vset.pattern.permute.xlu0 64
    %3222 = vperm.xlu0 %3221, %v3196
    %v3223 = vpop.permute.xlu0 %3222
    %3226 = vset.pattern.permute.xlu0 64
    %3227 = vperm.xlu0 %3226, %v3197
    %v3228 = vpop.permute.xlu0 %3227
    %3231 = vset.pattern.permute.xlu0 64
    %3232 = vperm.xlu0 %3231, %v3198
    %v3233 = vpop.permute.xlu0 %3232
    %3236 = vset.pattern.permute.xlu0 64
    %3237 = vperm.xlu0 %3236, %v3199
    %v3238 = vpop.permute.xlu0 %3237
    %3241 = vset.pattern.permute.xlu0 64
    %3242 = vperm.xlu0 %3241, %v3200
    %v3243 = vpop.permute.xlu0 %3242
    %3246 = vset.pattern.permute.xlu0 64
    %3247 = vperm.xlu0 %3246, %v3201
    %v3248 = vpop.permute.xlu0 %3247
    %3251 = vset.pattern.permute.xlu0 64
    %3252 = vperm.xlu0 %3251, %v3202
    %v3253 = vpop.permute.xlu0 %3252
    %3256 = vset.pattern.permute.xlu0 64
    %3257 = vperm.xlu0 %3256, %v3203
    %v3258 = vpop.permute.xlu0 %3257
    %3261 = vset.pattern.permute.xlu0 64
    %3262 = vperm.xlu0 %3261, %v3204
    %v3263 = vpop.permute.xlu0 %3262
    %3266 = vset.pattern.permute.xlu0 64
    %3267 = vperm.xlu0 %3266, %v3205
    %v3268 = vpop.permute.xlu0 %3267
    %3271 = vset.pattern.permute.xlu0 64
    %3272 = vperm.xlu0 %3271, %v3206
    %v3273 = vpop.permute.xlu0 %3272
    %3276 = vset.pattern.permute.xlu0 64
    %3277 = vperm.xlu0 %3276, %v3207
    %v3278 = vpop.permute.xlu0 %3277
    %3281 = vset.pattern.permute.xlu0 64
    %3282 = vperm.xlu0 %3281, %v3208
    %v3283 = vpop.permute.xlu0 %3282
    %3286 = vset.pattern.permute.xlu0 64
    %3287 = vperm.xlu0 %3286, %v3209
    %v3288 = vpop.permute.xlu0 %3287
    %v3290 = vmul.f32 %v3084, %v3213
    %v3291 = vmul.f32 %v3087, %v3218
    %v3292 = vmul.f32 %v3092, %v3223
    %v3293 = vmul.f32 %v3095, %v3228
    %v3294 = vmul.f32 %v3100, %v3233
    %v3295 = vmul.f32 %v3103, %v3238
    %v3296 = vmul.f32 %v3108, %v3243
    %v3297 = vmul.f32 %v3111, %v3248
    %v3298 = vmul.f32 %v3116, %v3253
    %v3299 = vmul.f32 %v3119, %v3258
    %v3300 = vmul.f32 %v3124, %v3263
    %v3301 = vmul.f32 %v3127, %v3268
    %v3302 = vmul.f32 %v3132, %v3273
    %v3303 = vmul.f32 %v3135, %v3278
    %v3304 = vmul.f32 %v3140, %v3283
    %v3305 = vmul.f32 %v3143, %v3288
    %3322 = vrot.lane.b32.xlu0 %v3290, 64
    %v3323 = vpop.permute.xlu0 %3322
    %3324 = vrot.lane.b32.xlu0 %v3291, 64
    %v3325 = vpop.permute.xlu0 %3324
    %3326 = vrot.lane.b32.xlu0 %v3292, 64
    %v3327 = vpop.permute.xlu0 %3326
    %3328 = vrot.lane.b32.xlu0 %v3293, 64
    %v3329 = vpop.permute.xlu0 %3328
    %3330 = vrot.lane.b32.xlu0 %v3294, 64
    %v3331 = vpop.permute.xlu0 %3330
    %3332 = vrot.lane.b32.xlu0 %v3295, 64
    %v3333 = vpop.permute.xlu0 %3332
    %3334 = vrot.lane.b32.xlu0 %v3296, 64
    %v3335 = vpop.permute.xlu0 %3334
    %3336 = vrot.lane.b32.xlu0 %v3297, 64
    %v3337 = vpop.permute.xlu0 %3336
    %3338 = vrot.lane.b32.xlu0 %v3298, 64
    %v3339 = vpop.permute.xlu0 %3338
    %3340 = vrot.lane.b32.xlu0 %v3299, 64
    %v3341 = vpop.permute.xlu0 %3340
    %3342 = vrot.lane.b32.xlu0 %v3300, 64
    %v3343 = vpop.permute.xlu0 %3342
    %3344 = vrot.lane.b32.xlu0 %v3301, 64
    %v3345 = vpop.permute.xlu0 %3344
    %3346 = vrot.lane.b32.xlu0 %v3302, 64
    %v3347 = vpop.permute.xlu0 %3346
    %3348 = vrot.lane.b32.xlu0 %v3303, 64
    %v3349 = vpop.permute.xlu0 %3348
    %3350 = vrot.lane.b32.xlu0 %v3304, 64
    %v3351 = vpop.permute.xlu0 %3350
    %3352 = vrot.lane.b32.xlu0 %v3305, 64
    %v3353 = vpop.permute.xlu0 %3352
    %v3370 = vsel %vm273, %v2765, %v3323
    %v3371 = vsel %vm273, %v2766, %v3325
    %v3372 = vsel %vm273, %v2767, %v3327
    %v3373 = vsel %vm273, %v2768, %v3329
    %v3374 = vsel %vm273, %v2769, %v3331
    %v3375 = vsel %vm273, %v2770, %v3333
    %v3376 = vsel %vm273, %v2771, %v3335
    %v3377 = vsel %vm273, %v2772, %v3337
    %v3378 = vsel %vm273, %v2773, %v3339
    %v3379 = vsel %vm273, %v2774, %v3341
    %v3380 = vsel %vm273, %v2775, %v3343
    %v3381 = vsel %vm273, %v2776, %v3345
    %v3382 = vsel %vm273, %v2777, %v3347
    %v3383 = vsel %vm273, %v2778, %v3349
    %v3384 = vsel %vm273, %v2779, %v3351
    %v3385 = vsel %vm273, %v2780, %v3353
    %v3387 = vlaneseq
    %v3388 = vshrl.u32 %v3387, 7
    %v3389 = vsub.s32 0, %v3388
    %v3390 = vrot.slane %v127, %v3389
    %v3392 = vadd.f32 %v3370, %v3390
    %v3393 = vadd.f32 %v3371, %v3390
    %v3394 = vadd.f32 %v3372, %v3390
    %v3395 = vadd.f32 %v3373, %v3390
    %v3396 = vadd.f32 %v3374, %v3390
    %v3397 = vadd.f32 %v3375, %v3390
    %v3398 = vadd.f32 %v3376, %v3390
    %v3399 = vadd.f32 %v3377, %v3390
    %v3400 = vadd.f32 %v3378, %v3390
    %v3401 = vadd.f32 %v3379, %v3390
    %v3402 = vadd.f32 %v3380, %v3390
    %v3403 = vadd.f32 %v3381, %v3390
    %v3404 = vadd.f32 %v3382, %v3390
    %v3405 = vadd.f32 %v3383, %v3390
    %v3406 = vadd.f32 %v3384, %v3390
    %v3407 = vadd.f32 %v3385, %v3390
    %v3408 = vmax.f32 %v1902, %v3392
    %v3409 = vmax.f32 %v1903, %v3393
    %v3410 = vmax.f32 %v1904, %v3394
    %v3411 = vmax.f32 %v1905, %v3395
    %v3412 = vmax.f32 %v1906, %v3396
    %v3413 = vmax.f32 %v1907, %v3397
    %v3414 = vmax.f32 %v1908, %v3398
    %v3415 = vmax.f32 %v1909, %v3399
    %v3416 = vmax.f32 %v1910, %v3400
    %v3417 = vmax.f32 %v1911, %v3401
    %v3418 = vmax.f32 %v1912, %v3402
    %v3419 = vmax.f32 %v1913, %v3403
    %v3420 = vmax.f32 %v1914, %v3404
    %v3421 = vmax.f32 %v1915, %v3405
    %v3422 = vmax.f32 %v1916, %v3406
    %v3423 = vmax.f32 %v1917, %v3407
    %v3424 = vpack.c.bf16 %v3409, %v3408
    %v3425 = vpack.c.bf16 %v3411, %v3410
    %v3426 = vpack.c.bf16 %v3413, %v3412
    %v3427 = vpack.c.bf16 %v3415, %v3414
    %v3428 = vpack.c.bf16 %v3417, %v3416
    %v3429 = vpack.c.bf16 %v3419, %v3418
    %v3430 = vpack.c.bf16 %v3421, %v3420
    %v3431 = vpack.c.bf16 %v3423, %v3422
    %v3433 = vlaneseq
    %v3434 = vshrl.u32 %v3433, 7
    %v3435 = vsub.s32 0, %v3434
    %v3436 = vrot.slane %v144, %v3435
    %v3454 = vunpack.c.l.b16 %v128
    %v3455 = vunpack.c.l.b16 %v129
    %v3456 = vunpack.c.l.b16 %v130
    %v3457 = vunpack.c.l.b16 %v131
    %v3458 = vunpack.c.l.b16 %v132
    %v3459 = vunpack.c.l.b16 %v133
    %v3460 = vunpack.c.l.b16 %v134
    %v3461 = vunpack.c.l.b16 %v135
    %v3462 = vunpack.c.l.b16 %v136
    %v3463 = vunpack.c.l.b16 %v137
    %v3464 = vunpack.c.l.b16 %v138
    %v3465 = vunpack.c.l.b16 %v139
    %v3466 = vunpack.c.l.b16 %v140
    %v3467 = vunpack.c.l.b16 %v141
    %v3468 = vunpack.c.l.b16 %v142
    %v3469 = vunpack.c.l.b16 %v143
    %v3470 = vpack.c.b16 %v3455, %v3454
    %v3471 = vpack.c.b16 %v3457, %v3456
    %v3472 = vpack.c.b16 %v3459, %v3458
    %v3473 = vpack.c.b16 %v3461, %v3460
    %v3474 = vpack.c.b16 %v3463, %v3462
    %v3475 = vpack.c.b16 %v3465, %v3464
    %v3476 = vpack.c.b16 %v3467, %v3466
    %v3477 = vpack.c.b16 %v3469, %v3468
    %3486 = vmatprep.subr.bf16.mxu0 0
    %3487 = vmatpush1.bf16.msra.mxu0 %v3470
    %3488 = vmatprep.subr.bf16.mxu0 0
    %3489 = vmatpush1.bf16.msra.mxu0 %v3471
    %3490 = vmatprep.subr.bf16.mxu0 0
    %3491 = vmatpush1.bf16.msra.mxu0 %v3472
    %3492 = vmatprep.subr.bf16.mxu0 0
    %3493 = vmatpush1.bf16.msra.mxu0 %v3473
    %3494 = vmatprep.subr.bf16.mxu0 0
    %3495 = vmatpush1.bf16.msra.mxu0 %v3474
    %3496 = vmatprep.subr.bf16.mxu0 0
    %3497 = vmatpush1.bf16.msra.mxu0 %v3475
    %3498 = vmatprep.subr.bf16.mxu0 0
    %3499 = vmatpush1.bf16.msra.mxu0 %v3476
    %3500 = vmatprep.subr.bf16.mxu0 0
    %3501 = vmatpush1.bf16.msra.mxu0 %v3477
    %3502 = vmatprep.subr.bf16.mxu0 0
    %3503 = vmatpush1.bf16.msra.mxu0 0
    %3504 = vmatprep.subr.bf16.mxu0 0
    %3505 = vmatpush1.bf16.msra.mxu0 0
    %3506 = vmatprep.subr.bf16.mxu0 0
    %3507 = vmatpush1.bf16.msra.mxu0 0
    %3508 = vmatprep.subr.bf16.mxu0 0
    %3509 = vmatpush1.bf16.msra.mxu0 0
    %3510 = vmatprep.subr.bf16.mxu0 0
    %3511 = vmatpush1.bf16.msra.mxu0 0
    %3512 = vmatprep.subr.bf16.mxu0 0
    %3513 = vmatpush1.bf16.msra.mxu0 0
    %3514 = vmatprep.subr.bf16.mxu0 0
    %3515 = vmatpush1.bf16.msra.mxu0 0
    %3516 = vmatprep.subr.bf16.mxu0 0
    %3517 = vmatpush1.bf16.msra.mxu0 0
    %3518 = vmatprep.mubr.bf16.mxu0 0
    %3519 = vmatmul.mubr.bf16.gmra.mrb[0].mxu0 %v3424
    %v3520 = vpop.f32.mrb[0].mxu0
    %v3521 = vadd.f32 %v3436, %v3520
    %v3522 = vpop.f32.mrb[0].mxu0
    %v3523 = vpop.f32.mrb[0].mxu0
    %v3524 = vadd.f32 %v3436, %v3523
    %v3525 = vpop.f32.mrb[0].mxu0
    %3526 = vmatprep.mubr.bf16.mxu0 0
    %3527 = vmatmul.mubr.bf16.gmra.mrb[0].mxu0 %v3425
    %v3528 = vpop.f32.mrb[0].mxu0
    %v3529 = vadd.f32 %v3436, %v3528
    %v3530 = vpop.f32.mrb[0].mxu0
    %v3531 = vpop.f32.mrb[0].mxu0
    %v3532 = vadd.f32 %v3436, %v3531
    %v3533 = vpop.f32.mrb[0].mxu0
    %3534 = vmatprep.mubr.bf16.mxu0 0
    %3535 = vmatmul.mubr.bf16.gmra.mrb[0].mxu0 %v3426
    %v3536 = vpop.f32.mrb[0].mxu0
    %v3537 = vadd.f32 %v3436, %v3536
    %v3538 = vpop.f32.mrb[0].mxu0
    %v3539 = vpop.f32.mrb[0].mxu0
    %v3540 = vadd.f32 %v3436, %v3539
    %v3541 = vpop.f32.mrb[0].mxu0
    %3542 = vmatprep.mubr.bf16.mxu0 0
    %3543 = vmatmul.mubr.bf16.gmra.mrb[0].mxu0 %v3427
    %v3544 = vpop.f32.mrb[0].mxu0
    %v3545 = vadd.f32 %v3436, %v3544
    %v3546 = vpop.f32.mrb[0].mxu0
    %v3547 = vpop.f32.mrb[0].mxu0
    %v3548 = vadd.f32 %v3436, %v3547
    %v3549 = vpop.f32.mrb[0].mxu0
    %3550 = vmatprep.mubr.bf16.mxu0 0
    %3551 = vmatmul.mubr.bf16.gmra.mrb[0].mxu0 %v3428
    %v3552 = vpop.f32.mrb[0].mxu0
    %v3553 = vadd.f32 %v3436, %v3552
    %v3554 = vpop.f32.mrb[0].mxu0
    %v3555 = vpop.f32.mrb[0].mxu0
    %v3556 = vadd.f32 %v3436, %v3555
    %v3557 = vpop.f32.mrb[0].mxu0
    %3558 = vmatprep.mubr.bf16.mxu0 0
    %3559 = vmatmul.mubr.bf16.gmra.mrb[0].mxu0 %v3429
    %v3560 = vpop.f32.mrb[0].mxu0
    %v3561 = vadd.f32 %v3436, %v3560
    %v3562 = vpop.f32.mrb[0].mxu0
    %v3563 = vpop.f32.mrb[0].mxu0
    %v3564 = vadd.f32 %v3436, %v3563
    %v3565 = vpop.f32.mrb[0].mxu0
    %3566 = vmatprep.mubr.bf16.mxu0 0
    %3567 = vmatmul.mubr.bf16.gmra.mrb[0].mxu0 %v3430
    %v3568 = vpop.f32.mrb[0].mxu0
    %v3569 = vadd.f32 %v3436, %v3568
    %v3570 = vpop.f32.mrb[0].mxu0
    %v3571 = vpop.f32.mrb[0].mxu0
    %v3572 = vadd.f32 %v3436, %v3571
    %v3573 = vpop.f32.mrb[0].mxu0
    %3574 = vmatprep.mubr.bf16.mxu0 0
    %3575 = vmatmul.mubr.bf16.gmra.mrb[0].mxu0 %v3431
    %v3576 = vpop.f32.mrb[0].mxu0
    %v3577 = vadd.f32 %v3436, %v3576
    %v3578 = vpop.f32.mrb[0].mxu0
    %v3579 = vpop.f32.mrb[0].mxu0
    %v3580 = vadd.f32 %v3436, %v3579
    %v3581 = vpop.f32.mrb[0].mxu0
    %3582 = vdwg.mxu0
    %3583 = vst [vmem:[#allocation2] sm:$0xff] %v3521
    %3584 = vst [vmem:[#allocation2 + $0x8] sm:$0xff] %v3524
    %3585 = vst [vmem:[#allocation2 + $0x10] sm:$0xff] %v3529
    %3586 = vst [vmem:[#allocation2 + $0x18] sm:$0xff] %v3532
    %3587 = vst [vmem:[#allocation2 + $0x20] sm:$0xff] %v3537
    %3588 = vst [vmem:[#allocation2 + $0x28] sm:$0xff] %v3540
    %3589 = vst [vmem:[#allocation2 + $0x30] sm:$0xff] %v3545
    %3590 = vst [vmem:[#allocation2 + $0x38] sm:$0xff] %v3548
    %3591 = vst [vmem:[#allocation2 + $0x40] sm:$0xff] %v3553
    %3592 = vst [vmem:[#allocation2 + $0x48] sm:$0xff] %v3556
    %3593 = vst [vmem:[#allocation2 + $0x50] sm:$0xff] %v3561
    %3594 = vst [vmem:[#allocation2 + $0x58] sm:$0xff] %v3564
    %3595 = vst [vmem:[#allocation2 + $0x60] sm:$0xff] %v3569
    %3596 = vst [vmem:[#allocation2 + $0x68] sm:$0xff] %v3572
    %3597 = vst [vmem:[#allocation2 + $0x70] sm:$0xff] %v3577
    %3598 = vst [vmem:[#allocation2 + $0x78] sm:$0xff] %v3580
    // Predicated region
    $region54: #{tpu_custom_call.1} parent=1 // pred_check
      _
    $region55: #{tpu_custom_call.1} parent=1 // pred_check_branch
      %3600 = sbr.rel (0) target = $region57
    $region56: #{tpu_custom_call.1} parent=1 // pred_region
      %s3602 = ssub.s32 2048, 2048
      %3603 = vsyncadd [#allocation3], %s3602
      %s3604 = sshll.u32 [#allocation2], 4
      %s3605 = int_to_ptr.vmem [resolvable:$true] %s3604
      %3610 = dma.vmem_to_hbm [thread:$0]  %s3605, 2048, %s13, [#allocation3], 128, 128, 8
    $region57: #{tpu_custom_call.1} parent=1 // pred_fallthru
      _
    // Predicated region
    $region58: #{tpu_custom_call.1} parent=1 // pred_check
      _
    $region59: #{tpu_custom_call.1} parent=1 // pred_check_branch
      %3612 = sbr.rel (0) target = $region61
    $region60: #{tpu_custom_call.1} parent=1 // pred_region
      %3613 = dma.done [#allocation3], 2048
    $region61: #{tpu_custom_call.1} parent=1 // pred_fallthru
      _
    %3614 = vsyncpa [#allocation3], 1

</llo_original>
